<compile_context>
chip_gen: v7x
topology: tpu7x:2x2x1
jax: 0.10.0
libtpu: 0.0.40
codegen_flags: <defaults>
</compile_context>

<pallas_src>
import functools

import jax
import jax.numpy as jnp
from jax.experimental import pallas as pl
from jax.experimental.pallas import tpu as pltpu


_COMPILER_PARAMS = pltpu.CompilerParams(
    dimension_semantics=("parallel",),       # shard N-tiles across TensorCores
    vmem_limit_bytes=32 * 1024 * 1024,       # safe on v7x (64 MiB physical)
)


def _round_up(x, m):
    return ((x + m - 1) // m) * m


# ---------------------------------------------------------------------------
# In-kernel building blocks (all traced inline into the single fused kernel).
# ---------------------------------------------------------------------------
def _topk_gates(logits, k, num_e):
    """Top-k selection + softmax over the selected logits, all on the VPU.

    Returns (dense_gates (T,E), [idx_0, ..., idx_{k-1}] each (T,1) int32).
    Ties are broken toward the lower expert index (torch.topk convention).
    """
    lane = jax.lax.broadcasted_iota(jnp.int32, logits.shape, 1)
    work = logits
    idxs, vals = [], []
    for _ in range(k):
        v = jnp.max(work, axis=-1, keepdims=True)                       # (T,1)
        sel = jnp.min(jnp.where(work == v, lane, num_e),
                      axis=-1, keepdims=True)                           # (T,1)
        idxs.append(sel)
        vals.append(v)
        work = jnp.where(lane == sel, -jnp.inf, work)
    # softmax over the k selected logits (vals[0] is the max -> stable).
    exps = [jnp.exp(v - vals[0]) for v in vals]                         # exps[0]=1
    denom = exps[0]
    for e in exps[1:]:
        denom = denom + e
    inv = 1.0 / denom
    gates = jnp.zeros_like(logits)
    for j in range(k):
        gates = gates + (exps[j] * inv) * (lane == idxs[j]).astype(logits.dtype)
    return gates, idxs


def _ea_block(x, scale, shift, w_gate, w_all, b_all, sel, *, num_e, k, cout):
    """eval-BN affine + gating + fused all-expert matmul + gated combine."""
    xn = x * scale + shift                                              # (T,Cin)
    logits = jnp.dot(xn, w_gate, preferred_element_type=jnp.float32)    # (T,E)
    gates, idxs = _topk_gates(logits, k, num_e)
    # One lane-dense matmul for all experts: (T,Cin) @ (Cin, E*Cout).
    y = jnp.dot(xn, w_all, preferred_element_type=jnp.float32) + b_all  # (T,E*Cout)
    # Expand gates to full lane width with a constant selector (MXU),
    # then one full-lane multiply + (E-1) slice adds.
    g_full = jnp.dot(gates, sel, preferred_element_type=jnp.float32)    # (T,E*Cout)
    yg = g_full * y
    acc = yg[:, 0:cout]
    for e in range(1, num_e):
        acc = acc + yg[:, e * cout:(e + 1) * cout]
    return acc, gates, idxs


# ---------------------------------------------------------------------------
# The single fused kernel: BN1 + EA1 + BN2 + EA2 + loss partials.
# ---------------------------------------------------------------------------
def _hgmoe_kernel(x_ref,
                  s1_ref, t1_ref, wg1_ref, wall1_ref, ball1_ref, sel1_ref,
                  s2_ref, t2_ref, wg2_ref, wall2_ref, ball2_ref, sel2_ref,
                  out_ref, ei1_ref, ei2_ref, stats_ref,
                  *, num_experts, k, hidden, cout, tile_n, n_valid):
    x = x_ref[...].astype(jnp.float32)

    h, gates1, idxs1 = _ea_block(
        x, s1_ref[...], t1_ref[...], wg1_ref[...], wall1_ref[...],
        ball1_ref[...], sel1_ref[...], num_e=num_experts, k=k, cout=hidden)

    o, gates2, idxs2 = _ea_block(
        h, s2_ref[...], t2_ref[...], wg2_ref[...], wall2_ref[...],
        ball2_ref[...], sel2_ref[...], num_e=num_experts, k=k, cout=cout)

    out_ref[...] = o.astype(out_ref.dtype)

    # Expert-index lists (N, k) int32 (built with compare/select, no concat).
    col = jax.lax.broadcasted_iota(jnp.int32, (tile_n, k), 1)

    def write_idx(ref, idxs):
        ei = jnp.zeros((tile_n, k), jnp.int32)
        for j in range(k):
            ei = ei + jnp.where(col == j, idxs[j], 0)
        ref[...] = ei

    write_idx(ei1_ref, idxs1)
    write_idx(ei2_ref, idxs2)

    # Per-tile importance / load partial sums (padded rows masked out).
    row = (pl.program_id(0) * tile_n
           + jax.lax.broadcasted_iota(jnp.int32, (tile_n, 1), 0))
    valid = row < n_valid                                               # (T,1) bool

    def imp_load(g):
        imp = jnp.sum(jnp.where(valid, g, 0.0), axis=0, keepdims=True)  # (1,E)
        load = jnp.sum(jnp.where(valid & (g > 0.0), 1.0, 0.0),
                       axis=0, keepdims=True)                           # (1,E)
        return imp, load

    imp1, load1 = imp_load(gates1)
    imp2, load2 = imp_load(gates2)
    r = jax.lax.broadcasted_iota(jnp.int32, (4, num_experts), 0)
    stats = (jnp.where(r == 0, imp1, 0.0) + jnp.where(r == 1, load1, 0.0)
             + jnp.where(r == 2, imp2, 0.0) + jnp.where(r == 3, load2, 0.0))
    stats_ref[0] = stats


# ---------------------------------------------------------------------------
# HGMoE forward (eval mode)
# ---------------------------------------------------------------------------
def _bn_affine(bn, eps=1e-5):
    # eval-mode BatchNorm1d folded into a per-channel affine.
    scale = bn["gamma"] * jax.lax.rsqrt(bn["running_var"] + eps)
    shift = bn["beta"] - bn["running_mean"] * scale
    c = scale.shape[0]
    return scale.reshape(1, c), shift.reshape(1, c)


def _cv_squared(v, eps=1e-10):
    return jnp.var(v, ddof=1) / (jnp.mean(v) ** 2 + eps)


def hgmoe_forward(params, x, edge_index, edge_attr, *, k=2, max_tile=2048):
    del edge_index, edge_attr  # TODO(synk): EA graph message passing unknown
    n, cin = x.shape
    num_e, _, hidden = params["ea1"]["w_experts"].shape
    _, _, cout = params["ea2"]["w_experts"].shape

    # Tile selection: as large as possible, but keep >=2 grid steps so both
    # v7x TensorCores get work; cap at max_tile rows (VMEM headroom).
    tile = min(max_tile, _round_up(max(pl.cdiv(n, 2), 8), 8))
    n_pad = _round_up(n, tile)
    grid = n_pad // tile
    if n_pad != n:
        x = jnp.pad(x, ((0, n_pad - n), (0, 0)))

    s1, t1 = _bn_affine(params["bn1"])
    s2, t2 = _bn_affine(params["bn2"])
    wg1 = params["ea1"]["w_gate"]
    wg2 = params["ea2"]["w_gate"]
    # All experts fused into one lane-dense matmul operand (constant-folded
    # under jit because params are closed over).
    wall1 = jnp.transpose(params["ea1"]["w_experts"], (1, 0, 2)).reshape(
        cin, num_e * hidden)
    ball1 = params["ea1"]["b_experts"].reshape(1, num_e * hidden)
    wall2 = jnp.transpose(params["ea2"]["w_experts"], (1, 0, 2)).reshape(
        hidden, num_e * cout)
    ball2 = params["ea2"]["b_experts"].reshape(1, num_e * cout)
    # Constant selectors to replicate each gate across its expert's lanes.
    sel1 = jnp.repeat(jnp.eye(num_e, dtype=jnp.float32), hidden, axis=1)
    sel2 = jnp.repeat(jnp.eye(num_e, dtype=jnp.float32), cout, axis=1)

    kernel = functools.partial(_hgmoe_kernel, num_experts=num_e, k=k,
                               hidden=hidden, cout=cout, tile_n=tile,
                               n_valid=n)

    def rep(shape):
        return pl.BlockSpec(shape, lambda i, _s=len(shape): (0,) * _s)

    out, ei1, ei2, stats = pl.pallas_call(
        kernel,
        out_shape=(
            jax.ShapeDtypeStruct((n_pad, cout), x.dtype),
            jax.ShapeDtypeStruct((n_pad, k), jnp.int32),
            jax.ShapeDtypeStruct((n_pad, k), jnp.int32),
            jax.ShapeDtypeStruct((grid, 4, num_e), jnp.float32),
        ),
        grid=(grid,),
        in_specs=[
            pl.BlockSpec((tile, cin), lambda i: (i, 0)),
            rep((1, cin)), rep((1, cin)),
            rep((cin, num_e)), rep((cin, num_e * hidden)),
            rep((1, num_e * hidden)), rep((num_e, num_e * hidden)),
            rep((1, hidden)), rep((1, hidden)),
            rep((hidden, num_e)), rep((hidden, num_e * cout)),
            rep((1, num_e * cout)), rep((num_e, num_e * cout)),
        ],
        out_specs=(
            pl.BlockSpec((tile, cout), lambda i: (i, 0)),
            pl.BlockSpec((tile, k), lambda i: (i, 0)),
            pl.BlockSpec((tile, k), lambda i: (i, 0)),
            pl.BlockSpec((1, 4, num_e), lambda i: (i, 0, 0)),
        ),
        compiler_params=_COMPILER_PARAMS,
    )(x, s1, t1, wg1, wall1, ball1, sel1, s2, t2, wg2, wall2, ball2, sel2)

    # Load-balancing losses from the tiny (grid, 4, E) per-tile partials.
    totals = jnp.sum(stats, axis=0)                                     # (4,E)
    loss1 = _cv_squared(totals[0]) + _cv_squared(totals[1])
    loss2 = _cv_squared(totals[2]) + _cv_squared(totals[3])

    # dropout(p=0.3) is identity in eval mode.
    return out[:n], ei1[:n], ei2[:n], [loss1, loss2]


# ---------------------------------------------------------------------------
# Deterministic parameter construction
# ---------------------------------------------------------------------------
def init_params(key, in_channels, hidden_dim, out_channels, num_experts):
    ks = jax.random.split(key, 12)

    def bn_params(kg, kb, km, kv, c):
        return {
            "gamma": 1.0 + 0.05 * jax.random.normal(kg, (c,), jnp.float32),
            "beta": 0.05 * jax.random.normal(kb, (c,), jnp.float32),
            "running_mean": 0.1 * jax.random.normal(km, (c,), jnp.float32),
            "running_var": 1.0 + 0.1 * jax.random.uniform(kv, (c,), jnp.float32),
        }

    def ea_params(k1, k2, cin, cout):
        return {
            "w_gate": 0.1 * jax.random.normal(k1, (cin, num_experts), jnp.float32),
            "w_experts": 0.1 * jax.random.normal(
                k2, (num_experts, cin, cout), jnp.float32),
            "b_experts": jnp.zeros((num_experts, cout), jnp.float32),
        }

    return {
        "bn1": bn_params(ks[0], ks[1], ks[2], ks[3], in_channels),
        "bn2": bn_params(ks[4], ks[5], ks[6], ks[7], hidden_dim),
        "ea1": ea_params(ks[8], ks[9], in_channels, hidden_dim),
        "ea2": ea_params(ks[10], ks[11], hidden_dim, out_channels),
    }


if __name__ == "__main__":
    in_channels, hidden_dim, out_channels = 8, 32, 8
    num_experts, k = 4, 2
    num_nodes, num_edges = 200, 400   # -> tile=104, grid=2 (both v7x TCs busy)

    root = jax.random.PRNGKey(0)
    k_param, k_x, k_ei, k_ea = jax.random.split(root, 4)

    params = init_params(k_param, in_channels, hidden_dim, out_channels,
                         num_experts)
    x = jax.random.normal(k_x, (num_nodes, in_channels), jnp.float32)
    edge_index = jax.random.randint(k_ei, (2, num_edges), 0, num_nodes, jnp.int32)
    edge_attr = jax.random.normal(k_ea, (num_edges, 4), jnp.float32)

    fwd = jax.jit(functools.partial(hgmoe_forward, params, k=k))
    out, el1, el2, losses = fwd(x, edge_index, edge_attr)

    jax.block_until_ready(out)
    jax.block_until_ready(el1)
    jax.block_until_ready(el2)
    jax.block_until_ready(losses)

    assert out.shape == (num_nodes, out_channels)
    assert el1.shape == (num_nodes, k) and el2.shape == (num_nodes, k)
    assert bool(jnp.all((el1 >= 0) & (el1 < num_experts)))
    assert bool(jnp.all((el2 >= 0) & (el2 < num_experts)))
    assert all(bool(jnp.isfinite(l)) for l in losses)
    assert bool(jnp.all(jnp.isfinite(out)))
    print("KERNEL_OK")
</pallas_src>

<mosaic_0001>
module attributes {stable_mosaic.version = 11 : i64} {
  func.func @_hgmoe_kernel(%arg0: i32, %arg1: memref<104x8xf32, #tpu.memory_space<vmem>>, %arg2: memref<1x8xf32, #tpu.memory_space<vmem>>, %arg3: memref<1x8xf32, #tpu.memory_space<vmem>>, %arg4: memref<8x4xf32, #tpu.memory_space<vmem>>, %arg5: memref<8x128xf32, #tpu.memory_space<vmem>>, %arg6: memref<1x128xf32, #tpu.memory_space<vmem>>, %arg7: memref<4x128xf32, #tpu.memory_space<vmem>>, %arg8: memref<1x32xf32, #tpu.memory_space<vmem>>, %arg9: memref<1x32xf32, #tpu.memory_space<vmem>>, %arg10: memref<32x4xf32, #tpu.memory_space<vmem>>, %arg11: memref<32x32xf32, #tpu.memory_space<vmem>>, %arg12: memref<1x32xf32, #tpu.memory_space<vmem>>, %arg13: memref<4x32xf32, #tpu.memory_space<vmem>>, %arg14: memref<104x8xf32, #tpu.memory_space<vmem>>, %arg15: memref<104x2xi32, #tpu.memory_space<vmem>>, %arg16: memref<104x2xi32, #tpu.memory_space<vmem>>, %arg17: memref<1x4x4xf32, #tpu.memory_space<vmem>>) attributes {dimension_semantics = [#tpu.dimension_semantics<parallel>], iteration_bounds = array<i64: 2>, scalar_prefetch = 0 : i64, scratch_operands = 0 : i64, tpu.core_type = #tpu.core_type<tc>, window_params = [{transform_indices = @transform_0, window_bounds = array<i64: 104, 8>}, {pipeline_mode = #tpu.pipeline_mode<synchronous>, transform_indices = @transform_1, window_bounds = array<i64: 1, 8>}, {pipeline_mode = #tpu.pipeline_mode<synchronous>, transform_indices = @transform_2, window_bounds = array<i64: 1, 8>}, {pipeline_mode = #tpu.pipeline_mode<synchronous>, transform_indices = @transform_3, window_bounds = array<i64: 8, 4>}, {pipeline_mode = #tpu.pipeline_mode<synchronous>, transform_indices = @transform_4, window_bounds = array<i64: 8, 128>}, {pipeline_mode = #tpu.pipeline_mode<synchronous>, transform_indices = @transform_5, window_bounds = array<i64: 1, 128>}, {pipeline_mode = #tpu.pipeline_mode<synchronous>, transform_indices = @transform_6, window_bounds = array<i64: 4, 128>}, {pipeline_mode = #tpu.pipeline_mode<synchronous>, transform_indices = @transform_7, window_bounds = array<i64: 1, 32>}, {pipeline_mode = #tpu.pipeline_mode<synchronous>, transform_indices = @transform_8, window_bounds = array<i64: 1, 32>}, {pipeline_mode = #tpu.pipeline_mode<synchronous>, transform_indices = @transform_9, window_bounds = array<i64: 32, 4>}, {pipeline_mode = #tpu.pipeline_mode<synchronous>, transform_indices = @transform_10, window_bounds = array<i64: 32, 32>}, {pipeline_mode = #tpu.pipeline_mode<synchronous>, transform_indices = @transform_11, window_bounds = array<i64: 1, 32>}, {pipeline_mode = #tpu.pipeline_mode<synchronous>, transform_indices = @transform_12, window_bounds = array<i64: 4, 32>}, {transform_indices = @transform_13, window_bounds = array<i64: 104, 8>}, {transform_indices = @transform_14, window_bounds = array<i64: 104, 2>}, {transform_indices = @transform_15, window_bounds = array<i64: 104, 2>}, {transform_indices = @transform_16, window_bounds = array<i64: 1, 4, 4>}]} {
    %c0 = arith.constant 0 : index
    %c0_0 = arith.constant 0 : index
    %0 = vector.load %arg1[%c0, %c0_0] : memref<104x8xf32, #tpu.memory_space<vmem>>, vector<104x8xf32>
    %c0_1 = arith.constant 0 : index
    %c0_2 = arith.constant 0 : index
    %1 = vector.load %arg2[%c0_1, %c0_2] : memref<1x8xf32, #tpu.memory_space<vmem>>, vector<1x8xf32>
    %c0_3 = arith.constant 0 : index
    %c0_4 = arith.constant 0 : index
    %2 = vector.load %arg3[%c0_3, %c0_4] : memref<1x8xf32, #tpu.memory_space<vmem>>, vector<1x8xf32>
    %c0_5 = arith.constant 0 : index
    %c0_6 = arith.constant 0 : index
    %3 = vector.load %arg4[%c0_5, %c0_6] : memref<8x4xf32, #tpu.memory_space<vmem>>, vector<8x4xf32>
    %c0_7 = arith.constant 0 : index
    %c0_8 = arith.constant 0 : index
    %4 = vector.load %arg5[%c0_7, %c0_8] : memref<8x128xf32, #tpu.memory_space<vmem>>, vector<8x128xf32>
    %c0_9 = arith.constant 0 : index
    %c0_10 = arith.constant 0 : index
    %5 = vector.load %arg6[%c0_9, %c0_10] : memref<1x128xf32, #tpu.memory_space<vmem>>, vector<1x128xf32>
    %c0_11 = arith.constant 0 : index
    %c0_12 = arith.constant 0 : index
    %6 = vector.load %arg7[%c0_11, %c0_12] : memref<4x128xf32, #tpu.memory_space<vmem>>, vector<4x128xf32>
    %7 = vector.broadcast %1 : vector<1x8xf32> to vector<104x8xf32>
    %8 = arith.mulf %0, %7 : vector<104x8xf32>
    %9 = vector.broadcast %2 : vector<1x8xf32> to vector<104x8xf32>
    %10 = arith.addf %8, %9 : vector<104x8xf32>
    %cst = arith.constant dense<0.000000e+00> : vector<104x4xf32>
    %11 = tpu.matmul %10, %3, %cst {dimension_numbers = #tpu.dot_dimension_numbers<[1], [0], [0], [1], [0, 0, 1, 1], [], []>} : vector<104x8xf32>, vector<8x4xf32>, vector<104x4xf32> -> vector<104x4xf32>
    %12 = tpu.iota {dimensions = array<i32: 1>} : vector<104x4xi32>
    %cst_13 = arith.constant dense<0xFF800000> : vector<104xf32>
    %13 = vector.multi_reduction <maximumf>, %11, %cst_13 [1] : vector<104x4xf32> to vector<104xf32>
    %14 = vector.shape_cast %13 : vector<104xf32> to vector<104x1xf32>
    %15 = vector.broadcast %14 : vector<104x1xf32> to vector<104x4xf32>
    %16 = arith.cmpf oeq, %11, %15 : vector<104x4xf32>
    %c4_i32 = arith.constant 4 : i32
    %17 = vector.broadcast %c4_i32 : i32 to vector<104x4xi32>
    %18 = arith.select %16, %12, %17 : vector<104x4xi1>, vector<104x4xi32>
    %cst_14 = arith.constant dense<2147483647> : vector<104xi32>
    %19 = vector.multi_reduction <minsi>, %18, %cst_14 [1] : vector<104x4xi32> to vector<104xi32>
    %20 = vector.shape_cast %19 : vector<104xi32> to vector<104x1xi32>
    %21 = vector.broadcast %20 : vector<104x1xi32> to vector<104x4xi32>
    %22 = arith.cmpi eq, %12, %21 : vector<104x4xi32>
    %cst_15 = arith.constant 0xFF800000 : f32
    %23 = vector.broadcast %cst_15 : f32 to vector<104x4xf32>
    %24 = arith.select %22, %23, %11 : vector<104x4xi1>, vector<104x4xf32>
    %cst_16 = arith.constant dense<0xFF800000> : vector<104xf32>
    %25 = vector.multi_reduction <maximumf>, %24, %cst_16 [1] : vector<104x4xf32> to vector<104xf32>
    %26 = vector.shape_cast %25 : vector<104xf32> to vector<104x1xf32>
    %27 = vector.broadcast %26 : vector<104x1xf32> to vector<104x4xf32>
    %28 = arith.cmpf oeq, %24, %27 : vector<104x4xf32>
    %c4_i32_17 = arith.constant 4 : i32
    %29 = vector.broadcast %c4_i32_17 : i32 to vector<104x4xi32>
    %30 = arith.select %28, %12, %29 : vector<104x4xi1>, vector<104x4xi32>
    %cst_18 = arith.constant dense<2147483647> : vector<104xi32>
    %31 = vector.multi_reduction <minsi>, %30, %cst_18 [1] : vector<104x4xi32> to vector<104xi32>
    %32 = vector.shape_cast %31 : vector<104xi32> to vector<104x1xi32>
    %33 = arith.subf %14, %14 : vector<104x1xf32>
    %34 = math.exp %33 : vector<104x1xf32>
    %35 = arith.subf %26, %14 : vector<104x1xf32>
    %36 = math.exp %35 : vector<104x1xf32>
    %37 = arith.addf %34, %36 : vector<104x1xf32>
    %cst_19 = arith.constant 1.000000e+00 : f32
    %38 = vector.broadcast %cst_19 : f32 to vector<104x1xf32>
    %39 = arith.divf %38, %37 : vector<104x1xf32>
    %cst_20 = arith.constant 0.000000e+00 : f32
    %40 = vector.broadcast %cst_20 : f32 to vector<104x4xf32>
    %41 = arith.mulf %34, %39 : vector<104x1xf32>
    %42 = vector.broadcast %20 : vector<104x1xi32> to vector<104x4xi32>
    %43 = arith.cmpi eq, %12, %42 : vector<104x4xi32>
    %44 = arith.extui %43 : vector<104x4xi1> to vector<104x4xi32>
    %45 = arith.sitofp %44 : vector<104x4xi32> to vector<104x4xf32>
    %46 = vector.broadcast %41 : vector<104x1xf32> to vector<104x4xf32>
    %47 = arith.mulf %46, %45 : vector<104x4xf32>
    %48 = arith.addf %40, %47 : vector<104x4xf32>
    %49 = arith.mulf %36, %39 : vector<104x1xf32>
    %50 = vector.broadcast %32 : vector<104x1xi32> to vector<104x4xi32>
    %51 = arith.cmpi eq, %12, %50 : vector<104x4xi32>
    %52 = arith.extui %51 : vector<104x4xi1> to vector<104x4xi32>
    %53 = arith.sitofp %52 : vector<104x4xi32> to vector<104x4xf32>
    %54 = vector.broadcast %49 : vector<104x1xf32> to vector<104x4xf32>
    %55 = arith.mulf %54, %53 : vector<104x4xf32>
    %56 = arith.addf %48, %55 : vector<104x4xf32>
    %cst_21 = arith.constant dense<0.000000e+00> : vector<104x128xf32>
    %57 = tpu.matmul %10, %4, %cst_21 {dimension_numbers = #tpu.dot_dimension_numbers<[1], [0], [0], [1], [0, 0, 1, 1], [], []>} : vector<104x8xf32>, vector<8x128xf32>, vector<104x128xf32> -> vector<104x128xf32>
    %58 = vector.broadcast %5 : vector<1x128xf32> to vector<104x128xf32>
    %59 = arith.addf %57, %58 : vector<104x128xf32>
    %cst_22 = arith.constant dense<0.000000e+00> : vector<104x128xf32>
    %60 = tpu.matmul %56, %6, %cst_22 {dimension_numbers = #tpu.dot_dimension_numbers<[1], [0], [0], [1], [0, 0, 1, 1], [], []>} : vector<104x4xf32>, vector<4x128xf32>, vector<104x128xf32> -> vector<104x128xf32>
    %61 = arith.mulf %60, %59 : vector<104x128xf32>
    %62 = vector.extract_strided_slice %61 {offsets = [0, 0], sizes = [104, 32], strides = [1, 1]} : vector<104x128xf32> to vector<104x32xf32>
    %63 = vector.extract_strided_slice %61 {offsets = [0, 32], sizes = [104, 32], strides = [1, 1]} : vector<104x128xf32> to vector<104x32xf32>
    %64 = arith.addf %62, %63 : vector<104x32xf32>
    %65 = vector.extract_strided_slice %61 {offsets = [0, 64], sizes = [104, 32], strides = [1, 1]} : vector<104x128xf32> to vector<104x32xf32>
    %66 = arith.addf %64, %65 : vector<104x32xf32>
    %67 = vector.extract_strided_slice %61 {offsets = [0, 96], sizes = [104, 32], strides = [1, 1]} : vector<104x128xf32> to vector<104x32xf32>
    %68 = arith.addf %66, %67 : vector<104x32xf32>
    %c0_23 = arith.constant 0 : index
    %c0_24 = arith.constant 0 : index
    %69 = vector.load %arg8[%c0_23, %c0_24] : memref<1x32xf32, #tpu.memory_space<vmem>>, vector<1x32xf32>
    %c0_25 = arith.constant 0 : index
    %c0_26 = arith.constant 0 : index
    %70 = vector.load %arg9[%c0_25, %c0_26] : memref<1x32xf32, #tpu.memory_space<vmem>>, vector<1x32xf32>
    %c0_27 = arith.constant 0 : index
    %c0_28 = arith.constant 0 : index
    %71 = vector.load %arg10[%c0_27, %c0_28] : memref<32x4xf32, #tpu.memory_space<vmem>>, vector<32x4xf32>
    %c0_29 = arith.constant 0 : index
    %c0_30 = arith.constant 0 : index
    %72 = vector.load %arg11[%c0_29, %c0_30] : memref<32x32xf32, #tpu.memory_space<vmem>>, vector<32x32xf32>
    %c0_31 = arith.constant 0 : index
    %c0_32 = arith.constant 0 : index
    %73 = vector.load %arg12[%c0_31, %c0_32] : memref<1x32xf32, #tpu.memory_space<vmem>>, vector<1x32xf32>
    %c0_33 = arith.constant 0 : index
    %c0_34 = arith.constant 0 : index
    %74 = vector.load %arg13[%c0_33, %c0_34] : memref<4x32xf32, #tpu.memory_space<vmem>>, vector<4x32xf32>
    %75 = vector.broadcast %69 : vector<1x32xf32> to vector<104x32xf32>
    %76 = arith.mulf %68, %75 : vector<104x32xf32>
    %77 = vector.broadcast %70 : vector<1x32xf32> to vector<104x32xf32>
    %78 = arith.addf %76, %77 : vector<104x32xf32>
    %cst_35 = arith.constant dense<0.000000e+00> : vector<104x4xf32>
    %79 = tpu.matmul %78, %71, %cst_35 {dimension_numbers = #tpu.dot_dimension_numbers<[1], [0], [0], [1], [0, 0, 1, 1], [], []>} : vector<104x32xf32>, vector<32x4xf32>, vector<104x4xf32> -> vector<104x4xf32>
    %80 = tpu.iota {dimensions = array<i32: 1>} : vector<104x4xi32>
    %cst_36 = arith.constant dense<0xFF800000> : vector<104xf32>
    %81 = vector.multi_reduction <maximumf>, %79, %cst_36 [1] : vector<104x4xf32> to vector<104xf32>
    %82 = vector.shape_cast %81 : vector<104xf32> to vector<104x1xf32>
    %83 = vector.broadcast %82 : vector<104x1xf32> to vector<104x4xf32>
    %84 = arith.cmpf oeq, %79, %83 : vector<104x4xf32>
    %c4_i32_37 = arith.constant 4 : i32
    %85 = vector.broadcast %c4_i32_37 : i32 to vector<104x4xi32>
    %86 = arith.select %84, %80, %85 : vector<104x4xi1>, vector<104x4xi32>
    %cst_38 = arith.constant dense<2147483647> : vector<104xi32>
    %87 = vector.multi_reduction <minsi>, %86, %cst_38 [1] : vector<104x4xi32> to vector<104xi32>
    %88 = vector.shape_cast %87 : vector<104xi32> to vector<104x1xi32>
    %89 = vector.broadcast %88 : vector<104x1xi32> to vector<104x4xi32>
    %90 = arith.cmpi eq, %80, %89 : vector<104x4xi32>
    %cst_39 = arith.constant 0xFF800000 : f32
    %91 = vector.broadcast %cst_39 : f32 to vector<104x4xf32>
    %92 = arith.select %90, %91, %79 : vector<104x4xi1>, vector<104x4xf32>
    %cst_40 = arith.constant dense<0xFF800000> : vector<104xf32>
    %93 = vector.multi_reduction <maximumf>, %92, %cst_40 [1] : vector<104x4xf32> to vector<104xf32>
    %94 = vector.shape_cast %93 : vector<104xf32> to vector<104x1xf32>
    %95 = vector.broadcast %94 : vector<104x1xf32> to vector<104x4xf32>
    %96 = arith.cmpf oeq, %92, %95 : vector<104x4xf32>
    %c4_i32_41 = arith.constant 4 : i32
    %97 = vector.broadcast %c4_i32_41 : i32 to vector<104x4xi32>
    %98 = arith.select %96, %80, %97 : vector<104x4xi1>, vector<104x4xi32>
    %cst_42 = arith.constant dense<2147483647> : vector<104xi32>
    %99 = vector.multi_reduction <minsi>, %98, %cst_42 [1] : vector<104x4xi32> to vector<104xi32>
    %100 = vector.shape_cast %99 : vector<104xi32> to vector<104x1xi32>
    %101 = arith.subf %82, %82 : vector<104x1xf32>
    %102 = math.exp %101 : vector<104x1xf32>
    %103 = arith.subf %94, %82 : vector<104x1xf32>
    %104 = math.exp %103 : vector<104x1xf32>
    %105 = arith.addf %102, %104 : vector<104x1xf32>
    %cst_43 = arith.constant 1.000000e+00 : f32
    %106 = vector.broadcast %cst_43 : f32 to vector<104x1xf32>
    %107 = arith.divf %106, %105 : vector<104x1xf32>
    %cst_44 = arith.constant 0.000000e+00 : f32
    %108 = vector.broadcast %cst_44 : f32 to vector<104x4xf32>
    %109 = arith.mulf %102, %107 : vector<104x1xf32>
    %110 = vector.broadcast %88 : vector<104x1xi32> to vector<104x4xi32>
    %111 = arith.cmpi eq, %80, %110 : vector<104x4xi32>
    %112 = arith.extui %111 : vector<104x4xi1> to vector<104x4xi32>
    %113 = arith.sitofp %112 : vector<104x4xi32> to vector<104x4xf32>
    %114 = vector.broadcast %109 : vector<104x1xf32> to vector<104x4xf32>
    %115 = arith.mulf %114, %113 : vector<104x4xf32>
    %116 = arith.addf %108, %115 : vector<104x4xf32>
    %117 = arith.mulf %104, %107 : vector<104x1xf32>
    %118 = vector.broadcast %100 : vector<104x1xi32> to vector<104x4xi32>
    %119 = arith.cmpi eq, %80, %118 : vector<104x4xi32>
    %120 = arith.extui %119 : vector<104x4xi1> to vector<104x4xi32>
    %121 = arith.sitofp %120 : vector<104x4xi32> to vector<104x4xf32>
    %122 = vector.broadcast %117 : vector<104x1xf32> to vector<104x4xf32>
    %123 = arith.mulf %122, %121 : vector<104x4xf32>
    %124 = arith.addf %116, %123 : vector<104x4xf32>
    %cst_45 = arith.constant dense<0.000000e+00> : vector<104x32xf32>
    %125 = tpu.matmul %78, %72, %cst_45 {dimension_numbers = #tpu.dot_dimension_numbers<[1], [0], [0], [1], [0, 0, 1, 1], [], []>} : vector<104x32xf32>, vector<32x32xf32>, vector<104x32xf32> -> vector<104x32xf32>
    %126 = vector.broadcast %73 : vector<1x32xf32> to vector<104x32xf32>
    %127 = arith.addf %125, %126 : vector<104x32xf32>
    %cst_46 = arith.constant dense<0.000000e+00> : vector<104x32xf32>
    %128 = tpu.matmul %124, %74, %cst_46 {dimension_numbers = #tpu.dot_dimension_numbers<[1], [0], [0], [1], [0, 0, 1, 1], [], []>} : vector<104x4xf32>, vector<4x32xf32>, vector<104x32xf32> -> vector<104x32xf32>
    %129 = arith.mulf %128, %127 : vector<104x32xf32>
    %130 = vector.extract_strided_slice %129 {offsets = [0, 0], sizes = [104, 8], strides = [1, 1]} : vector<104x32xf32> to vector<104x8xf32>
    %131 = vector.extract_strided_slice %129 {offsets = [0, 8], sizes = [104, 8], strides = [1, 1]} : vector<104x32xf32> to vector<104x8xf32>
    %132 = arith.addf %130, %131 : vector<104x8xf32>
    %133 = vector.extract_strided_slice %129 {offsets = [0, 16], sizes = [104, 8], strides = [1, 1]} : vector<104x32xf32> to vector<104x8xf32>
    %134 = arith.addf %132, %133 : vector<104x8xf32>
    %135 = vector.extract_strided_slice %129 {offsets = [0, 24], sizes = [104, 8], strides = [1, 1]} : vector<104x32xf32> to vector<104x8xf32>
    %136 = arith.addf %134, %135 : vector<104x8xf32>
    %c0_47 = arith.constant 0 : index
    %c0_48 = arith.constant 0 : index
    %137 = vector.load %arg14[%c0_47, %c0_48] : memref<104x8xf32, #tpu.memory_space<vmem>>, vector<104x8xf32>
    tpu.vector_store %arg14[%c0_47, %c0_48], %136 {strides = array<i32>} : memref<104x8xf32, #tpu.memory_space<vmem>>, vector<104x8xf32>,
    %138 = tpu.iota {dimensions = array<i32: 1>} : vector<104x2xi32>
    %c0_i32 = arith.constant 0 : i32
    %139 = vector.broadcast %c0_i32 : i32 to vector<104x2xi32>
    %c0_i32_49 = arith.constant 0 : i32
    %140 = vector.broadcast %c0_i32_49 : i32 to vector<104x2xi32>
    %141 = arith.cmpi eq, %138, %140 : vector<104x2xi32>
    %c0_i32_50 = arith.constant 0 : i32
    %142 = vector.shape_cast %20 : vector<104x1xi32> to vector<104x1xi32>
    %143 = vector.broadcast %142 : vector<104x1xi32> to vector<104x2xi32>
    %144 = vector.broadcast %c0_i32_50 : i32 to vector<104x2xi32>
    %145 = arith.select %141, %143, %144 : vector<104x2xi1>, vector<104x2xi32>
    %146 = arith.addi %139, %145 : vector<104x2xi32>
    %c1_i32 = arith.constant 1 : i32
    %147 = vector.broadcast %c1_i32 : i32 to vector<104x2xi32>
    %148 = arith.cmpi eq, %138, %147 : vector<104x2xi32>
    %c0_i32_51 = arith.constant 0 : i32
    %149 = vector.shape_cast %32 : vector<104x1xi32> to vector<104x1xi32>
    %150 = vector.broadcast %149 : vector<104x1xi32> to vector<104x2xi32>
    %151 = vector.broadcast %c0_i32_51 : i32 to vector<104x2xi32>
    %152 = arith.select %148, %150, %151 : vector<104x2xi1>, vector<104x2xi32>
    %153 = arith.addi %146, %152 : vector<104x2xi32>
    %c0_52 = arith.constant 0 : index
    %c0_53 = arith.constant 0 : index
    %154 = vector.load %arg15[%c0_52, %c0_53] : memref<104x2xi32, #tpu.memory_space<vmem>>, vector<104x2xi32>
    tpu.vector_store %arg15[%c0_52, %c0_53], %153 {strides = array<i32>} : memref<104x2xi32, #tpu.memory_space<vmem>>, vector<104x2xi32>,
    %c0_i32_54 = arith.constant 0 : i32
    %155 = vector.broadcast %c0_i32_54 : i32 to vector<104x2xi32>
    %c0_i32_55 = arith.constant 0 : i32
    %156 = vector.broadcast %c0_i32_55 : i32 to vector<104x2xi32>
    %157 = arith.cmpi eq, %138, %156 : vector<104x2xi32>
    %c0_i32_56 = arith.constant 0 : i32
    %158 = vector.shape_cast %88 : vector<104x1xi32> to vector<104x1xi32>
    %159 = vector.broadcast %158 : vector<104x1xi32> to vector<104x2xi32>
    %160 = vector.broadcast %c0_i32_56 : i32 to vector<104x2xi32>
    %161 = arith.select %157, %159, %160 : vector<104x2xi1>, vector<104x2xi32>
    %162 = arith.addi %155, %161 : vector<104x2xi32>
    %c1_i32_57 = arith.constant 1 : i32
    %163 = vector.broadcast %c1_i32_57 : i32 to vector<104x2xi32>
    %164 = arith.cmpi eq, %138, %163 : vector<104x2xi32>
    %c0_i32_58 = arith.constant 0 : i32
    %165 = vector.shape_cast %100 : vector<104x1xi32> to vector<104x1xi32>
    %166 = vector.broadcast %165 : vector<104x1xi32> to vector<104x2xi32>
    %167 = vector.broadcast %c0_i32_58 : i32 to vector<104x2xi32>
    %168 = arith.select %164, %166, %167 : vector<104x2xi1>, vector<104x2xi32>
    %169 = arith.addi %162, %168 : vector<104x2xi32>
    %c0_59 = arith.constant 0 : index
    %c0_60 = arith.constant 0 : index
    %170 = vector.load %arg16[%c0_59, %c0_60] : memref<104x2xi32, #tpu.memory_space<vmem>>, vector<104x2xi32>
    tpu.vector_store %arg16[%c0_59, %c0_60], %169 {strides = array<i32>} : memref<104x2xi32, #tpu.memory_space<vmem>>, vector<104x2xi32>,
    %c104_i32 = arith.constant 104 : i32
    %171 = arith.muli %arg0, %c104_i32 : i32
    %172 = tpu.iota {dimensions = array<i32: 0>} : vector<104x1xi32>
    %173 = vector.broadcast %171 : i32 to vector<104x1xi32>
    %174 = arith.addi %173, %172 : vector<104x1xi32>
    %c200_i32 = arith.constant 200 : i32
    %175 = vector.broadcast %c200_i32 : i32 to vector<104x1xi32>
    %176 = arith.cmpi slt, %174, %175 : vector<104x1xi32>
    %cst_61 = arith.constant 0.000000e+00 : f32
    %177 = vector.shape_cast %176 : vector<104x1xi1> to vector<104x1xi1>
    %178 = vector.broadcast %177 : vector<104x1xi1> to vector<104x4xi1>
    %179 = vector.broadcast %cst_61 : f32 to vector<104x4xf32>
    %180 = arith.select %178, %56, %179 : vector<104x4xi1>, vector<104x4xf32>
    %cst_62 = arith.constant dense<0.000000e+00> : vector<4xf32>
    %181 = vector.multi_reduction <add>, %180, %cst_62 [0] : vector<104x4xf32> to vector<4xf32>
    %182 = vector.shape_cast %181 : vector<4xf32> to vector<1x4xf32>
    %cst_63 = arith.constant 0.000000e+00 : f32
    %183 = vector.broadcast %cst_63 : f32 to vector<104x4xf32>
    %184 = arith.cmpf ogt, %56, %183 : vector<104x4xf32>
    %185 = vector.broadcast %176 : vector<104x1xi1> to vector<104x4xi1>
    %186 = arith.andi %185, %184 : vector<104x4xi1>
    %cst_64 = arith.constant 1.000000e+00 : f32
    %cst_65 = arith.constant 0.000000e+00 : f32
    %187 = vector.broadcast %cst_64 : f32 to vector<104x4xf32>
    %188 = vector.broadcast %cst_65 : f32 to vector<104x4xf32>
    %189 = arith.select %186, %187, %188 : vector<104x4xi1>, vector<104x4xf32>
    %cst_66 = arith.constant dense<0.000000e+00> : vector<4xf32>
    %190 = vector.multi_reduction <add>, %189, %cst_66 [0] : vector<104x4xf32> to vector<4xf32>
    %191 = vector.shape_cast %190 : vector<4xf32> to vector<1x4xf32>
    %cst_67 = arith.constant 0.000000e+00 : f32
    %192 = vector.shape_cast %176 : vector<104x1xi1> to vector<104x1xi1>
    %193 = vector.broadcast %192 : vector<104x1xi1> to vector<104x4xi1>
    %194 = vector.broadcast %cst_67 : f32 to vector<104x4xf32>
    %195 = arith.select %193, %124, %194 : vector<104x4xi1>, vector<104x4xf32>
    %cst_68 = arith.constant dense<0.000000e+00> : vector<4xf32>
    %196 = vector.multi_reduction <add>, %195, %cst_68 [0] : vector<104x4xf32> to vector<4xf32>
    %197 = vector.shape_cast %196 : vector<4xf32> to vector<1x4xf32>
    %cst_69 = arith.constant 0.000000e+00 : f32
    %198 = vector.broadcast %cst_69 : f32 to vector<104x4xf32>
    %199 = arith.cmpf ogt, %124, %198 : vector<104x4xf32>
    %200 = vector.broadcast %176 : vector<104x1xi1> to vector<104x4xi1>
    %201 = arith.andi %200, %199 : vector<104x4xi1>
    %cst_70 = arith.constant 1.000000e+00 : f32
    %cst_71 = arith.constant 0.000000e+00 : f32
    %202 = vector.broadcast %cst_70 : f32 to vector<104x4xf32>
    %203 = vector.broadcast %cst_71 : f32 to vector<104x4xf32>
    %204 = arith.select %201, %202, %203 : vector<104x4xi1>, vector<104x4xf32>
    %cst_72 = arith.constant dense<0.000000e+00> : vector<4xf32>
    %205 = vector.multi_reduction <add>, %204, %cst_72 [0] : vector<104x4xf32> to vector<4xf32>
    %206 = vector.shape_cast %205 : vector<4xf32> to vector<1x4xf32>
    %207 = tpu.iota {dimensions = array<i32: 0>} : vector<4x4xi32>
    %c0_i32_73 = arith.constant 0 : i32
    %208 = vector.broadcast %c0_i32_73 : i32 to vector<4x4xi32>
    %209 = arith.cmpi eq, %207, %208 : vector<4x4xi32>
    %cst_74 = arith.constant 0.000000e+00 : f32
    %210 = vector.shape_cast %182 : vector<1x4xf32> to vector<1x4xf32>
    %211 = vector.broadcast %210 : vector<1x4xf32> to vector<4x4xf32>
    %212 = vector.broadcast %cst_74 : f32 to vector<4x4xf32>
    %213 = arith.select %209, %211, %212 : vector<4x4xi1>, vector<4x4xf32>
    %c1_i32_75 = arith.constant 1 : i32
    %214 = vector.broadcast %c1_i32_75 : i32 to vector<4x4xi32>
    %215 = arith.cmpi eq, %207, %214 : vector<4x4xi32>
    %cst_76 = arith.constant 0.000000e+00 : f32
    %216 = vector.shape_cast %191 : vector<1x4xf32> to vector<1x4xf32>
    %217 = vector.broadcast %216 : vector<1x4xf32> to vector<4x4xf32>
    %218 = vector.broadcast %cst_76 : f32 to vector<4x4xf32>
    %219 = arith.select %215, %217, %218 : vector<4x4xi1>, vector<4x4xf32>
    %220 = arith.addf %213, %219 : vector<4x4xf32>
    %c2_i32 = arith.constant 2 : i32
    %221 = vector.broadcast %c2_i32 : i32 to vector<4x4xi32>
    %222 = arith.cmpi eq, %207, %221 : vector<4x4xi32>
    %cst_77 = arith.constant 0.000000e+00 : f32
    %223 = vector.shape_cast %197 : vector<1x4xf32> to vector<1x4xf32>
    %224 = vector.broadcast %223 : vector<1x4xf32> to vector<4x4xf32>
    %225 = vector.broadcast %cst_77 : f32 to vector<4x4xf32>
    %226 = arith.select %222, %224, %225 : vector<4x4xi1>, vector<4x4xf32>
    %227 = arith.addf %220, %226 : vector<4x4xf32>
    %c3_i32 = arith.constant 3 : i32
    %228 = vector.broadcast %c3_i32 : i32 to vector<4x4xi32>
    %229 = arith.cmpi eq, %207, %228 : vector<4x4xi32>
    %cst_78 = arith.constant 0.000000e+00 : f32
    %230 = vector.shape_cast %206 : vector<1x4xf32> to vector<1x4xf32>
    %231 = vector.broadcast %230 : vector<1x4xf32> to vector<4x4xf32>
    %232 = vector.broadcast %cst_78 : f32 to vector<4x4xf32>
    %233 = arith.select %229, %231, %232 : vector<4x4xi1>, vector<4x4xf32>
    %234 = arith.addf %227, %233 : vector<4x4xf32>
    %c0_79 = arith.constant 0 : index
    %c0_80 = arith.constant 0 : index
    %c0_81 = arith.constant 0 : index
    %235 = vector.load %arg17[%c0_79, %c0_80, %c0_81] : memref<1x4x4xf32, #tpu.memory_space<vmem>>, vector<1x4x4xf32>
    %236 = vector.shape_cast %235 : vector<1x4x4xf32> to vector<4x4xf32>
    %237 = vector.shape_cast %234 : vector<4x4xf32> to vector<1x4x4xf32>
    tpu.vector_store %arg17[%c0_79, %c0_80, %c0_81], %237 {strides = array<i32>} : memref<1x4x4xf32, #tpu.memory_space<vmem>>, vector<1x4x4xf32>,
    return
  }
  func.func @transform_0(%arg0: i32) -> (i32, i32) {
    %c0_i32 = arith.constant 0 : i32
    %c0_i32_0 = arith.constant 0 : i32
    return %arg0, %c0_i32 : i32, i32
  }
  func.func @transform_1(%arg0: i32) -> (i32, i32) {
    %c0_i32 = arith.constant 0 : i32
    %c0_i32_0 = arith.constant 0 : i32
    %c0_i32_1 = arith.constant 0 : i32
    return %c0_i32, %c0_i32_0 : i32, i32
  }
  func.func @transform_2(%arg0: i32) -> (i32, i32) {
    %c0_i32 = arith.constant 0 : i32
    %c0_i32_0 = arith.constant 0 : i32
    %c0_i32_1 = arith.constant 0 : i32
    return %c0_i32, %c0_i32_0 : i32, i32
  }
  func.func @transform_3(%arg0: i32) -> (i32, i32) {
    %c0_i32 = arith.constant 0 : i32
    %c0_i32_0 = arith.constant 0 : i32
    %c0_i32_1 = arith.constant 0 : i32
    return %c0_i32, %c0_i32_0 : i32, i32
  }
  func.func @transform_4(%arg0: i32) -> (i32, i32) {
    %c0_i32 = arith.constant 0 : i32
    %c0_i32_0 = arith.constant 0 : i32
    %c0_i32_1 = arith.constant 0 : i32
    return %c0_i32, %c0_i32_0 : i32, i32
  }
  func.func @transform_5(%arg0: i32) -> (i32, i32) {
    %c0_i32 = arith.constant 0 : i32
    %c0_i32_0 = arith.constant 0 : i32
    %c0_i32_1 = arith.constant 0 : i32
    return %c0_i32, %c0_i32_0 : i32, i32
  }
  func.func @transform_6(%arg0: i32) -> (i32, i32) {
    %c0_i32 = arith.constant 0 : i32
    %c0_i32_0 = arith.constant 0 : i32
    %c0_i32_1 = arith.constant 0 : i32
    return %c0_i32, %c0_i32_0 : i32, i32
  }
  func.func @transform_7(%arg0: i32) -> (i32, i32) {
    %c0_i32 = arith.constant 0 : i32
    %c0_i32_0 = arith.constant 0 : i32
    %c0_i32_1 = arith.constant 0 : i32
    return %c0_i32, %c0_i32_0 : i32, i32
  }
  func.func @transform_8(%arg0: i32) -> (i32, i32) {
    %c0_i32 = arith.constant 0 : i32
    %c0_i32_0 = arith.constant 0 : i32
    %c0_i32_1 = arith.constant 0 : i32
    return %c0_i32, %c0_i32_0 : i32, i32
  }
  func.func @transform_9(%arg0: i32) -> (i32, i32) {
    %c0_i32 = arith.constant 0 : i32
    %c0_i32_0 = arith.constant 0 : i32
    %c0_i32_1 = arith.constant 0 : i32
    return %c0_i32, %c0_i32_0 : i32, i32
  }
  func.func @transform_10(%arg0: i32) -> (i32, i32) {
    %c0_i32 = arith.constant 0 : i32
    %c0_i32_0 = arith.constant 0 : i32
    %c0_i32_1 = arith.constant 0 : i32
    return %c0_i32, %c0_i32_0 : i32, i32
  }
  func.func @transform_11(%arg0: i32) -> (i32, i32) {
    %c0_i32 = arith.constant 0 : i32
    %c0_i32_0 = arith.constant 0 : i32
    %c0_i32_1 = arith.constant 0 : i32
    return %c0_i32, %c0_i32_0 : i32, i32
  }
  func.func @transform_12(%arg0: i32) -> (i32, i32) {
    %c0_i32 = arith.constant 0 : i32
    %c0_i32_0 = arith.constant 0 : i32
    %c0_i32_1 = arith.constant 0 : i32
    return %c0_i32, %c0_i32_0 : i32, i32
  }
  func.func @transform_13(%arg0: i32) -> (i32, i32) {
    %c0_i32 = arith.constant 0 : i32
    %c0_i32_0 = arith.constant 0 : i32
    return %arg0, %c0_i32 : i32, i32
  }
  func.func @transform_14(%arg0: i32) -> (i32, i32) {
    %c0_i32 = arith.constant 0 : i32
    %c0_i32_0 = arith.constant 0 : i32
    return %arg0, %c0_i32 : i32, i32
  }
  func.func @transform_15(%arg0: i32) -> (i32, i32) {
    %c0_i32 = arith.constant 0 : i32
    %c0_i32_0 = arith.constant 0 : i32
    return %arg0, %c0_i32 : i32, i32
  }
  func.func @transform_16(%arg0: i32) -> (i32, i32, i32) {
    %c0_i32 = arith.constant 0 : i32
    %c0_i32_0 = arith.constant 0 : i32
    %c0_i32_1 = arith.constant 0 : i32
    return %arg0, %c0_i32, %c0_i32_0 : i32, i32, i32
  }
}

</mosaic_0001>

<llo_original>
// kernel: hgmoe_forward.1
$region0: #{hgmoe_forward.1}
  #allocation0 [shape = 'u32[]', space=smem, size = 0x4, offset = 0x4, fixed_abs, tag = 'smem constant byte address 0x4 - core index']
  #allocation1 [shape = 'u32[144,128]{1,0:T(1,128)}', space=vmem, size = 0x12000, scoped, tag = 'internal scratch']
  %s0 = inlined_call_operand.vmem [shape: f32[208,8], index: 0, kind: input, shape index: {}]
  %s1 = inlined_call_operand.vmem [shape: f32[1,8], index: 1, kind: input, shape index: {}]
  %s2 = inlined_call_operand.vmem [shape: f32[1,8], index: 2, kind: input, shape index: {}]
  %s3 = inlined_call_operand.vmem [shape: f32[8,4], index: 3, kind: input, shape index: {}]
  %s4 = inlined_call_operand.vmem [shape: f32[8,128], index: 4, kind: input, shape index: {}]
  %s5 = inlined_call_operand.vmem [shape: f32[1,128], index: 5, kind: input, shape index: {}]
  %s6 = inlined_call_operand.vmem [shape: f32[4,128], index: 6, kind: input, shape index: {}]
  %s7 = inlined_call_operand.vmem [shape: f32[1,32], index: 7, kind: input, shape index: {}]
  %s8 = inlined_call_operand.vmem [shape: f32[1,32], index: 8, kind: input, shape index: {}]
  %s9 = inlined_call_operand.vmem [shape: f32[32,4], index: 9, kind: input, shape index: {}]
  %s10 = inlined_call_operand.vmem [shape: f32[32,32], index: 10, kind: input, shape index: {}]
  %s11 = inlined_call_operand.vmem [shape: f32[1,32], index: 11, kind: input, shape index: {}]
  %s12 = inlined_call_operand.vmem [shape: f32[4,32], index: 12, kind: input, shape index: {}]
  %s13 = inlined_call_operand.vmem [shape: f32[208,8], index: 13, kind: output, shape index: {0}]
  %s14 = inlined_call_operand.vmem [shape: s32[208,2], index: 14, kind: output, shape index: {1}]
  %s15 = inlined_call_operand.vmem [shape: s32[208,2], index: 15, kind: output, shape index: {2}]
  %s16 = inlined_call_operand.vmem [shape: f32[2,4,4], index: 16, kind: output, shape index: {3}]
  %17 = xla_tuple %s13, %s14, %s15, %s16
  %s18 = sld [smem:[#allocation0]]
  $region109: #{hgmoe_forward.1} parent=0
    _
  %s20 = ssub.s32 1, %s18
  %s21 = scalar_select 0, %s20, %s18
  loop: start=0, step=1, limit=4
  $region2: #{hgmoe_forward.1} parent=0 // loop_pre_header
    _
  $region3: #{hgmoe_forward.1} parent=0 // loop_header
    %s23 = sphi 0, %s27
    %p24 = scmp.ge.s32.totalorder %s23, 4
    %s33 = sphi 0, %s35
    %s36 = sphi 0, %s33
    %s37 = sphi 0, %s36
    %s53 = sphi 0, %s37
    %s57 = sphi 0, %s57
    %s59 = sphi 0, %s57
    %s60 = sphi 0, %s59
    %s74 = sphi 0, %s60
    %s78 = sphi 0, %s78
    %s80 = sphi 0, %s78
    %s81 = sphi 0, %s80
    %s95 = sphi 0, %s81
    %s99 = sphi 0, %s99
    %s101 = sphi 0, %s99
    %s102 = sphi 0, %s101
    %s116 = sphi 0, %s102
    %s120 = sphi 0, %s120
    %s122 = sphi 0, %s120
    %s123 = sphi 0, %s122
    %s137 = sphi 0, %s123
    %s141 = sphi 0, %s141
    %s143 = sphi 0, %s141
    %s144 = sphi 0, %s143
    %s158 = sphi 0, %s144
    %s162 = sphi 0, %s162
    %s164 = sphi 0, %s162
    %s165 = sphi 0, %s164
    %s179 = sphi 0, %s165
    %s183 = sphi 0, %s183
    %s185 = sphi 0, %s183
    %s186 = sphi 0, %s185
    %s200 = sphi 0, %s186
    %s204 = sphi 0, %s204
    %s206 = sphi 0, %s204
    %s207 = sphi 0, %s206
    %s221 = sphi 0, %s207
    %s225 = sphi 0, %s225
    %s227 = sphi 0, %s225
    %s228 = sphi 0, %s227
    %s242 = sphi 0, %s228
    %s246 = sphi 0, %s246
    %s248 = sphi 0, %s246
    %s249 = sphi 0, %s248
    %s263 = sphi 0, %s249
    %s267 = sphi 0, %s267
    %s269 = sphi 0, %s267
    %s270 = sphi 0, %s269
    %s284 = sphi 0, %s270
    %s288 = sphi 0, %s288
    %s290 = sphi 0, %s288
    %s291 = sphi 0, %s290
    %s305 = sphi 0, %s291
    %s311 = sphi 0, %s313
    %s314 = sphi 0, %s311
    %s315 = sphi 0, %s314
    %s331 = sphi 0, %s315
    %s337 = sphi 0, %s339
    %s340 = sphi 0, %s337
    %s341 = sphi 0, %s340
    %s357 = sphi 0, %s341
    %s363 = sphi 0, %s365
    %s366 = sphi 0, %s363
    %s367 = sphi 0, %s366
    %s383 = sphi 0, %s367
    %s389 = sphi 0, %s391
    %s392 = sphi 0, %s389
    %s393 = sphi 0, %s392
    %s409 = sphi 0, %s393
  $region4: #{hgmoe_forward.1} parent=0 // loop_header_branch
    %26 = sbr.rel (%p24) target = $region8
  $region5: #{hgmoe_forward.1} parent=0 // loop_body
    %s28 = ssub.s32 %s23, 1
    %s29 = ssub.s32 %s23, 2
    %s30 = sadd.s32 %s23, 1
    %s31 = ssub.s32 %s23, %s30
    %p32 = scmp.eq.s32.totalorder %s31, 0
    %s34 = sadd.s32 %s33, 1
    %s35 = scalar_select %p32, %s33, %s34
    %p38 = pneg %p32
    %p39 = scmp.eq.s32.totalorder %s23, 1
    %p40 = por %p38, %p39
    %p41 = scmp.ne.s32.totalorder %s33, %s36
    %p42 = scmp.eq.s32.totalorder %s23, 0
    %p43 = por %p41, %p42
    %p44 = scmp.ne.s32.totalorder %s33, %s36
    %p45 = scmp.eq.s32.totalorder %s28, 1
    %p46 = por %p44, %p45
    %p47 = scmp.ne.s32.totalorder %s36, %s37
    %p48 = scmp.eq.s32.totalorder %s28, 0
    %p49 = por %p47, %p48
    %p50 = scmp.ne.s32.totalorder %s36, %s37
    %p51 = scmp.eq.s32.totalorder %s29, 1
    %p52 = por %p50, %p51
    %p54 = scmp.ne.s32.totalorder %s37, %s53
    %p55 = scmp.eq.s32.totalorder %s29, 0
    %p56 = por %p54, %p55
    %s58 = sadd.s32 %s57, 1
    %p61 = scmp.eq.s32.totalorder %s23, 1
    %p62 = scmp.ne.s32.totalorder %s57, %s59
    %p63 = scmp.eq.s32.totalorder %s23, 0
    %p64 = por %p62, %p63
    %p65 = scmp.ne.s32.totalorder %s57, %s59
    %p66 = scmp.eq.s32.totalorder %s28, 1
    %p67 = por %p65, %p66
    %p68 = scmp.ne.s32.totalorder %s59, %s60
    %p69 = scmp.eq.s32.totalorder %s28, 0
    %p70 = por %p68, %p69
    %p71 = scmp.ne.s32.totalorder %s59, %s60
    %p72 = scmp.eq.s32.totalorder %s29, 1
    %p73 = por %p71, %p72
    %p75 = scmp.ne.s32.totalorder %s60, %s74
    %p76 = scmp.eq.s32.totalorder %s29, 0
    %p77 = por %p75, %p76
    %s79 = sadd.s32 %s78, 1
    %p82 = scmp.eq.s32.totalorder %s23, 1
    %p83 = scmp.ne.s32.totalorder %s78, %s80
    %p84 = scmp.eq.s32.totalorder %s23, 0
    %p85 = por %p83, %p84
    %p86 = scmp.ne.s32.totalorder %s78, %s80
    %p87 = scmp.eq.s32.totalorder %s28, 1
    %p88 = por %p86, %p87
    %p89 = scmp.ne.s32.totalorder %s80, %s81
    %p90 = scmp.eq.s32.totalorder %s28, 0
    %p91 = por %p89, %p90
    %p92 = scmp.ne.s32.totalorder %s80, %s81
    %p93 = scmp.eq.s32.totalorder %s29, 1
    %p94 = por %p92, %p93
    %p96 = scmp.ne.s32.totalorder %s81, %s95
    %p97 = scmp.eq.s32.totalorder %s29, 0
    %p98 = por %p96, %p97
    %s100 = sadd.s32 %s99, 1
    %p103 = scmp.eq.s32.totalorder %s23, 1
    %p104 = scmp.ne.s32.totalorder %s99, %s101
    %p105 = scmp.eq.s32.totalorder %s23, 0
    %p106 = por %p104, %p105
    %p107 = scmp.ne.s32.totalorder %s99, %s101
    %p108 = scmp.eq.s32.totalorder %s28, 1
    %p109 = por %p107, %p108
    %p110 = scmp.ne.s32.totalorder %s101, %s102
    %p111 = scmp.eq.s32.totalorder %s28, 0
    %p112 = por %p110, %p111
    %p113 = scmp.ne.s32.totalorder %s101, %s102
    %p114 = scmp.eq.s32.totalorder %s29, 1
    %p115 = por %p113, %p114
    %p117 = scmp.ne.s32.totalorder %s102, %s116
    %p118 = scmp.eq.s32.totalorder %s29, 0
    %p119 = por %p117, %p118
    %s121 = sadd.s32 %s120, 1
    %p124 = scmp.eq.s32.totalorder %s23, 1
    %p125 = scmp.ne.s32.totalorder %s120, %s122
    %p126 = scmp.eq.s32.totalorder %s23, 0
    %p127 = por %p125, %p126
    %p128 = scmp.ne.s32.totalorder %s120, %s122
    %p129 = scmp.eq.s32.totalorder %s28, 1
    %p130 = por %p128, %p129
    %p131 = scmp.ne.s32.totalorder %s122, %s123
    %p132 = scmp.eq.s32.totalorder %s28, 0
    %p133 = por %p131, %p132
    %p134 = scmp.ne.s32.totalorder %s122, %s123
    %p135 = scmp.eq.s32.totalorder %s29, 1
    %p136 = por %p134, %p135
    %p138 = scmp.ne.s32.totalorder %s123, %s137
    %p139 = scmp.eq.s32.totalorder %s29, 0
    %p140 = por %p138, %p139
    %s142 = sadd.s32 %s141, 1
    %p145 = scmp.eq.s32.totalorder %s23, 1
    %p146 = scmp.ne.s32.totalorder %s141, %s143
    %p147 = scmp.eq.s32.totalorder %s23, 0
    %p148 = por %p146, %p147
    %p149 = scmp.ne.s32.totalorder %s141, %s143
    %p150 = scmp.eq.s32.totalorder %s28, 1
    %p151 = por %p149, %p150
    %p152 = scmp.ne.s32.totalorder %s143, %s144
    %p153 = scmp.eq.s32.totalorder %s28, 0
    %p154 = por %p152, %p153
    %p155 = scmp.ne.s32.totalorder %s143, %s144
    %p156 = scmp.eq.s32.totalorder %s29, 1
    %p157 = por %p155, %p156
    %p159 = scmp.ne.s32.totalorder %s144, %s158
    %p160 = scmp.eq.s32.totalorder %s29, 0
    %p161 = por %p159, %p160
    %s163 = sadd.s32 %s162, 1
    %p166 = scmp.eq.s32.totalorder %s23, 1
    %p167 = scmp.ne.s32.totalorder %s162, %s164
    %p168 = scmp.eq.s32.totalorder %s23, 0
    %p169 = por %p167, %p168
    %p170 = scmp.ne.s32.totalorder %s162, %s164
    %p171 = scmp.eq.s32.totalorder %s28, 1
    %p172 = por %p170, %p171
    %p173 = scmp.ne.s32.totalorder %s164, %s165
    %p174 = scmp.eq.s32.totalorder %s28, 0
    %p175 = por %p173, %p174
    %p176 = scmp.ne.s32.totalorder %s164, %s165
    %p177 = scmp.eq.s32.totalorder %s29, 1
    %p178 = por %p176, %p177
    %p180 = scmp.ne.s32.totalorder %s165, %s179
    %p181 = scmp.eq.s32.totalorder %s29, 0
    %p182 = por %p180, %p181
    %s184 = sadd.s32 %s183, 1
    %p187 = scmp.eq.s32.totalorder %s23, 1
    %p188 = scmp.ne.s32.totalorder %s183, %s185
    %p189 = scmp.eq.s32.totalorder %s23, 0
    %p190 = por %p188, %p189
    %p191 = scmp.ne.s32.totalorder %s183, %s185
    %p192 = scmp.eq.s32.totalorder %s28, 1
    %p193 = por %p191, %p192
    %p194 = scmp.ne.s32.totalorder %s185, %s186
    %p195 = scmp.eq.s32.totalorder %s28, 0
    %p196 = por %p194, %p195
    %p197 = scmp.ne.s32.totalorder %s185, %s186
    %p198 = scmp.eq.s32.totalorder %s29, 1
    %p199 = por %p197, %p198
    %p201 = scmp.ne.s32.totalorder %s186, %s200
    %p202 = scmp.eq.s32.totalorder %s29, 0
    %p203 = por %p201, %p202
    %s205 = sadd.s32 %s204, 1
    %p208 = scmp.eq.s32.totalorder %s23, 1
    %p209 = scmp.ne.s32.totalorder %s204, %s206
    %p210 = scmp.eq.s32.totalorder %s23, 0
    %p211 = por %p209, %p210
    %p212 = scmp.ne.s32.totalorder %s204, %s206
    %p213 = scmp.eq.s32.totalorder %s28, 1
    %p214 = por %p212, %p213
    %p215 = scmp.ne.s32.totalorder %s206, %s207
    %p216 = scmp.eq.s32.totalorder %s28, 0
    %p217 = por %p215, %p216
    %p218 = scmp.ne.s32.totalorder %s206, %s207
    %p219 = scmp.eq.s32.totalorder %s29, 1
    %p220 = por %p218, %p219
    %p222 = scmp.ne.s32.totalorder %s207, %s221
    %p223 = scmp.eq.s32.totalorder %s29, 0
    %p224 = por %p222, %p223
    %s226 = sadd.s32 %s225, 1
    %p229 = scmp.eq.s32.totalorder %s23, 1
    %p230 = scmp.ne.s32.totalorder %s225, %s227
    %p231 = scmp.eq.s32.totalorder %s23, 0
    %p232 = por %p230, %p231
    %p233 = scmp.ne.s32.totalorder %s225, %s227
    %p234 = scmp.eq.s32.totalorder %s28, 1
    %p235 = por %p233, %p234
    %p236 = scmp.ne.s32.totalorder %s227, %s228
    %p237 = scmp.eq.s32.totalorder %s28, 0
    %p238 = por %p236, %p237
    %p239 = scmp.ne.s32.totalorder %s227, %s228
    %p240 = scmp.eq.s32.totalorder %s29, 1
    %p241 = por %p239, %p240
    %p243 = scmp.ne.s32.totalorder %s228, %s242
    %p244 = scmp.eq.s32.totalorder %s29, 0
    %p245 = por %p243, %p244
    %s247 = sadd.s32 %s246, 1
    %p250 = scmp.eq.s32.totalorder %s23, 1
    %p251 = scmp.ne.s32.totalorder %s246, %s248
    %p252 = scmp.eq.s32.totalorder %s23, 0
    %p253 = por %p251, %p252
    %p254 = scmp.ne.s32.totalorder %s246, %s248
    %p255 = scmp.eq.s32.totalorder %s28, 1
    %p256 = por %p254, %p255
    %p257 = scmp.ne.s32.totalorder %s248, %s249
    %p258 = scmp.eq.s32.totalorder %s28, 0
    %p259 = por %p257, %p258
    %p260 = scmp.ne.s32.totalorder %s248, %s249
    %p261 = scmp.eq.s32.totalorder %s29, 1
    %p262 = por %p260, %p261
    %p264 = scmp.ne.s32.totalorder %s249, %s263
    %p265 = scmp.eq.s32.totalorder %s29, 0
    %p266 = por %p264, %p265
    %s268 = sadd.s32 %s267, 1
    %p271 = scmp.eq.s32.totalorder %s23, 1
    %p272 = scmp.ne.s32.totalorder %s267, %s269
    %p273 = scmp.eq.s32.totalorder %s23, 0
    %p274 = por %p272, %p273
    %p275 = scmp.ne.s32.totalorder %s267, %s269
    %p276 = scmp.eq.s32.totalorder %s28, 1
    %p277 = por %p275, %p276
    %p278 = scmp.ne.s32.totalorder %s269, %s270
    %p279 = scmp.eq.s32.totalorder %s28, 0
    %p280 = por %p278, %p279
    %p281 = scmp.ne.s32.totalorder %s269, %s270
    %p282 = scmp.eq.s32.totalorder %s29, 1
    %p283 = por %p281, %p282
    %p285 = scmp.ne.s32.totalorder %s270, %s284
    %p286 = scmp.eq.s32.totalorder %s29, 0
    %p287 = por %p285, %p286
    %s289 = sadd.s32 %s288, 1
    %p292 = scmp.eq.s32.totalorder %s23, 1
    %p293 = scmp.ne.s32.totalorder %s288, %s290
    %p294 = scmp.eq.s32.totalorder %s23, 0
    %p295 = por %p293, %p294
    %p296 = scmp.ne.s32.totalorder %s288, %s290
    %p297 = scmp.eq.s32.totalorder %s28, 1
    %p298 = por %p296, %p297
    %p299 = scmp.ne.s32.totalorder %s290, %s291
    %p300 = scmp.eq.s32.totalorder %s28, 0
    %p301 = por %p299, %p300
    %p302 = scmp.ne.s32.totalorder %s290, %s291
    %p303 = scmp.eq.s32.totalorder %s29, 1
    %p304 = por %p302, %p303
    %p306 = scmp.ne.s32.totalorder %s291, %s305
    %p307 = scmp.eq.s32.totalorder %s29, 0
    %p308 = por %p306, %p307
    %s309 = ssub.s32 %s23, %s30
    %p310 = scmp.eq.s32.totalorder %s309, 0
    %s312 = sadd.s32 %s311, 1
    %s313 = scalar_select %p310, %s311, %s312
    %p316 = pneg %p310
    %p317 = scmp.eq.s32.totalorder %s23, 1
    %p318 = por %p316, %p317
    %p319 = scmp.ne.s32.totalorder %s311, %s314
    %p320 = scmp.eq.s32.totalorder %s23, 0
    %p321 = por %p319, %p320
    %p322 = scmp.ne.s32.totalorder %s311, %s314
    %p323 = scmp.eq.s32.totalorder %s28, 1
    %p324 = por %p322, %p323
    %p325 = scmp.ne.s32.totalorder %s314, %s315
    %p326 = scmp.eq.s32.totalorder %s28, 0
    %p327 = por %p325, %p326
    %p328 = scmp.ne.s32.totalorder %s314, %s315
    %p329 = scmp.eq.s32.totalorder %s29, 1
    %p330 = por %p328, %p329
    %p332 = scmp.ne.s32.totalorder %s315, %s331
    %p333 = scmp.eq.s32.totalorder %s29, 0
    %p334 = por %p332, %p333
    %s335 = ssub.s32 %s23, %s30
    %p336 = scmp.eq.s32.totalorder %s335, 0
    %s338 = sadd.s32 %s337, 1
    %s339 = scalar_select %p336, %s337, %s338
    %p342 = pneg %p336
    %p343 = scmp.eq.s32.totalorder %s23, 1
    %p344 = por %p342, %p343
    %p345 = scmp.ne.s32.totalorder %s337, %s340
    %p346 = scmp.eq.s32.totalorder %s23, 0
    %p347 = por %p345, %p346
    %p348 = scmp.ne.s32.totalorder %s337, %s340
    %p349 = scmp.eq.s32.totalorder %s28, 1
    %p350 = por %p348, %p349
    %p351 = scmp.ne.s32.totalorder %s340, %s341
    %p352 = scmp.eq.s32.totalorder %s28, 0
    %p353 = por %p351, %p352
    %p354 = scmp.ne.s32.totalorder %s340, %s341
    %p355 = scmp.eq.s32.totalorder %s29, 1
    %p356 = por %p354, %p355
    %p358 = scmp.ne.s32.totalorder %s341, %s357
    %p359 = scmp.eq.s32.totalorder %s29, 0
    %p360 = por %p358, %p359
    %s361 = ssub.s32 %s23, %s30
    %p362 = scmp.eq.s32.totalorder %s361, 0
    %s364 = sadd.s32 %s363, 1
    %s365 = scalar_select %p362, %s363, %s364
    %p368 = pneg %p362
    %p369 = scmp.eq.s32.totalorder %s23, 1
    %p370 = por %p368, %p369
    %p371 = scmp.ne.s32.totalorder %s363, %s366
    %p372 = scmp.eq.s32.totalorder %s23, 0
    %p373 = por %p371, %p372
    %p374 = scmp.ne.s32.totalorder %s363, %s366
    %p375 = scmp.eq.s32.totalorder %s28, 1
    %p376 = por %p374, %p375
    %p377 = scmp.ne.s32.totalorder %s366, %s367
    %p378 = scmp.eq.s32.totalorder %s28, 0
    %p379 = por %p377, %p378
    %p380 = scmp.ne.s32.totalorder %s366, %s367
    %p381 = scmp.eq.s32.totalorder %s29, 1
    %p382 = por %p380, %p381
    %p384 = scmp.ne.s32.totalorder %s367, %s383
    %p385 = scmp.eq.s32.totalorder %s29, 0
    %p386 = por %p384, %p385
    %s387 = ssub.s32 %s23, %s30
    %p388 = scmp.eq.s32.totalorder %s387, 0
    %s390 = sadd.s32 %s389, 1
    %s391 = scalar_select %p388, %s389, %s390
    %p394 = pneg %p388
    %p395 = scmp.eq.s32.totalorder %s23, 1
    %p396 = por %p394, %p395
    %p397 = scmp.ne.s32.totalorder %s389, %s392
    %p398 = scmp.eq.s32.totalorder %s23, 0
    %p399 = por %p397, %p398
    %p400 = scmp.ne.s32.totalorder %s389, %s392
    %p401 = scmp.eq.s32.totalorder %s28, 1
    %p402 = por %p400, %p401
    %p403 = scmp.ne.s32.totalorder %s392, %s393
    %p404 = scmp.eq.s32.totalorder %s28, 0
    %p405 = por %p403, %p404
    %p406 = scmp.ne.s32.totalorder %s392, %s393
    %p407 = scmp.eq.s32.totalorder %s29, 1
    %p408 = por %p406, %p407
    %p410 = scmp.ne.s32.totalorder %s393, %s409
    %p411 = scmp.eq.s32.totalorder %s29, 0
    %p412 = por %p410, %p411
    %p413 = scmp.le.s32.totalorder 1, %s23
    %p414 = scmp.lt.s32.totalorder %s23, 3
    %p415 = pnand %p413, %p414
    %p416 = pneg %p415
    // Predicated region
    $region9: #{hgmoe_forward.1} parent=5 // pred_check
      _
    $region10: #{hgmoe_forward.1} parent=5 // pred_check_branch
      %418 = sbr.rel (%p415) target = $region12
    $region11: #{hgmoe_forward.1} parent=5 // pred_region
      %s419 = ssub.s32 %s23, 1
      // Predicated region
      $region13: #{hgmoe_forward.1} parent=11 // pred_check
        %p420 = pneg %p70
      $region14: #{hgmoe_forward.1} parent=11 // pred_check_branch
        %422 = sbr.rel (%p420) target = $region16
      $region15: #{hgmoe_forward.1} parent=11 // pred_region
        _
      $region16: #{hgmoe_forward.1} parent=11 // pred_fallthru
        _
      // Predicated region
      $region17: #{hgmoe_forward.1} parent=11 // pred_check
        %p423 = pneg %p91
      $region18: #{hgmoe_forward.1} parent=11 // pred_check_branch
        %425 = sbr.rel (%p423) target = $region20
      $region19: #{hgmoe_forward.1} parent=11 // pred_region
        _
      $region20: #{hgmoe_forward.1} parent=11 // pred_fallthru
        _
      // Predicated region
      $region21: #{hgmoe_forward.1} parent=11 // pred_check
        %p426 = pneg %p112
      $region22: #{hgmoe_forward.1} parent=11 // pred_check_branch
        %428 = sbr.rel (%p426) target = $region24
      $region23: #{hgmoe_forward.1} parent=11 // pred_region
        _
      $region24: #{hgmoe_forward.1} parent=11 // pred_fallthru
        _
      // Predicated region
      $region25: #{hgmoe_forward.1} parent=11 // pred_check
        %p429 = pneg %p133
      $region26: #{hgmoe_forward.1} parent=11 // pred_check_branch
        %431 = sbr.rel (%p429) target = $region28
      $region27: #{hgmoe_forward.1} parent=11 // pred_region
        _
      $region28: #{hgmoe_forward.1} parent=11 // pred_fallthru
        _
      // Predicated region
      $region29: #{hgmoe_forward.1} parent=11 // pred_check
        %p432 = pneg %p154
      $region30: #{hgmoe_forward.1} parent=11 // pred_check_branch
        %434 = sbr.rel (%p432) target = $region32
      $region31: #{hgmoe_forward.1} parent=11 // pred_region
        _
      $region32: #{hgmoe_forward.1} parent=11 // pred_fallthru
        _
      // Predicated region
      $region33: #{hgmoe_forward.1} parent=11 // pred_check
        %p435 = pneg %p175
      $region34: #{hgmoe_forward.1} parent=11 // pred_check_branch
        %437 = sbr.rel (%p435) target = $region36
      $region35: #{hgmoe_forward.1} parent=11 // pred_region
        _
      $region36: #{hgmoe_forward.1} parent=11 // pred_fallthru
        _
      // Predicated region
      $region37: #{hgmoe_forward.1} parent=11 // pred_check
        %p438 = pneg %p196
      $region38: #{hgmoe_forward.1} parent=11 // pred_check_branch
        %440 = sbr.rel (%p438) target = $region40
      $region39: #{hgmoe_forward.1} parent=11 // pred_region
        _
      $region40: #{hgmoe_forward.1} parent=11 // pred_fallthru
        _
      // Predicated region
      $region41: #{hgmoe_forward.1} parent=11 // pred_check
        %p441 = pneg %p217
      $region42: #{hgmoe_forward.1} parent=11 // pred_check_branch
        %443 = sbr.rel (%p441) target = $region44
      $region43: #{hgmoe_forward.1} parent=11 // pred_region
        _
      $region44: #{hgmoe_forward.1} parent=11 // pred_fallthru
        _
      // Predicated region
      $region45: #{hgmoe_forward.1} parent=11 // pred_check
        %p444 = pneg %p238
      $region46: #{hgmoe_forward.1} parent=11 // pred_check_branch
        %446 = sbr.rel (%p444) target = $region48
      $region47: #{hgmoe_forward.1} parent=11 // pred_region
        _
      $region48: #{hgmoe_forward.1} parent=11 // pred_fallthru
        _
      // Predicated region
      $region49: #{hgmoe_forward.1} parent=11 // pred_check
        %p447 = pneg %p259
      $region50: #{hgmoe_forward.1} parent=11 // pred_check_branch
        %449 = sbr.rel (%p447) target = $region52
      $region51: #{hgmoe_forward.1} parent=11 // pred_region
        _
      $region52: #{hgmoe_forward.1} parent=11 // pred_fallthru
        _
      // Predicated region
      $region53: #{hgmoe_forward.1} parent=11 // pred_check
        %p450 = pneg %p280
      $region54: #{hgmoe_forward.1} parent=11 // pred_check_branch
        %452 = sbr.rel (%p450) target = $region56
      $region55: #{hgmoe_forward.1} parent=11 // pred_region
        _
      $region56: #{hgmoe_forward.1} parent=11 // pred_fallthru
        _
      // Predicated region
      $region57: #{hgmoe_forward.1} parent=11 // pred_check
        %p453 = pneg %p301
      $region58: #{hgmoe_forward.1} parent=11 // pred_check_branch
        %455 = sbr.rel (%p453) target = $region60
      $region59: #{hgmoe_forward.1} parent=11 // pred_region
        _
      $region60: #{hgmoe_forward.1} parent=11 // pred_fallthru
        _
    $region12: #{hgmoe_forward.1} parent=5 // pred_fallthru
      _
    %p456 = scmp.lt.s32.totalorder %s23, 2
    // Predicated region
    $region61: #{hgmoe_forward.1} parent=5 // pred_check
      %p457 = pneg %p456
    $region62: #{hgmoe_forward.1} parent=5 // pred_check_branch
      %459 = sbr.rel (%p457) target = $region64
    $region63: #{hgmoe_forward.1} parent=5 // pred_region
      // Predicated region
      $region65: #{hgmoe_forward.1} parent=63 // pred_check
        %p460 = pneg %p43
      $region66: #{hgmoe_forward.1} parent=63 // pred_check_branch
        %462 = sbr.rel (%p460) target = $region68
      $region67: #{hgmoe_forward.1} parent=63 // pred_region
        %s463 = smul.u32 13, %s23
        %p464 = scmp.lt.s32.totalorder %s463, 25
        %s465 = scalar_select %p464, %s463, 25
        %s466 = smul.addr %s465, 8
        %s467 = scalar_lea.vmem %s0, %s466
        %s468 = smul.u32 13, %s23
      $region68: #{hgmoe_forward.1} parent=63 // pred_fallthru
        _
    $region64: #{hgmoe_forward.1} parent=5 // pred_fallthru
      _
    %p469 = scmp.le.s32.totalorder 1, %s23
    %p470 = scmp.lt.s32.totalorder %s23, 3
    %p471 = pnand %p469, %p470
    %p472 = pneg %p471
    // Predicated region
    $region69: #{hgmoe_forward.1} parent=5 // pred_check
      _
    $region70: #{hgmoe_forward.1} parent=5 // pred_check_branch
      %474 = sbr.rel (%p471) target = $region72
    $region71: #{hgmoe_forward.1} parent=5 // pred_region
      %s475 = ssub.s32 %s23, 1
      %s476 = smul.u32 13, %s28
      %p477 = scmp.lt.s32.totalorder %s476, 25
      %s478 = scalar_select %p477, %s476, 25
      %s479 = smul.addr %s478, 8
      %s480 = scalar_lea.vmem %s0, %s479
      %p481 = pneg %p49
      %p482 = pneg %p46
      %p483 = pneg %p70
      %p484 = pneg %p67
      %p485 = pneg %p91
      %p486 = pneg %p88
      %p487 = pneg %p112
      %p488 = pneg %p109
      %p489 = pneg %p133
      %p490 = pneg %p130
      %p491 = pneg %p154
      %p492 = pneg %p151
      %p493 = pneg %p175
      %p494 = pneg %p172
      %p495 = pneg %p196
      %p496 = pneg %p193
      %p497 = pneg %p217
      %p498 = pneg %p214
      %p499 = pneg %p238
      %p500 = pneg %p235
      %p501 = pneg %p259
      %p502 = pneg %p256
      %p503 = pneg %p280
      %p504 = pneg %p277
      %p505 = pneg %p301
      %p506 = pneg %p298
      %p507 = pneg %p327
      %p508 = pneg %p324
      %s509 = smul.u32 13, %s28
      %p510 = scmp.lt.s32.totalorder %s509, 25
      %s511 = scalar_select %p510, %s509, 25
      %s512 = smul.addr %s511, 8
      %s513 = scalar_lea.vmem %s13, %s512
      %p514 = pneg %p353
      %p515 = pneg %p350
      %s516 = smul.u32 13, %s28
      %p517 = scmp.lt.s32.totalorder %s516, 25
      %s518 = scalar_select %p517, %s516, 25
      %s519 = smul.addr %s518, 8
      %s520 = scalar_lea.vmem %s14, %s519
      %p521 = pneg %p379
      %p522 = pneg %p376
      %s523 = smul.u32 13, %s28
      %p524 = scmp.lt.s32.totalorder %s523, 25
      %s525 = scalar_select %p524, %s523, 25
      %s526 = smul.addr %s525, 8
      %s527 = scalar_lea.vmem %s15, %s526
      %p528 = pneg %p405
      %p529 = pneg %p402
      %p530 = scmp.lt.s32.totalorder %s28, 1
      %s531 = scalar_select %p530, %s28, 1
      %s532 = smul.addr %s531, 4
      %s533 = scalar_lea.vmem %s16, %s532
      %s534 = smul.u32 13, %s28
      %p535 = scmp.lt.s32.totalorder %s534, 25
      %s536 = scalar_select %p535, %s534, 25
      %s537 = smul.addr %s536, 8
      %s538 = scalar_lea.vmem %s0, %s537
      %s539 = smul.u32 13, %s28
      %s540 = smul.u32 13, %s28
      %p541 = scmp.lt.s32.totalorder %s540, 25
      %s542 = scalar_select %p541, %s540, 25
      %s543 = smul.addr %s542, 8
      %s544 = scalar_lea.vmem %s13, %s543
      %s545 = smul.u32 13, %s28
      %s546 = smul.u32 13, %s28
      %p547 = scmp.lt.s32.totalorder %s546, 25
      %s548 = scalar_select %p547, %s546, 25
      %s549 = smul.addr %s548, 8
      %s550 = scalar_lea.vmem %s14, %s549
      %s551 = smul.u32 13, %s28
      %s552 = smul.u32 13, %s28
      %p553 = scmp.lt.s32.totalorder %s552, 25
      %s554 = scalar_select %p553, %s552, 25
      %s555 = smul.addr %s554, 8
      %s556 = scalar_lea.vmem %s15, %s555
      %s557 = smul.u32 13, %s28
      %p558 = scmp.lt.s32.totalorder %s28, 1
      %s559 = scalar_select %p558, %s28, 1
      %s560 = smul.addr %s559, 4
      %s561 = scalar_lea.vmem %s16, %s560
      %v562 = vld [vmem:[%s538] sm:$0xff]
      %v563 = vld [vmem:[%s538 + $0x8] sm:$0xff]
      %v564 = vld [vmem:[%s538 + $0x10] sm:$0xff]
      %v565 = vld [vmem:[%s538 + $0x18] sm:$0xff]
      %v566 = vld [vmem:[%s538 + $0x20] sm:$0xff]
      %v567 = vld [vmem:[%s538 + $0x28] sm:$0xff]
      %v568 = vld [vmem:[%s538 + $0x30] sm:$0xff]
      %v569 = vld [vmem:[%s538 + $0x38] sm:$0xff]
      %v570 = vld [vmem:[%s538 + $0x40] sm:$0xff]
      %v571 = vld [vmem:[%s538 + $0x48] sm:$0xff]
      %v572 = vld [vmem:[%s538 + $0x50] sm:$0xff]
      %v573 = vld [vmem:[%s538 + $0x58] sm:$0xff]
      %v574 = vld [vmem:[%s538 + $0x60] sm:$0xff]
      %v575 = vld [vmem:[%s1] sm:$0x1]
      %v576 = vld [vmem:[%s2] sm:$0x1]
      %v577 = vld [vmem:[%s3] sm:$0xff]
      %v578 = vld [vmem:[%s4] sm:$0xff]
      %v579 = vld [vmem:[%s5] sm:$0x1]
      %v580 = vld [vmem:[%s6] sm:$0xf]
      %v582 = vlaneseq
      %v583 = vshrl.u32 %v582, 7
      %v584 = vsub.s32 0, %v583
      %v585 = vrot.slane %v575, %v584
      %v587 = vmul.f32 %v562, %v585
      %v588 = vmul.f32 %v563, %v585
      %v589 = vmul.f32 %v564, %v585
      %v590 = vmul.f32 %v565, %v585
      %v591 = vmul.f32 %v566, %v585
      %v592 = vmul.f32 %v567, %v585
      %v593 = vmul.f32 %v568, %v585
      %v594 = vmul.f32 %v569, %v585
      %v595 = vmul.f32 %v570, %v585
      %v596 = vmul.f32 %v571, %v585
      %v597 = vmul.f32 %v572, %v585
      %v598 = vmul.f32 %v573, %v585
      %v599 = vmul.f32 %v574, %v585
      %v601 = vlaneseq
      %v602 = vshrl.u32 %v601, 7
      %v603 = vsub.s32 0, %v602
      %v604 = vrot.slane %v576, %v603
      %v606 = vadd.f32 %v587, %v604
      %v607 = vadd.f32 %v588, %v604
      %v608 = vadd.f32 %v589, %v604
      %v609 = vadd.f32 %v590, %v604
      %v610 = vadd.f32 %v591, %v604
      %v611 = vadd.f32 %v592, %v604
      %v612 = vadd.f32 %v593, %v604
      %v613 = vadd.f32 %v594, %v604
      %v614 = vadd.f32 %v595, %v604
      %v615 = vadd.f32 %v596, %v604
      %v616 = vadd.f32 %v597, %v604
      %v617 = vadd.f32 %v598, %v604
      %v618 = vadd.f32 %v599, %v604
      %vm619 = vcmask 64512
      %v621 = vsel %vm619, %v606, 0
      %v624 = vsel %vm619, %v607, 0
      %v627 = vsel %vm619, %v608, 0
      %v630 = vsel %vm619, %v609, 0
      %v633 = vsel %vm619, %v610, 0
      %v636 = vsel %vm619, %v611, 0
      %v639 = vsel %vm619, %v612, 0
      %v642 = vsel %vm619, %v613, 0
      %v645 = vsel %vm619, %v614, 0
      %v648 = vsel %vm619, %v615, 0
      %v651 = vsel %vm619, %v616, 0
      %v654 = vsel %vm619, %v617, 0
      %v657 = vsel %vm619, %v618, 0
      %659 = vmatprep.subr.mxu0 0.0
      %660 = vmatpush1.msra.mxu0 %v577
      %661 = vmatprep.subr.mxu0 0.0
      %662 = vmatpush1.msra.mxu0 0.0
      %663 = vmatprep.subr.mxu0 0.0
      %664 = vmatpush1.msra.mxu0 0.0
      %665 = vmatprep.subr.mxu0 0.0
      %666 = vmatpush1.msra.mxu0 0.0
      %667 = vmatprep.subr.mxu0 0.0
      %668 = vmatpush1.msra.mxu0 0.0
      %669 = vmatprep.subr.mxu0 0.0
      %670 = vmatpush1.msra.mxu0 0.0
      %671 = vmatprep.subr.mxu0 0.0
      %672 = vmatpush1.msra.mxu0 0.0
      %673 = vmatprep.subr.mxu0 0.0
      %674 = vmatpush1.msra.mxu0 0.0
      %675 = vmatprep.subr.mxu0 0.0
      %676 = vmatpush1.msra.mxu0 0.0
      %677 = vmatprep.subr.mxu0 0.0
      %678 = vmatpush1.msra.mxu0 0.0
      %679 = vmatprep.subr.mxu0 0.0
      %680 = vmatpush1.msra.mxu0 0.0
      %681 = vmatprep.subr.mxu0 0.0
      %682 = vmatpush1.msra.mxu0 0.0
      %683 = vmatprep.subr.mxu0 0.0
      %684 = vmatpush1.msra.mxu0 0.0
      %685 = vmatprep.subr.mxu0 0.0
      %686 = vmatpush1.msra.mxu0 0.0
      %687 = vmatprep.subr.mxu0 0.0
      %688 = vmatpush1.msra.mxu0 0.0
      %689 = vmatprep.subr.mxu0 0.0
      %690 = vmatpush1.msra.mxu0 0.0
      %691 = vmatprep.subr.mxu0 0.0
      %692 = vmatpush1.msra.mxu0 0.0
      %693 = vmatprep.subr.mxu0 0.0
      %694 = vmatpush1.msra.mxu0 0.0
      %695 = vmatprep.subr.mxu0 0.0
      %696 = vmatpush1.msra.mxu0 0.0
      %697 = vmatprep.subr.mxu0 0.0
      %698 = vmatpush1.msra.mxu0 0.0
      %699 = vmatprep.subr.mxu0 0.0
      %700 = vmatpush1.msra.mxu0 0.0
      %701 = vmatprep.subr.mxu0 0.0
      %702 = vmatpush1.msra.mxu0 0.0
      %703 = vmatprep.subr.mxu0 0.0
      %704 = vmatpush1.msra.mxu0 0.0
      %705 = vmatprep.subr.mxu0 0.0
      %706 = vmatpush1.msra.mxu0 0.0
      %707 = vmatprep.subr.mxu0 0.0
      %708 = vmatpush1.msra.mxu0 0.0
      %709 = vmatprep.subr.mxu0 0.0
      %710 = vmatpush1.msra.mxu0 0.0
      %711 = vmatprep.subr.mxu0 0.0
      %712 = vmatpush1.msra.mxu0 0.0
      %713 = vmatprep.subr.mxu0 0.0
      %714 = vmatpush1.msra.mxu0 0.0
      %715 = vmatprep.subr.mxu0 0.0
      %716 = vmatpush1.msra.mxu0 0.0
      %717 = vmatprep.subr.mxu0 0.0
      %718 = vmatpush1.msra.mxu0 0.0
      %719 = vmatprep.subr.mxu0 0.0
      %720 = vmatpush1.msra.mxu0 0.0
      %721 = vmatprep.subr.mxu0 0.0
      %722 = vmatpush1.msra.mxu0 0.0
      %723 = vmatprep.mubr.f32.mxu0 0.0
      %724 = vmatmul.mubr.f32.gmra.mrb[0].mxu0 %v621
      %v725 = vpop.f32.mrb[0].mxu0
      %v726 = vadd.f32 0.0, %v725
      %v727 = vpop.f32.mrb[0].mxu0
      %728 = vmatprep.mubr.f32.mxu0 0.0
      %729 = vmatmul.mubr.f32.gmra.mrb[0].mxu0 %v624
      %v730 = vpop.f32.mrb[0].mxu0
      %v731 = vadd.f32 0.0, %v730
      %v732 = vpop.f32.mrb[0].mxu0
      %733 = vmatprep.mubr.f32.mxu0 0.0
      %734 = vmatmul.mubr.f32.gmra.mrb[0].mxu0 %v627
      %v735 = vpop.f32.mrb[0].mxu0
      %v736 = vadd.f32 0.0, %v735
      %v737 = vpop.f32.mrb[0].mxu0
      %738 = vmatprep.mubr.f32.mxu0 0.0
      %739 = vmatmul.mubr.f32.gmra.mrb[0].mxu0 %v630
      %v740 = vpop.f32.mrb[0].mxu0
      %v741 = vadd.f32 0.0, %v740
      %v742 = vpop.f32.mrb[0].mxu0
      %743 = vmatprep.mubr.f32.mxu0 0.0
      %744 = vmatmul.mubr.f32.gmra.mrb[0].mxu0 %v633
      %v745 = vpop.f32.mrb[0].mxu0
      %v746 = vadd.f32 0.0, %v745
      %v747 = vpop.f32.mrb[0].mxu0
      %748 = vmatprep.mubr.f32.mxu0 0.0
      %749 = vmatmul.mubr.f32.gmra.mrb[0].mxu0 %v636
      %v750 = vpop.f32.mrb[0].mxu0
      %v751 = vadd.f32 0.0, %v750
      %v752 = vpop.f32.mrb[0].mxu0
      %753 = vmatprep.mubr.f32.mxu0 0.0
      %754 = vmatmul.mubr.f32.gmra.mrb[0].mxu0 %v639
      %v755 = vpop.f32.mrb[0].mxu0
      %v756 = vadd.f32 0.0, %v755
      %v757 = vpop.f32.mrb[0].mxu0
      %758 = vmatprep.mubr.f32.mxu0 0.0
      %759 = vmatmul.mubr.f32.gmra.mrb[0].mxu0 %v642
      %v760 = vpop.f32.mrb[0].mxu0
      %v761 = vadd.f32 0.0, %v760
      %v762 = vpop.f32.mrb[0].mxu0
      %763 = vmatprep.mubr.f32.mxu0 0.0
      %764 = vmatmul.mubr.f32.gmra.mrb[0].mxu0 %v645
      %v765 = vpop.f32.mrb[0].mxu0
      %v766 = vadd.f32 0.0, %v765
      %v767 = vpop.f32.mrb[0].mxu0
      %768 = vmatprep.mubr.f32.mxu0 0.0
      %769 = vmatmul.mubr.f32.gmra.mrb[0].mxu0 %v648
      %v770 = vpop.f32.mrb[0].mxu0
      %v771 = vadd.f32 0.0, %v770
      %v772 = vpop.f32.mrb[0].mxu0
      %773 = vmatprep.mubr.f32.mxu0 0.0
      %774 = vmatmul.mubr.f32.gmra.mrb[0].mxu0 %v651
      %v775 = vpop.f32.mrb[0].mxu0
      %v776 = vadd.f32 0.0, %v775
      %v777 = vpop.f32.mrb[0].mxu0
      %778 = vmatprep.mubr.f32.mxu0 0.0
      %779 = vmatmul.mubr.f32.gmra.mrb[0].mxu0 %v654
      %v780 = vpop.f32.mrb[0].mxu0
      %v781 = vadd.f32 0.0, %v780
      %v782 = vpop.f32.mrb[0].mxu0
      %783 = vmatprep.mubr.f32.mxu0 0.0
      %784 = vmatmul.mubr.f32.gmra.mrb[0].mxu0 %v657
      %v785 = vpop.f32.mrb[0].mxu0
      %v786 = vadd.f32 0.0, %v785
      %v787 = vpop.f32.mrb[0].mxu0
      %788 = vdwg.mxu0
      %v789 = vlaneseq
      %v790 = vand.u32 %v789, 127
      %vm791 = vcmask 31744
      %v792 = vsel %vm791, %v726, -inf
      %793 = vmax.xlane.f32.xlu0 %v792
      %v794 = vpop.xlane.xlu0 %793
      %v795 = vsel %vm791, %v731, -inf
      %796 = vmax.xlane.f32.xlu0 %v795
      %v797 = vpop.xlane.xlu0 %796
      %v798 = vsel %vm791, %v736, -inf
      %799 = vmax.xlane.f32.xlu0 %v798
      %v800 = vpop.xlane.xlu0 %799
      %v801 = vsel %vm791, %v741, -inf
      %802 = vmax.xlane.f32.xlu0 %v801
      %v803 = vpop.xlane.xlu0 %802
      %v804 = vsel %vm791, %v746, -inf
      %805 = vmax.xlane.f32.xlu0 %v804
      %v806 = vpop.xlane.xlu0 %805
      %v807 = vsel %vm791, %v751, -inf
      %808 = vmax.xlane.f32.xlu0 %v807
      %v809 = vpop.xlane.xlu0 %808
      %v810 = vsel %vm791, %v756, -inf
      %811 = vmax.xlane.f32.xlu0 %v810
      %v812 = vpop.xlane.xlu0 %811
      %v813 = vsel %vm791, %v761, -inf
      %814 = vmax.xlane.f32.xlu0 %v813
      %v815 = vpop.xlane.xlu0 %814
      %v816 = vsel %vm791, %v766, -inf
      %817 = vmax.xlane.f32.xlu0 %v816
      %v818 = vpop.xlane.xlu0 %817
      %v819 = vsel %vm791, %v771, -inf
      %820 = vmax.xlane.f32.xlu0 %v819
      %v821 = vpop.xlane.xlu0 %820
      %v822 = vsel %vm791, %v776, -inf
      %823 = vmax.xlane.f32.xlu0 %v822
      %v824 = vpop.xlane.xlu0 %823
      %v825 = vsel %vm791, %v781, -inf
      %826 = vmax.xlane.f32.xlu0 %v825
      %v827 = vpop.xlane.xlu0 %826
      %v828 = vsel %vm791, %v786, -inf
      %829 = vmax.xlane.f32.xlu0 %v828
      %v830 = vpop.xlane.xlu0 %829
      %vm831 = vcmp.eq.f32.partialorder %v726, %v794
      %vm832 = vcmp.eq.f32.partialorder %v731, %v797
      %vm833 = vcmp.eq.f32.partialorder %v736, %v800
      %vm834 = vcmp.eq.f32.partialorder %v741, %v803
      %vm835 = vcmp.eq.f32.partialorder %v746, %v806
      %vm836 = vcmp.eq.f32.partialorder %v751, %v809
      %vm837 = vcmp.eq.f32.partialorder %v756, %v812
      %vm838 = vcmp.eq.f32.partialorder %v761, %v815
      %vm839 = vcmp.eq.f32.partialorder %v766, %v818
      %vm840 = vcmp.eq.f32.partialorder %v771, %v821
      %vm841 = vcmp.eq.f32.partialorder %v776, %v824
      %vm842 = vcmp.eq.f32.partialorder %v781, %v827
      %vm843 = vcmp.eq.f32.partialorder %v786, %v830
      %v844 = vsel %vm831, %v790, 4
      %v845 = vsel %vm832, %v790, 4
      %v846 = vsel %vm833, %v790, 4
      %v847 = vsel %vm834, %v790, 4
      %v848 = vsel %vm835, %v790, 4
      %v849 = vsel %vm836, %v790, 4
      %v850 = vsel %vm837, %v790, 4
      %v851 = vsel %vm838, %v790, 4
      %v852 = vsel %vm839, %v790, 4
      %v853 = vsel %vm840, %v790, 4
      %v854 = vsel %vm841, %v790, 4
      %v855 = vsel %vm842, %v790, 4
      %v856 = vsel %vm843, %v790, 4
      %v857 = vsel %vm791, %v844, 2147483647
      %v858 = vand.u32 %v857, 65535
      %v859 = vshra.s32 %v857, 16
      %v860 = vcvt.s32.f32 %v858
      %v861 = vcvt.s32.f32 %v859
      %862 = vmin.xlane.f32.xlu0 %v861
      %v863 = vpop.xlane.xlu0 %862
      %vm864 = vcmp.eq.f32.partialorder %v861, %v863
      %v865 = vsel %vm864, %v860, inf
      %866 = vmin.xlane.f32.xlu0 %v865
      %v867 = vpop.xlane.xlu0 %866
      %v868 = vcvt.f32.s32 %v867
      %v869 = vcvt.f32.s32 %v863
      %v870 = vshll.u32 %v869, 16
      %v871 = vadd.s32 %v870, %v868
      %v872 = vsel %vm791, %v845, 2147483647
      %v873 = vand.u32 %v872, 65535
      %v874 = vshra.s32 %v872, 16
      %v875 = vcvt.s32.f32 %v873
      %v876 = vcvt.s32.f32 %v874
      %877 = vmin.xlane.f32.xlu0 %v876
      %v878 = vpop.xlane.xlu0 %877
      %vm879 = vcmp.eq.f32.partialorder %v876, %v878
      %v880 = vsel %vm879, %v875, inf
      %881 = vmin.xlane.f32.xlu0 %v880
      %v882 = vpop.xlane.xlu0 %881
      %v883 = vcvt.f32.s32 %v882
      %v884 = vcvt.f32.s32 %v878
      %v885 = vshll.u32 %v884, 16
      %v886 = vadd.s32 %v885, %v883
      %v887 = vsel %vm791, %v846, 2147483647
      %v888 = vand.u32 %v887, 65535
      %v889 = vshra.s32 %v887, 16
      %v890 = vcvt.s32.f32 %v888
      %v891 = vcvt.s32.f32 %v889
      %892 = vmin.xlane.f32.xlu0 %v891
      %v893 = vpop.xlane.xlu0 %892
      %vm894 = vcmp.eq.f32.partialorder %v891, %v893
      %v895 = vsel %vm894, %v890, inf
      %896 = vmin.xlane.f32.xlu0 %v895
      %v897 = vpop.xlane.xlu0 %896
      %v898 = vcvt.f32.s32 %v897
      %v899 = vcvt.f32.s32 %v893
      %v900 = vshll.u32 %v899, 16
      %v901 = vadd.s32 %v900, %v898
      %v902 = vsel %vm791, %v847, 2147483647
      %v903 = vand.u32 %v902, 65535
      %v904 = vshra.s32 %v902, 16
      %v905 = vcvt.s32.f32 %v903
      %v906 = vcvt.s32.f32 %v904
      %907 = vmin.xlane.f32.xlu0 %v906
      %v908 = vpop.xlane.xlu0 %907
      %vm909 = vcmp.eq.f32.partialorder %v906, %v908
      %v910 = vsel %vm909, %v905, inf
      %911 = vmin.xlane.f32.xlu0 %v910
      %v912 = vpop.xlane.xlu0 %911
      %v913 = vcvt.f32.s32 %v912
      %v914 = vcvt.f32.s32 %v908
      %v915 = vshll.u32 %v914, 16
      %v916 = vadd.s32 %v915, %v913
      %v917 = vsel %vm791, %v848, 2147483647
      %v918 = vand.u32 %v917, 65535
      %v919 = vshra.s32 %v917, 16
      %v920 = vcvt.s32.f32 %v918
      %v921 = vcvt.s32.f32 %v919
      %922 = vmin.xlane.f32.xlu0 %v921
      %v923 = vpop.xlane.xlu0 %922
      %vm924 = vcmp.eq.f32.partialorder %v921, %v923
      %v925 = vsel %vm924, %v920, inf
      %926 = vmin.xlane.f32.xlu0 %v925
      %v927 = vpop.xlane.xlu0 %926
      %v928 = vcvt.f32.s32 %v927
      %v929 = vcvt.f32.s32 %v923
      %v930 = vshll.u32 %v929, 16
      %v931 = vadd.s32 %v930, %v928
      %v932 = vsel %vm791, %v849, 2147483647
      %v933 = vand.u32 %v932, 65535
      %v934 = vshra.s32 %v932, 16
      %v935 = vcvt.s32.f32 %v933
      %v936 = vcvt.s32.f32 %v934
      %937 = vmin.xlane.f32.xlu0 %v936
      %v938 = vpop.xlane.xlu0 %937
      %vm939 = vcmp.eq.f32.partialorder %v936, %v938
      %v940 = vsel %vm939, %v935, inf
      %941 = vmin.xlane.f32.xlu0 %v940
      %v942 = vpop.xlane.xlu0 %941
      %v943 = vcvt.f32.s32 %v942
      %v944 = vcvt.f32.s32 %v938
      %v945 = vshll.u32 %v944, 16
      %v946 = vadd.s32 %v945, %v943
      %v947 = vsel %vm791, %v850, 2147483647
      %v948 = vand.u32 %v947, 65535
      %v949 = vshra.s32 %v947, 16
      %v950 = vcvt.s32.f32 %v948
      %v951 = vcvt.s32.f32 %v949
      %952 = vmin.xlane.f32.xlu0 %v951
      %v953 = vpop.xlane.xlu0 %952
      %vm954 = vcmp.eq.f32.partialorder %v951, %v953
      %v955 = vsel %vm954, %v950, inf
      %956 = vmin.xlane.f32.xlu0 %v955
      %v957 = vpop.xlane.xlu0 %956
      %v958 = vcvt.f32.s32 %v957
      %v959 = vcvt.f32.s32 %v953
      %v960 = vshll.u32 %v959, 16
      %v961 = vadd.s32 %v960, %v958
      %v962 = vsel %vm791, %v851, 2147483647
      %v963 = vand.u32 %v962, 65535
      %v964 = vshra.s32 %v962, 16
      %v965 = vcvt.s32.f32 %v963
      %v966 = vcvt.s32.f32 %v964
      %967 = vmin.xlane.f32.xlu0 %v966
      %v968 = vpop.xlane.xlu0 %967
      %vm969 = vcmp.eq.f32.partialorder %v966, %v968
      %v970 = vsel %vm969, %v965, inf
      %971 = vmin.xlane.f32.xlu0 %v970
      %v972 = vpop.xlane.xlu0 %971
      %v973 = vcvt.f32.s32 %v972
      %v974 = vcvt.f32.s32 %v968
      %v975 = vshll.u32 %v974, 16
      %v976 = vadd.s32 %v975, %v973
      %v977 = vsel %vm791, %v852, 2147483647
      %v978 = vand.u32 %v977, 65535
      %v979 = vshra.s32 %v977, 16
      %v980 = vcvt.s32.f32 %v978
      %v981 = vcvt.s32.f32 %v979
      %982 = vmin.xlane.f32.xlu0 %v981
      %v983 = vpop.xlane.xlu0 %982
      %vm984 = vcmp.eq.f32.partialorder %v981, %v983
      %v985 = vsel %vm984, %v980, inf
      %986 = vmin.xlane.f32.xlu0 %v985
      %v987 = vpop.xlane.xlu0 %986
      %v988 = vcvt.f32.s32 %v987
      %v989 = vcvt.f32.s32 %v983
      %v990 = vshll.u32 %v989, 16
      %v991 = vadd.s32 %v990, %v988
      %v992 = vsel %vm791, %v853, 2147483647
      %v993 = vand.u32 %v992, 65535
      %v994 = vshra.s32 %v992, 16
      %v995 = vcvt.s32.f32 %v993
      %v996 = vcvt.s32.f32 %v994
      %997 = vmin.xlane.f32.xlu0 %v996
      %v998 = vpop.xlane.xlu0 %997
      %vm999 = vcmp.eq.f32.partialorder %v996, %v998
      %v1000 = vsel %vm999, %v995, inf
      %1001 = vmin.xlane.f32.xlu0 %v1000
      %v1002 = vpop.xlane.xlu0 %1001
      %v1003 = vcvt.f32.s32 %v1002
      %v1004 = vcvt.f32.s32 %v998
      %v1005 = vshll.u32 %v1004, 16
      %v1006 = vadd.s32 %v1005, %v1003
      %v1007 = vsel %vm791, %v854, 2147483647
      %v1008 = vand.u32 %v1007, 65535
      %v1009 = vshra.s32 %v1007, 16
      %v1010 = vcvt.s32.f32 %v1008
      %v1011 = vcvt.s32.f32 %v1009
      %1012 = vmin.xlane.f32.xlu0 %v1011
      %v1013 = vpop.xlane.xlu0 %1012
      %vm1014 = vcmp.eq.f32.partialorder %v1011, %v1013
      %v1015 = vsel %vm1014, %v1010, inf
      %1016 = vmin.xlane.f32.xlu0 %v1015
      %v1017 = vpop.xlane.xlu0 %1016
      %v1018 = vcvt.f32.s32 %v1017
      %v1019 = vcvt.f32.s32 %v1013
      %v1020 = vshll.u32 %v1019, 16
      %v1021 = vadd.s32 %v1020, %v1018
      %v1022 = vsel %vm791, %v855, 2147483647
      %v1023 = vand.u32 %v1022, 65535
      %v1024 = vshra.s32 %v1022, 16
      %v1025 = vcvt.s32.f32 %v1023
      %v1026 = vcvt.s32.f32 %v1024
      %1027 = vmin.xlane.f32.xlu0 %v1026
      %v1028 = vpop.xlane.xlu0 %1027
      %vm1029 = vcmp.eq.f32.partialorder %v1026, %v1028
      %v1030 = vsel %vm1029, %v1025, inf
      %1031 = vmin.xlane.f32.xlu0 %v1030
      %v1032 = vpop.xlane.xlu0 %1031
      %v1033 = vcvt.f32.s32 %v1032
      %v1034 = vcvt.f32.s32 %v1028
      %v1035 = vshll.u32 %v1034, 16
      %v1036 = vadd.s32 %v1035, %v1033
      %v1037 = vsel %vm791, %v856, 2147483647
      %v1038 = vand.u32 %v1037, 65535
      %v1039 = vshra.s32 %v1037, 16
      %v1040 = vcvt.s32.f32 %v1038
      %v1041 = vcvt.s32.f32 %v1039
      %1042 = vmin.xlane.f32.xlu0 %v1041
      %v1043 = vpop.xlane.xlu0 %1042
      %vm1044 = vcmp.eq.f32.partialorder %v1041, %v1043
      %v1045 = vsel %vm1044, %v1040, inf
      %1046 = vmin.xlane.f32.xlu0 %v1045
      %v1047 = vpop.xlane.xlu0 %1046
      %v1048 = vcvt.f32.s32 %v1047
      %v1049 = vcvt.f32.s32 %v1043
      %v1050 = vshll.u32 %v1049, 16
      %v1051 = vadd.s32 %v1050, %v1048
      %vm1052 = vcmp.eq.s32.totalorder %v790, %v871
      %vm1053 = vcmp.eq.s32.totalorder %v790, %v886
      %vm1054 = vcmp.eq.s32.totalorder %v790, %v901
      %vm1055 = vcmp.eq.s32.totalorder %v790, %v916
      %vm1056 = vcmp.eq.s32.totalorder %v790, %v931
      %vm1057 = vcmp.eq.s32.totalorder %v790, %v946
      %vm1058 = vcmp.eq.s32.totalorder %v790, %v961
      %vm1059 = vcmp.eq.s32.totalorder %v790, %v976
      %vm1060 = vcmp.eq.s32.totalorder %v790, %v991
      %vm1061 = vcmp.eq.s32.totalorder %v790, %v1006
      %vm1062 = vcmp.eq.s32.totalorder %v790, %v1021
      %vm1063 = vcmp.eq.s32.totalorder %v790, %v1036
      %vm1064 = vcmp.eq.s32.totalorder %v790, %v1051
      %v1065 = vsel %vm1052, -inf, %v726
      %v1066 = vsel %vm1053, -inf, %v731
      %v1067 = vsel %vm1054, -inf, %v736
      %v1068 = vsel %vm1055, -inf, %v741
      %v1069 = vsel %vm1056, -inf, %v746
      %v1070 = vsel %vm1057, -inf, %v751
      %v1071 = vsel %vm1058, -inf, %v756
      %v1072 = vsel %vm1059, -inf, %v761
      %v1073 = vsel %vm1060, -inf, %v766
      %v1074 = vsel %vm1061, -inf, %v771
      %v1075 = vsel %vm1062, -inf, %v776
      %v1076 = vsel %vm1063, -inf, %v781
      %v1077 = vsel %vm1064, -inf, %v786
      %v1078 = vsel %vm791, %v1065, -inf
      %1079 = vmax.xlane.f32.xlu0 %v1078
      %v1080 = vpop.xlane.xlu0 %1079
      %v1081 = vsel %vm791, %v1066, -inf
      %1082 = vmax.xlane.f32.xlu0 %v1081
      %v1083 = vpop.xlane.xlu0 %1082
      %v1084 = vsel %vm791, %v1067, -inf
      %1085 = vmax.xlane.f32.xlu0 %v1084
      %v1086 = vpop.xlane.xlu0 %1085
      %v1087 = vsel %vm791, %v1068, -inf
      %1088 = vmax.xlane.f32.xlu0 %v1087
      %v1089 = vpop.xlane.xlu0 %1088
      %v1090 = vsel %vm791, %v1069, -inf
      %1091 = vmax.xlane.f32.xlu0 %v1090
      %v1092 = vpop.xlane.xlu0 %1091
      %v1093 = vsel %vm791, %v1070, -inf
      %1094 = vmax.xlane.f32.xlu0 %v1093
      %v1095 = vpop.xlane.xlu0 %1094
      %v1096 = vsel %vm791, %v1071, -inf
      %1097 = vmax.xlane.f32.xlu0 %v1096
      %v1098 = vpop.xlane.xlu0 %1097
      %v1099 = vsel %vm791, %v1072, -inf
      %1100 = vmax.xlane.f32.xlu0 %v1099
      %v1101 = vpop.xlane.xlu0 %1100
      %v1102 = vsel %vm791, %v1073, -inf
      %1103 = vmax.xlane.f32.xlu0 %v1102
      %v1104 = vpop.xlane.xlu0 %1103
      %v1105 = vsel %vm791, %v1074, -inf
      %1106 = vmax.xlane.f32.xlu0 %v1105
      %v1107 = vpop.xlane.xlu0 %1106
      %v1108 = vsel %vm791, %v1075, -inf
      %1109 = vmax.xlane.f32.xlu0 %v1108
      %v1110 = vpop.xlane.xlu0 %1109
      %v1111 = vsel %vm791, %v1076, -inf
      %1112 = vmax.xlane.f32.xlu0 %v1111
      %v1113 = vpop.xlane.xlu0 %1112
      %v1114 = vsel %vm791, %v1077, -inf
      %1115 = vmax.xlane.f32.xlu0 %v1114
      %v1116 = vpop.xlane.xlu0 %1115
      %vm1117 = vcmp.eq.f32.partialorder %v1065, %v1080
      %vm1118 = vcmp.eq.f32.partialorder %v1066, %v1083
      %vm1119 = vcmp.eq.f32.partialorder %v1067, %v1086
      %vm1120 = vcmp.eq.f32.partialorder %v1068, %v1089
      %vm1121 = vcmp.eq.f32.partialorder %v1069, %v1092
      %vm1122 = vcmp.eq.f32.partialorder %v1070, %v1095
      %vm1123 = vcmp.eq.f32.partialorder %v1071, %v1098
      %vm1124 = vcmp.eq.f32.partialorder %v1072, %v1101
      %vm1125 = vcmp.eq.f32.partialorder %v1073, %v1104
      %vm1126 = vcmp.eq.f32.partialorder %v1074, %v1107
      %vm1127 = vcmp.eq.f32.partialorder %v1075, %v1110
      %vm1128 = vcmp.eq.f32.partialorder %v1076, %v1113
      %vm1129 = vcmp.eq.f32.partialorder %v1077, %v1116
      %v1130 = vsel %vm1117, %v790, 4
      %v1131 = vsel %vm1118, %v790, 4
      %v1132 = vsel %vm1119, %v790, 4
      %v1133 = vsel %vm1120, %v790, 4
      %v1134 = vsel %vm1121, %v790, 4
      %v1135 = vsel %vm1122, %v790, 4
      %v1136 = vsel %vm1123, %v790, 4
      %v1137 = vsel %vm1124, %v790, 4
      %v1138 = vsel %vm1125, %v790, 4
      %v1139 = vsel %vm1126, %v790, 4
      %v1140 = vsel %vm1127, %v790, 4
      %v1141 = vsel %vm1128, %v790, 4
      %v1142 = vsel %vm1129, %v790, 4
      %v1143 = vsel %vm791, %v1130, 2147483647
      %v1144 = vand.u32 %v1143, 65535
      %v1145 = vshra.s32 %v1143, 16
      %v1146 = vcvt.s32.f32 %v1144
      %v1147 = vcvt.s32.f32 %v1145
      %1148 = vmin.xlane.f32.xlu0 %v1147
      %v1149 = vpop.xlane.xlu0 %1148
      %vm1150 = vcmp.eq.f32.partialorder %v1147, %v1149
      %v1151 = vsel %vm1150, %v1146, inf
      %1152 = vmin.xlane.f32.xlu0 %v1151
      %v1153 = vpop.xlane.xlu0 %1152
      %v1154 = vcvt.f32.s32 %v1153
      %v1155 = vcvt.f32.s32 %v1149
      %v1156 = vshll.u32 %v1155, 16
      %v1157 = vadd.s32 %v1156, %v1154
      %v1158 = vsel %vm791, %v1131, 2147483647
      %v1159 = vand.u32 %v1158, 65535
      %v1160 = vshra.s32 %v1158, 16
      %v1161 = vcvt.s32.f32 %v1159
      %v1162 = vcvt.s32.f32 %v1160
      %1163 = vmin.xlane.f32.xlu0 %v1162
      %v1164 = vpop.xlane.xlu0 %1163
      %vm1165 = vcmp.eq.f32.partialorder %v1162, %v1164
      %v1166 = vsel %vm1165, %v1161, inf
      %1167 = vmin.xlane.f32.xlu0 %v1166
      %v1168 = vpop.xlane.xlu0 %1167
      %v1169 = vcvt.f32.s32 %v1168
      %v1170 = vcvt.f32.s32 %v1164
      %v1171 = vshll.u32 %v1170, 16
      %v1172 = vadd.s32 %v1171, %v1169
      %v1173 = vsel %vm791, %v1132, 2147483647
      %v1174 = vand.u32 %v1173, 65535
      %v1175 = vshra.s32 %v1173, 16
      %v1176 = vcvt.s32.f32 %v1174
      %v1177 = vcvt.s32.f32 %v1175
      %1178 = vmin.xlane.f32.xlu0 %v1177
      %v1179 = vpop.xlane.xlu0 %1178
      %vm1180 = vcmp.eq.f32.partialorder %v1177, %v1179
      %v1181 = vsel %vm1180, %v1176, inf
      %1182 = vmin.xlane.f32.xlu0 %v1181
      %v1183 = vpop.xlane.xlu0 %1182
      %v1184 = vcvt.f32.s32 %v1183
      %v1185 = vcvt.f32.s32 %v1179
      %v1186 = vshll.u32 %v1185, 16
      %v1187 = vadd.s32 %v1186, %v1184
      %v1188 = vsel %vm791, %v1133, 2147483647
      %v1189 = vand.u32 %v1188, 65535
      %v1190 = vshra.s32 %v1188, 16
      %v1191 = vcvt.s32.f32 %v1189
      %v1192 = vcvt.s32.f32 %v1190
      %1193 = vmin.xlane.f32.xlu0 %v1192
      %v1194 = vpop.xlane.xlu0 %1193
      %vm1195 = vcmp.eq.f32.partialorder %v1192, %v1194
      %v1196 = vsel %vm1195, %v1191, inf
      %1197 = vmin.xlane.f32.xlu0 %v1196
      %v1198 = vpop.xlane.xlu0 %1197
      %v1199 = vcvt.f32.s32 %v1198
      %v1200 = vcvt.f32.s32 %v1194
      %v1201 = vshll.u32 %v1200, 16
      %v1202 = vadd.s32 %v1201, %v1199
      %v1203 = vsel %vm791, %v1134, 2147483647
      %v1204 = vand.u32 %v1203, 65535
      %v1205 = vshra.s32 %v1203, 16
      %v1206 = vcvt.s32.f32 %v1204
      %v1207 = vcvt.s32.f32 %v1205
      %1208 = vmin.xlane.f32.xlu0 %v1207
      %v1209 = vpop.xlane.xlu0 %1208
      %vm1210 = vcmp.eq.f32.partialorder %v1207, %v1209
      %v1211 = vsel %vm1210, %v1206, inf
      %1212 = vmin.xlane.f32.xlu0 %v1211
      %v1213 = vpop.xlane.xlu0 %1212
      %v1214 = vcvt.f32.s32 %v1213
      %v1215 = vcvt.f32.s32 %v1209
      %v1216 = vshll.u32 %v1215, 16
      %v1217 = vadd.s32 %v1216, %v1214
      %v1218 = vsel %vm791, %v1135, 2147483647
      %v1219 = vand.u32 %v1218, 65535
      %v1220 = vshra.s32 %v1218, 16
      %v1221 = vcvt.s32.f32 %v1219
      %v1222 = vcvt.s32.f32 %v1220
      %1223 = vmin.xlane.f32.xlu0 %v1222
      %v1224 = vpop.xlane.xlu0 %1223
      %vm1225 = vcmp.eq.f32.partialorder %v1222, %v1224
      %v1226 = vsel %vm1225, %v1221, inf
      %1227 = vmin.xlane.f32.xlu0 %v1226
      %v1228 = vpop.xlane.xlu0 %1227
      %v1229 = vcvt.f32.s32 %v1228
      %v1230 = vcvt.f32.s32 %v1224
      %v1231 = vshll.u32 %v1230, 16
      %v1232 = vadd.s32 %v1231, %v1229
      %v1233 = vsel %vm791, %v1136, 2147483647
      %v1234 = vand.u32 %v1233, 65535
      %v1235 = vshra.s32 %v1233, 16
      %v1236 = vcvt.s32.f32 %v1234
      %v1237 = vcvt.s32.f32 %v1235
      %1238 = vmin.xlane.f32.xlu0 %v1237
      %v1239 = vpop.xlane.xlu0 %1238
      %vm1240 = vcmp.eq.f32.partialorder %v1237, %v1239
      %v1241 = vsel %vm1240, %v1236, inf
      %1242 = vmin.xlane.f32.xlu0 %v1241
      %v1243 = vpop.xlane.xlu0 %1242
      %v1244 = vcvt.f32.s32 %v1243
      %v1245 = vcvt.f32.s32 %v1239
      %v1246 = vshll.u32 %v1245, 16
      %v1247 = vadd.s32 %v1246, %v1244
      %v1248 = vsel %vm791, %v1137, 2147483647
      %v1249 = vand.u32 %v1248, 65535
      %v1250 = vshra.s32 %v1248, 16
      %v1251 = vcvt.s32.f32 %v1249
      %v1252 = vcvt.s32.f32 %v1250
      %1253 = vmin.xlane.f32.xlu0 %v1252
      %v1254 = vpop.xlane.xlu0 %1253
      %vm1255 = vcmp.eq.f32.partialorder %v1252, %v1254
      %v1256 = vsel %vm1255, %v1251, inf
      %1257 = vmin.xlane.f32.xlu0 %v1256
      %v1258 = vpop.xlane.xlu0 %1257
      %v1259 = vcvt.f32.s32 %v1258
      %v1260 = vcvt.f32.s32 %v1254
      %v1261 = vshll.u32 %v1260, 16
      %v1262 = vadd.s32 %v1261, %v1259
      %v1263 = vsel %vm791, %v1138, 2147483647
      %v1264 = vand.u32 %v1263, 65535
      %v1265 = vshra.s32 %v1263, 16
      %v1266 = vcvt.s32.f32 %v1264
      %v1267 = vcvt.s32.f32 %v1265
      %1268 = vmin.xlane.f32.xlu0 %v1267
      %v1269 = vpop.xlane.xlu0 %1268
      %vm1270 = vcmp.eq.f32.partialorder %v1267, %v1269
      %v1271 = vsel %vm1270, %v1266, inf
      %1272 = vmin.xlane.f32.xlu0 %v1271
      %v1273 = vpop.xlane.xlu0 %1272
      %v1274 = vcvt.f32.s32 %v1273
      %v1275 = vcvt.f32.s32 %v1269
      %v1276 = vshll.u32 %v1275, 16
      %v1277 = vadd.s32 %v1276, %v1274
      %v1278 = vsel %vm791, %v1139, 2147483647
      %v1279 = vand.u32 %v1278, 65535
      %v1280 = vshra.s32 %v1278, 16
      %v1281 = vcvt.s32.f32 %v1279
      %v1282 = vcvt.s32.f32 %v1280
      %1283 = vmin.xlane.f32.xlu0 %v1282
      %v1284 = vpop.xlane.xlu0 %1283
      %vm1285 = vcmp.eq.f32.partialorder %v1282, %v1284
      %v1286 = vsel %vm1285, %v1281, inf
      %1287 = vmin.xlane.f32.xlu0 %v1286
      %v1288 = vpop.xlane.xlu0 %1287
      %v1289 = vcvt.f32.s32 %v1288
      %v1290 = vcvt.f32.s32 %v1284
      %v1291 = vshll.u32 %v1290, 16
      %v1292 = vadd.s32 %v1291, %v1289
      %v1293 = vsel %vm791, %v1140, 2147483647
      %v1294 = vand.u32 %v1293, 65535
      %v1295 = vshra.s32 %v1293, 16
      %v1296 = vcvt.s32.f32 %v1294
      %v1297 = vcvt.s32.f32 %v1295
      %1298 = vmin.xlane.f32.xlu0 %v1297
      %v1299 = vpop.xlane.xlu0 %1298
      %vm1300 = vcmp.eq.f32.partialorder %v1297, %v1299
      %v1301 = vsel %vm1300, %v1296, inf
      %1302 = vmin.xlane.f32.xlu0 %v1301
      %v1303 = vpop.xlane.xlu0 %1302
      %v1304 = vcvt.f32.s32 %v1303
      %v1305 = vcvt.f32.s32 %v1299
      %v1306 = vshll.u32 %v1305, 16
      %v1307 = vadd.s32 %v1306, %v1304
      %v1308 = vsel %vm791, %v1141, 2147483647
      %v1309 = vand.u32 %v1308, 65535
      %v1310 = vshra.s32 %v1308, 16
      %v1311 = vcvt.s32.f32 %v1309
      %v1312 = vcvt.s32.f32 %v1310
      %1313 = vmin.xlane.f32.xlu0 %v1312
      %v1314 = vpop.xlane.xlu0 %1313
      %vm1315 = vcmp.eq.f32.partialorder %v1312, %v1314
      %v1316 = vsel %vm1315, %v1311, inf
      %1317 = vmin.xlane.f32.xlu0 %v1316
      %v1318 = vpop.xlane.xlu0 %1317
      %v1319 = vcvt.f32.s32 %v1318
      %v1320 = vcvt.f32.s32 %v1314
      %v1321 = vshll.u32 %v1320, 16
      %v1322 = vadd.s32 %v1321, %v1319
      %v1323 = vsel %vm791, %v1142, 2147483647
      %v1324 = vand.u32 %v1323, 65535
      %v1325 = vshra.s32 %v1323, 16
      %v1326 = vcvt.s32.f32 %v1324
      %v1327 = vcvt.s32.f32 %v1325
      %1328 = vmin.xlane.f32.xlu0 %v1327
      %v1329 = vpop.xlane.xlu0 %1328
      %vm1330 = vcmp.eq.f32.partialorder %v1327, %v1329
      %v1331 = vsel %vm1330, %v1326, inf
      %1332 = vmin.xlane.f32.xlu0 %v1331
      %v1333 = vpop.xlane.xlu0 %1332
      %v1334 = vcvt.f32.s32 %v1333
      %v1335 = vcvt.f32.s32 %v1329
      %v1336 = vshll.u32 %v1335, 16
      %v1337 = vadd.s32 %v1336, %v1334
      %v1338 = vsub.f32 %v794, %v794
      %v1339 = vsub.f32 %v797, %v797
      %v1340 = vsub.f32 %v800, %v800
      %v1341 = vsub.f32 %v803, %v803
      %v1342 = vsub.f32 %v806, %v806
      %v1343 = vsub.f32 %v809, %v809
      %v1344 = vsub.f32 %v812, %v812
      %v1345 = vsub.f32 %v815, %v815
      %v1346 = vsub.f32 %v818, %v818
      %v1347 = vsub.f32 %v821, %v821
      %v1348 = vsub.f32 %v824, %v824
      %v1349 = vsub.f32 %v827, %v827
      %v1350 = vsub.f32 %v830, %v830
      %v1351 = vmul.f32 %v1338, 1.442695
      %v1352 = vpow.pop %v1351
      %v1353 = vmul.f32 %v1339, 1.442695
      %v1354 = vpow.pop %v1353
      %v1355 = vmul.f32 %v1340, 1.442695
      %v1356 = vpow.pop %v1355
      %v1357 = vmul.f32 %v1341, 1.442695
      %v1358 = vpow.pop %v1357
      %v1359 = vmul.f32 %v1342, 1.442695
      %v1360 = vpow.pop %v1359
      %v1361 = vmul.f32 %v1343, 1.442695
      %v1362 = vpow.pop %v1361
      %v1363 = vmul.f32 %v1344, 1.442695
      %v1364 = vpow.pop %v1363
      %v1365 = vmul.f32 %v1345, 1.442695
      %v1366 = vpow.pop %v1365
      %v1367 = vmul.f32 %v1346, 1.442695
      %v1368 = vpow.pop %v1367
      %v1369 = vmul.f32 %v1347, 1.442695
      %v1370 = vpow.pop %v1369
      %v1371 = vmul.f32 %v1348, 1.442695
      %v1372 = vpow.pop %v1371
      %v1373 = vmul.f32 %v1349, 1.442695
      %v1374 = vpow.pop %v1373
      %v1375 = vmul.f32 %v1350, 1.442695
      %v1376 = vpow.pop %v1375
      %v1377 = vsub.f32 %v1080, %v794
      %v1378 = vsub.f32 %v1083, %v797
      %v1379 = vsub.f32 %v1086, %v800
      %v1380 = vsub.f32 %v1089, %v803
      %v1381 = vsub.f32 %v1092, %v806
      %v1382 = vsub.f32 %v1095, %v809
      %v1383 = vsub.f32 %v1098, %v812
      %v1384 = vsub.f32 %v1101, %v815
      %v1385 = vsub.f32 %v1104, %v818
      %v1386 = vsub.f32 %v1107, %v821
      %v1387 = vsub.f32 %v1110, %v824
      %v1388 = vsub.f32 %v1113, %v827
      %v1389 = vsub.f32 %v1116, %v830
      %v1390 = vmul.f32 %v1377, 1.442695
      %v1391 = vpow.pop %v1390
      %v1392 = vmul.f32 %v1378, 1.442695
      %v1393 = vpow.pop %v1392
      %v1394 = vmul.f32 %v1379, 1.442695
      %v1395 = vpow.pop %v1394
      %v1396 = vmul.f32 %v1380, 1.442695
      %v1397 = vpow.pop %v1396
      %v1398 = vmul.f32 %v1381, 1.442695
      %v1399 = vpow.pop %v1398
      %v1400 = vmul.f32 %v1382, 1.442695
      %v1401 = vpow.pop %v1400
      %v1402 = vmul.f32 %v1383, 1.442695
      %v1403 = vpow.pop %v1402
      %v1404 = vmul.f32 %v1384, 1.442695
      %v1405 = vpow.pop %v1404
      %v1406 = vmul.f32 %v1385, 1.442695
      %v1407 = vpow.pop %v1406
      %v1408 = vmul.f32 %v1386, 1.442695
      %v1409 = vpow.pop %v1408
      %v1410 = vmul.f32 %v1387, 1.442695
      %v1411 = vpow.pop %v1410
      %v1412 = vmul.f32 %v1388, 1.442695
      %v1413 = vpow.pop %v1412
      %v1414 = vmul.f32 %v1389, 1.442695
      %v1415 = vpow.pop %v1414
      %v1416 = vadd.f32 %v1352, %v1391
      %v1417 = vadd.f32 %v1354, %v1393
      %v1418 = vadd.f32 %v1356, %v1395
      %v1419 = vadd.f32 %v1358, %v1397
      %v1420 = vadd.f32 %v1360, %v1399
      %v1421 = vadd.f32 %v1362, %v1401
      %v1422 = vadd.f32 %v1364, %v1403
      %v1423 = vadd.f32 %v1366, %v1405
      %v1424 = vadd.f32 %v1368, %v1407
      %v1425 = vadd.f32 %v1370, %v1409
      %v1426 = vadd.f32 %v1372, %v1411
      %v1427 = vadd.f32 %v1374, %v1413
      %v1428 = vadd.f32 %v1376, %v1415
      %v1429 = vrcp.pop %v1416
      %v1430 = vmul.f32 1.0, %v1429
      %v1431 = vrcp.pop %v1417
      %v1432 = vmul.f32 1.0, %v1431
      %v1433 = vrcp.pop %v1418
      %v1434 = vmul.f32 1.0, %v1433
      %v1435 = vrcp.pop %v1419
      %v1436 = vmul.f32 1.0, %v1435
      %v1437 = vrcp.pop %v1420
      %v1438 = vmul.f32 1.0, %v1437
      %v1439 = vrcp.pop %v1421
      %v1440 = vmul.f32 1.0, %v1439
      %v1441 = vrcp.pop %v1422
      %v1442 = vmul.f32 1.0, %v1441
      %v1443 = vrcp.pop %v1423
      %v1444 = vmul.f32 1.0, %v1443
      %v1445 = vrcp.pop %v1424
      %v1446 = vmul.f32 1.0, %v1445
      %v1447 = vrcp.pop %v1425
      %v1448 = vmul.f32 1.0, %v1447
      %v1449 = vrcp.pop %v1426
      %v1450 = vmul.f32 1.0, %v1449
      %v1451 = vrcp.pop %v1427
      %v1452 = vmul.f32 1.0, %v1451
      %v1453 = vrcp.pop %v1428
      %v1454 = vmul.f32 1.0, %v1453
      %v1455 = vmul.f32 %v1352, %v1430
      %v1456 = vmul.f32 %v1354, %v1432
      %v1457 = vmul.f32 %v1356, %v1434
      %v1458 = vmul.f32 %v1358, %v1436
      %v1459 = vmul.f32 %v1360, %v1438
      %v1460 = vmul.f32 %v1362, %v1440
      %v1461 = vmul.f32 %v1364, %v1442
      %v1462 = vmul.f32 %v1366, %v1444
      %v1463 = vmul.f32 %v1368, %v1446
      %v1464 = vmul.f32 %v1370, %v1448
      %v1465 = vmul.f32 %v1372, %v1450
      %v1466 = vmul.f32 %v1374, %v1452
      %v1467 = vmul.f32 %v1376, %v1454
      %v1468 = vsel %vm1052, 1, 0
      %v1469 = vsel %vm1053, 1, 0
      %v1470 = vsel %vm1054, 1, 0
      %v1471 = vsel %vm1055, 1, 0
      %v1472 = vsel %vm1056, 1, 0
      %v1473 = vsel %vm1057, 1, 0
      %v1474 = vsel %vm1058, 1, 0
      %v1475 = vsel %vm1059, 1, 0
      %v1476 = vsel %vm1060, 1, 0
      %v1477 = vsel %vm1061, 1, 0
      %v1478 = vsel %vm1062, 1, 0
      %v1479 = vsel %vm1063, 1, 0
      %v1480 = vsel %vm1064, 1, 0
      %v1481 = vcvt.s32.f32 %v1468
      %v1482 = vcvt.s32.f32 %v1469
      %v1483 = vcvt.s32.f32 %v1470
      %v1484 = vcvt.s32.f32 %v1471
      %v1485 = vcvt.s32.f32 %v1472
      %v1486 = vcvt.s32.f32 %v1473
      %v1487 = vcvt.s32.f32 %v1474
      %v1488 = vcvt.s32.f32 %v1475
      %v1489 = vcvt.s32.f32 %v1476
      %v1490 = vcvt.s32.f32 %v1477
      %v1491 = vcvt.s32.f32 %v1478
      %v1492 = vcvt.s32.f32 %v1479
      %v1493 = vcvt.s32.f32 %v1480
      %v1494 = vmul.f32 %v1455, %v1481
      %v1495 = vmul.f32 %v1456, %v1482
      %v1496 = vmul.f32 %v1457, %v1483
      %v1497 = vmul.f32 %v1458, %v1484
      %v1498 = vmul.f32 %v1459, %v1485
      %v1499 = vmul.f32 %v1460, %v1486
      %v1500 = vmul.f32 %v1461, %v1487
      %v1501 = vmul.f32 %v1462, %v1488
      %v1502 = vmul.f32 %v1463, %v1489
      %v1503 = vmul.f32 %v1464, %v1490
      %v1504 = vmul.f32 %v1465, %v1491
      %v1505 = vmul.f32 %v1466, %v1492
      %v1506 = vmul.f32 %v1467, %v1493
      %v1507 = vadd.f32 %v1494, 0.0
      %v1508 = vadd.f32 %v1495, 0.0
      %v1509 = vadd.f32 %v1496, 0.0
      %v1510 = vadd.f32 %v1497, 0.0
      %v1511 = vadd.f32 %v1498, 0.0
      %v1512 = vadd.f32 %v1499, 0.0
      %v1513 = vadd.f32 %v1500, 0.0
      %v1514 = vadd.f32 %v1501, 0.0
      %v1515 = vadd.f32 %v1502, 0.0
      %v1516 = vadd.f32 %v1503, 0.0
      %v1517 = vadd.f32 %v1504, 0.0
      %v1518 = vadd.f32 %v1505, 0.0
      %v1519 = vadd.f32 %v1506, 0.0
      %v1520 = vmul.f32 %v1391, %v1430
      %v1521 = vmul.f32 %v1393, %v1432
      %v1522 = vmul.f32 %v1395, %v1434
      %v1523 = vmul.f32 %v1397, %v1436
      %v1524 = vmul.f32 %v1399, %v1438
      %v1525 = vmul.f32 %v1401, %v1440
      %v1526 = vmul.f32 %v1403, %v1442
      %v1527 = vmul.f32 %v1405, %v1444
      %v1528 = vmul.f32 %v1407, %v1446
      %v1529 = vmul.f32 %v1409, %v1448
      %v1530 = vmul.f32 %v1411, %v1450
      %v1531 = vmul.f32 %v1413, %v1452
      %v1532 = vmul.f32 %v1415, %v1454
      %vm1533 = vcmp.eq.s32.totalorder %v790, %v1157
      %vm1534 = vcmp.eq.s32.totalorder %v790, %v1172
      %vm1535 = vcmp.eq.s32.totalorder %v790, %v1187
      %vm1536 = vcmp.eq.s32.totalorder %v790, %v1202
      %vm1537 = vcmp.eq.s32.totalorder %v790, %v1217
      %vm1538 = vcmp.eq.s32.totalorder %v790, %v1232
      %vm1539 = vcmp.eq.s32.totalorder %v790, %v1247
      %vm1540 = vcmp.eq.s32.totalorder %v790, %v1262
      %vm1541 = vcmp.eq.s32.totalorder %v790, %v1277
      %vm1542 = vcmp.eq.s32.totalorder %v790, %v1292
      %vm1543 = vcmp.eq.s32.totalorder %v790, %v1307
      %vm1544 = vcmp.eq.s32.totalorder %v790, %v1322
      %vm1545 = vcmp.eq.s32.totalorder %v790, %v1337
      %v1546 = vsel %vm1533, 1, 0
      %v1547 = vsel %vm1534, 1, 0
      %v1548 = vsel %vm1535, 1, 0
      %v1549 = vsel %vm1536, 1, 0
      %v1550 = vsel %vm1537, 1, 0
      %v1551 = vsel %vm1538, 1, 0
      %v1552 = vsel %vm1539, 1, 0
      %v1553 = vsel %vm1540, 1, 0
      %v1554 = vsel %vm1541, 1, 0
      %v1555 = vsel %vm1542, 1, 0
      %v1556 = vsel %vm1543, 1, 0
      %v1557 = vsel %vm1544, 1, 0
      %v1558 = vsel %vm1545, 1, 0
      %v1559 = vcvt.s32.f32 %v1546
      %v1560 = vcvt.s32.f32 %v1547
      %v1561 = vcvt.s32.f32 %v1548
      %v1562 = vcvt.s32.f32 %v1549
      %v1563 = vcvt.s32.f32 %v1550
      %v1564 = vcvt.s32.f32 %v1551
      %v1565 = vcvt.s32.f32 %v1552
      %v1566 = vcvt.s32.f32 %v1553
      %v1567 = vcvt.s32.f32 %v1554
      %v1568 = vcvt.s32.f32 %v1555
      %v1569 = vcvt.s32.f32 %v1556
      %v1570 = vcvt.s32.f32 %v1557
      %v1571 = vcvt.s32.f32 %v1558
      %v1572 = vmul.f32 %v1520, %v1559
      %v1573 = vmul.f32 %v1521, %v1560
      %v1574 = vmul.f32 %v1522, %v1561
      %v1575 = vmul.f32 %v1523, %v1562
      %v1576 = vmul.f32 %v1524, %v1563
      %v1577 = vmul.f32 %v1525, %v1564
      %v1578 = vmul.f32 %v1526, %v1565
      %v1579 = vmul.f32 %v1527, %v1566
      %v1580 = vmul.f32 %v1528, %v1567
      %v1581 = vmul.f32 %v1529, %v1568
      %v1582 = vmul.f32 %v1530, %v1569
      %v1583 = vmul.f32 %v1531, %v1570
      %v1584 = vmul.f32 %v1532, %v1571
      %v1585 = vadd.f32 %v1507, %v1572
      %v1586 = vadd.f32 %v1508, %v1573
      %v1587 = vadd.f32 %v1509, %v1574
      %v1588 = vadd.f32 %v1510, %v1575
      %v1589 = vadd.f32 %v1511, %v1576
      %v1590 = vadd.f32 %v1512, %v1577
      %v1591 = vadd.f32 %v1513, %v1578
      %v1592 = vadd.f32 %v1514, %v1579
      %v1593 = vadd.f32 %v1515, %v1580
      %v1594 = vadd.f32 %v1516, %v1581
      %v1595 = vadd.f32 %v1517, %v1582
      %v1596 = vadd.f32 %v1518, %v1583
      %v1597 = vadd.f32 %v1519, %v1584
      %v1599 = vlaneseq
      %v1600 = vshrl.u32 %v1599, 7
      %v1601 = vsub.s32 0, %v1600
      %v1602 = vrot.slane %v579, %v1601
      %1604 = vmatprep.subr.mxu0 0.0
      %1605 = vmatpush1.msra.mxu0 %v578
      %1606 = vmatprep.subr.mxu0 0.0
      %1607 = vmatpush1.msra.mxu0 0.0
      %1608 = vmatprep.subr.mxu0 0.0
      %1609 = vmatpush1.msra.mxu0 0.0
      %1610 = vmatprep.subr.mxu0 0.0
      %1611 = vmatpush1.msra.mxu0 0.0
      %1612 = vmatprep.subr.mxu0 0.0
      %1613 = vmatpush1.msra.mxu0 0.0
      %1614 = vmatprep.subr.mxu0 0.0
      %1615 = vmatpush1.msra.mxu0 0.0
      %1616 = vmatprep.subr.mxu0 0.0
      %1617 = vmatpush1.msra.mxu0 0.0
      %1618 = vmatprep.subr.mxu0 0.0
      %1619 = vmatpush1.msra.mxu0 0.0
      %1620 = vmatprep.subr.mxu0 0.0
      %1621 = vmatpush1.msra.mxu0 0.0
      %1622 = vmatprep.subr.mxu0 0.0
      %1623 = vmatpush1.msra.mxu0 0.0
      %1624 = vmatprep.subr.mxu0 0.0
      %1625 = vmatpush1.msra.mxu0 0.0
      %1626 = vmatprep.subr.mxu0 0.0
      %1627 = vmatpush1.msra.mxu0 0.0
      %1628 = vmatprep.subr.mxu0 0.0
      %1629 = vmatpush1.msra.mxu0 0.0
      %1630 = vmatprep.subr.mxu0 0.0
      %1631 = vmatpush1.msra.mxu0 0.0
      %1632 = vmatprep.subr.mxu0 0.0
      %1633 = vmatpush1.msra.mxu0 0.0
      %1634 = vmatprep.subr.mxu0 0.0
      %1635 = vmatpush1.msra.mxu0 0.0
      %1636 = vmatprep.subr.mxu0 0.0
      %1637 = vmatpush1.msra.mxu0 0.0
      %1638 = vmatprep.subr.mxu0 0.0
      %1639 = vmatpush1.msra.mxu0 0.0
      %1640 = vmatprep.subr.mxu0 0.0
      %1641 = vmatpush1.msra.mxu0 0.0
      %1642 = vmatprep.subr.mxu0 0.0
      %1643 = vmatpush1.msra.mxu0 0.0
      %1644 = vmatprep.subr.mxu0 0.0
      %1645 = vmatpush1.msra.mxu0 0.0
      %1646 = vmatprep.subr.mxu0 0.0
      %1647 = vmatpush1.msra.mxu0 0.0
      %1648 = vmatprep.subr.mxu0 0.0
      %1649 = vmatpush1.msra.mxu0 0.0
      %1650 = vmatprep.subr.mxu0 0.0
      %1651 = vmatpush1.msra.mxu0 0.0
      %1652 = vmatprep.subr.mxu0 0.0
      %1653 = vmatpush1.msra.mxu0 0.0
      %1654 = vmatprep.subr.mxu0 0.0
      %1655 = vmatpush1.msra.mxu0 0.0
      %1656 = vmatprep.subr.mxu0 0.0
      %1657 = vmatpush1.msra.mxu0 0.0
      %1658 = vmatprep.subr.mxu0 0.0
      %1659 = vmatpush1.msra.mxu0 0.0
      %1660 = vmatprep.subr.mxu0 0.0
      %1661 = vmatpush1.msra.mxu0 0.0
      %1662 = vmatprep.subr.mxu0 0.0
      %1663 = vmatpush1.msra.mxu0 0.0
      %1664 = vmatprep.subr.mxu0 0.0
      %1665 = vmatpush1.msra.mxu0 0.0
      %1666 = vmatprep.subr.mxu0 0.0
      %1667 = vmatpush1.msra.mxu0 0.0
      %1668 = vmatprep.mubr.f32.mxu0 0.0
      %1669 = vmatmul.mubr.f32.gmra.mrb[0].mxu0 %v621
      %v1670 = vpop.f32.mrb[0].mxu0
      %v1671 = vadd.f32 %v1602, %v1670
      %v1672 = vpop.f32.mrb[0].mxu0
      %1673 = vmatprep.mubr.f32.mxu0 0.0
      %1674 = vmatmul.mubr.f32.gmra.mrb[0].mxu0 %v624
      %v1675 = vpop.f32.mrb[0].mxu0
      %v1676 = vadd.f32 %v1602, %v1675
      %v1677 = vpop.f32.mrb[0].mxu0
      %1678 = vmatprep.mubr.f32.mxu0 0.0
      %1679 = vmatmul.mubr.f32.gmra.mrb[0].mxu0 %v627
      %v1680 = vpop.f32.mrb[0].mxu0
      %v1681 = vadd.f32 %v1602, %v1680
      %v1682 = vpop.f32.mrb[0].mxu0
      %1683 = vmatprep.mubr.f32.mxu0 0.0
      %1684 = vmatmul.mubr.f32.gmra.mrb[0].mxu0 %v630
      %v1685 = vpop.f32.mrb[0].mxu0
      %v1686 = vadd.f32 %v1602, %v1685
      %v1687 = vpop.f32.mrb[0].mxu0
      %1688 = vmatprep.mubr.f32.mxu0 0.0
      %1689 = vmatmul.mubr.f32.gmra.mrb[0].mxu0 %v633
      %v1690 = vpop.f32.mrb[0].mxu0
      %v1691 = vadd.f32 %v1602, %v1690
      %v1692 = vpop.f32.mrb[0].mxu0
      %1693 = vmatprep.mubr.f32.mxu0 0.0
      %1694 = vmatmul.mubr.f32.gmra.mrb[0].mxu0 %v636
      %v1695 = vpop.f32.mrb[0].mxu0
      %v1696 = vadd.f32 %v1602, %v1695
      %v1697 = vpop.f32.mrb[0].mxu0
      %1698 = vmatprep.mubr.f32.mxu0 0.0
      %1699 = vmatmul.mubr.f32.gmra.mrb[0].mxu0 %v639
      %v1700 = vpop.f32.mrb[0].mxu0
      %v1701 = vadd.f32 %v1602, %v1700
      %v1702 = vpop.f32.mrb[0].mxu0
      %1703 = vmatprep.mubr.f32.mxu0 0.0
      %1704 = vmatmul.mubr.f32.gmra.mrb[0].mxu0 %v642
      %v1705 = vpop.f32.mrb[0].mxu0
      %v1706 = vadd.f32 %v1602, %v1705
      %v1707 = vpop.f32.mrb[0].mxu0
      %1708 = vmatprep.mubr.f32.mxu0 0.0
      %1709 = vmatmul.mubr.f32.gmra.mrb[0].mxu0 %v645
      %v1710 = vpop.f32.mrb[0].mxu0
      %v1711 = vadd.f32 %v1602, %v1710
      %v1712 = vpop.f32.mrb[0].mxu0
      %1713 = vmatprep.mubr.f32.mxu0 0.0
      %1714 = vmatmul.mubr.f32.gmra.mrb[0].mxu0 %v648
      %v1715 = vpop.f32.mrb[0].mxu0
      %v1716 = vadd.f32 %v1602, %v1715
      %v1717 = vpop.f32.mrb[0].mxu0
      %1718 = vmatprep.mubr.f32.mxu0 0.0
      %1719 = vmatmul.mubr.f32.gmra.mrb[0].mxu0 %v651
      %v1720 = vpop.f32.mrb[0].mxu0
      %v1721 = vadd.f32 %v1602, %v1720
      %v1722 = vpop.f32.mrb[0].mxu0
      %1723 = vmatprep.mubr.f32.mxu0 0.0
      %1724 = vmatmul.mubr.f32.gmra.mrb[0].mxu0 %v654
      %v1725 = vpop.f32.mrb[0].mxu0
      %v1726 = vadd.f32 %v1602, %v1725
      %v1727 = vpop.f32.mrb[0].mxu0
      %1728 = vmatprep.mubr.f32.mxu0 0.0
      %1729 = vmatmul.mubr.f32.gmra.mrb[0].mxu0 %v657
      %v1730 = vpop.f32.mrb[0].mxu0
      %v1731 = vadd.f32 %v1602, %v1730
      %v1732 = vpop.f32.mrb[0].mxu0
      %1733 = vdwg.mxu0
      %v1735 = vsel %vm791, %v1585, 0
      %v1738 = vsel %vm791, %v1586, 0
      %v1741 = vsel %vm791, %v1587, 0
      %v1744 = vsel %vm791, %v1588, 0
      %v1747 = vsel %vm791, %v1589, 0
      %v1750 = vsel %vm791, %v1590, 0
      %v1753 = vsel %vm791, %v1591, 0
      %v1756 = vsel %vm791, %v1592, 0
      %v1759 = vsel %vm791, %v1593, 0
      %v1762 = vsel %vm791, %v1594, 0
      %v1765 = vsel %vm791, %v1595, 0
      %v1768 = vsel %vm791, %v1596, 0
      %v1771 = vsel %vm791, %v1597, 0
      %vm1773 = vcmask 1043456
      %v1775 = vsel %vm1773, %v580, 0
      %1777 = vmatprep.subr.mxu0 0.0
      %1778 = vmatpush1.msra.mxu0 %v1775
      %1779 = vmatprep.subr.mxu0 0.0
      %1780 = vmatpush1.msra.mxu0 0.0
      %1781 = vmatprep.subr.mxu0 0.0
      %1782 = vmatpush1.msra.mxu0 0.0
      %1783 = vmatprep.subr.mxu0 0.0
      %1784 = vmatpush1.msra.mxu0 0.0
      %1785 = vmatprep.subr.mxu0 0.0
      %1786 = vmatpush1.msra.mxu0 0.0
      %1787 = vmatprep.subr.mxu0 0.0
      %1788 = vmatpush1.msra.mxu0 0.0
      %1789 = vmatprep.subr.mxu0 0.0
      %1790 = vmatpush1.msra.mxu0 0.0
      %1791 = vmatprep.subr.mxu0 0.0
      %1792 = vmatpush1.msra.mxu0 0.0
      %1793 = vmatprep.subr.mxu0 0.0
      %1794 = vmatpush1.msra.mxu0 0.0
      %1795 = vmatprep.subr.mxu0 0.0
      %1796 = vmatpush1.msra.mxu0 0.0
      %1797 = vmatprep.subr.mxu0 0.0
      %1798 = vmatpush1.msra.mxu0 0.0
      %1799 = vmatprep.subr.mxu0 0.0
      %1800 = vmatpush1.msra.mxu0 0.0
      %1801 = vmatprep.subr.mxu0 0.0
      %1802 = vmatpush1.msra.mxu0 0.0
      %1803 = vmatprep.subr.mxu0 0.0
      %1804 = vmatpush1.msra.mxu0 0.0
      %1805 = vmatprep.subr.mxu0 0.0
      %1806 = vmatpush1.msra.mxu0 0.0
      %1807 = vmatprep.subr.mxu0 0.0
      %1808 = vmatpush1.msra.mxu0 0.0
      %1809 = vmatprep.subr.mxu0 0.0
      %1810 = vmatpush1.msra.mxu0 0.0
      %1811 = vmatprep.subr.mxu0 0.0
      %1812 = vmatpush1.msra.mxu0 0.0
      %1813 = vmatprep.subr.mxu0 0.0
      %1814 = vmatpush1.msra.mxu0 0.0
      %1815 = vmatprep.subr.mxu0 0.0
      %1816 = vmatpush1.msra.mxu0 0.0
      %1817 = vmatprep.subr.mxu0 0.0
      %1818 = vmatpush1.msra.mxu0 0.0
      %1819 = vmatprep.subr.mxu0 0.0
      %1820 = vmatpush1.msra.mxu0 0.0
      %1821 = vmatprep.subr.mxu0 0.0
      %1822 = vmatpush1.msra.mxu0 0.0
      %1823 = vmatprep.subr.mxu0 0.0
      %1824 = vmatpush1.msra.mxu0 0.0
      %1825 = vmatprep.subr.mxu0 0.0
      %1826 = vmatpush1.msra.mxu0 0.0
      %1827 = vmatprep.subr.mxu0 0.0
      %1828 = vmatpush1.msra.mxu0 0.0
      %1829 = vmatprep.subr.mxu0 0.0
      %1830 = vmatpush1.msra.mxu0 0.0
      %1831 = vmatprep.subr.mxu0 0.0
      %1832 = vmatpush1.msra.mxu0 0.0
      %1833 = vmatprep.subr.mxu0 0.0
      %1834 = vmatpush1.msra.mxu0 0.0
      %1835 = vmatprep.subr.mxu0 0.0
      %1836 = vmatpush1.msra.mxu0 0.0
      %1837 = vmatprep.subr.mxu0 0.0
      %1838 = vmatpush1.msra.mxu0 0.0
      %1839 = vmatprep.subr.mxu0 0.0
      %1840 = vmatpush1.msra.mxu0 0.0
      %1841 = vmatprep.mubr.f32.mxu0 0.0
      %1842 = vmatmul.mubr.f32.gmra.mrb[0].mxu0 %v1735
      %v1843 = vpop.f32.mrb[0].mxu0
      %v1844 = vadd.f32 0.0, %v1843
      %v1845 = vpop.f32.mrb[0].mxu0
      %1846 = vmatprep.mubr.f32.mxu0 0.0
      %1847 = vmatmul.mubr.f32.gmra.mrb[0].mxu0 %v1738
      %v1848 = vpop.f32.mrb[0].mxu0
      %v1849 = vadd.f32 0.0, %v1848
      %v1850 = vpop.f32.mrb[0].mxu0
      %1851 = vmatprep.mubr.f32.mxu0 0.0
      %1852 = vmatmul.mubr.f32.gmra.mrb[0].mxu0 %v1741
      %v1853 = vpop.f32.mrb[0].mxu0
      %v1854 = vadd.f32 0.0, %v1853
      %v1855 = vpop.f32.mrb[0].mxu0
      %1856 = vmatprep.mubr.f32.mxu0 0.0
      %1857 = vmatmul.mubr.f32.gmra.mrb[0].mxu0 %v1744
      %v1858 = vpop.f32.mrb[0].mxu0
      %v1859 = vadd.f32 0.0, %v1858
      %v1860 = vpop.f32.mrb[0].mxu0
      %1861 = vmatprep.mubr.f32.mxu0 0.0
      %1862 = vmatmul.mubr.f32.gmra.mrb[0].mxu0 %v1747
      %v1863 = vpop.f32.mrb[0].mxu0
      %v1864 = vadd.f32 0.0, %v1863
      %v1865 = vpop.f32.mrb[0].mxu0
      %1866 = vmatprep.mubr.f32.mxu0 0.0
      %1867 = vmatmul.mubr.f32.gmra.mrb[0].mxu0 %v1750
      %v1868 = vpop.f32.mrb[0].mxu0
      %v1869 = vadd.f32 0.0, %v1868
      %v1870 = vpop.f32.mrb[0].mxu0
      %1871 = vmatprep.mubr.f32.mxu0 0.0
      %1872 = vmatmul.mubr.f32.gmra.mrb[0].mxu0 %v1753
      %v1873 = vpop.f32.mrb[0].mxu0
      %v1874 = vadd.f32 0.0, %v1873
      %v1875 = vpop.f32.mrb[0].mxu0
      %1876 = vmatprep.mubr.f32.mxu0 0.0
      %1877 = vmatmul.mubr.f32.gmra.mrb[0].mxu0 %v1756
      %v1878 = vpop.f32.mrb[0].mxu0
      %v1879 = vadd.f32 0.0, %v1878
      %v1880 = vpop.f32.mrb[0].mxu0
      %1881 = vmatprep.mubr.f32.mxu0 0.0
      %1882 = vmatmul.mubr.f32.gmra.mrb[0].mxu0 %v1759
      %v1883 = vpop.f32.mrb[0].mxu0
      %v1884 = vadd.f32 0.0, %v1883
      %v1885 = vpop.f32.mrb[0].mxu0
      %1886 = vmatprep.mubr.f32.mxu0 0.0
      %1887 = vmatmul.mubr.f32.gmra.mrb[0].mxu0 %v1762
      %v1888 = vpop.f32.mrb[0].mxu0
      %v1889 = vadd.f32 0.0, %v1888
      %v1890 = vpop.f32.mrb[0].mxu0
      %1891 = vmatprep.mubr.f32.mxu0 0.0
      %1892 = vmatmul.mubr.f32.gmra.mrb[0].mxu0 %v1765
      %v1893 = vpop.f32.mrb[0].mxu0
      %v1894 = vadd.f32 0.0, %v1893
      %v1895 = vpop.f32.mrb[0].mxu0
      %1896 = vmatprep.mubr.f32.mxu0 0.0
      %1897 = vmatmul.mubr.f32.gmra.mrb[0].mxu0 %v1768
      %v1898 = vpop.f32.mrb[0].mxu0
      %v1899 = vadd.f32 0.0, %v1898
      %v1900 = vpop.f32.mrb[0].mxu0
      %1901 = vmatprep.mubr.f32.mxu0 0.0
      %1902 = vmatmul.mubr.f32.gmra.mrb[0].mxu0 %v1771
      %v1903 = vpop.f32.mrb[0].mxu0
      %v1904 = vadd.f32 0.0, %v1903
      %v1905 = vpop.f32.mrb[0].mxu0
      %1906 = vdwg.mxu0
      %v1907 = vmul.f32 %v1844, %v1671
      %v1908 = vmul.f32 %v1849, %v1676
      %v1909 = vmul.f32 %v1854, %v1681
      %v1910 = vmul.f32 %v1859, %v1686
      %v1911 = vmul.f32 %v1864, %v1691
      %v1912 = vmul.f32 %v1869, %v1696
      %v1913 = vmul.f32 %v1874, %v1701
      %v1914 = vmul.f32 %v1879, %v1706
      %v1915 = vmul.f32 %v1884, %v1711
      %v1916 = vmul.f32 %v1889, %v1716
      %v1917 = vmul.f32 %v1894, %v1721
      %v1918 = vmul.f32 %v1899, %v1726
      %v1919 = vmul.f32 %v1904, %v1731
      %1933 = vrot.lane.b32.xlu0 %v1907, 96
      %v1934 = vpop.permute.xlu0 %1933
      %1935 = vrot.lane.b32.xlu0 %v1908, 96
      %v1936 = vpop.permute.xlu0 %1935
      %1937 = vrot.lane.b32.xlu0 %v1909, 96
      %v1938 = vpop.permute.xlu0 %1937
      %1939 = vrot.lane.b32.xlu0 %v1910, 96
      %v1940 = vpop.permute.xlu0 %1939
      %1941 = vrot.lane.b32.xlu0 %v1911, 96
      %v1942 = vpop.permute.xlu0 %1941
      %1943 = vrot.lane.b32.xlu0 %v1912, 96
      %v1944 = vpop.permute.xlu0 %1943
      %1945 = vrot.lane.b32.xlu0 %v1913, 96
      %v1946 = vpop.permute.xlu0 %1945
      %1947 = vrot.lane.b32.xlu0 %v1914, 96
      %v1948 = vpop.permute.xlu0 %1947
      %1949 = vrot.lane.b32.xlu0 %v1915, 96
      %v1950 = vpop.permute.xlu0 %1949
      %1951 = vrot.lane.b32.xlu0 %v1916, 96
      %v1952 = vpop.permute.xlu0 %1951
      %1953 = vrot.lane.b32.xlu0 %v1917, 96
      %v1954 = vpop.permute.xlu0 %1953
      %1955 = vrot.lane.b32.xlu0 %v1918, 96
      %v1956 = vpop.permute.xlu0 %1955
      %1957 = vrot.lane.b32.xlu0 %v1919, 96
      %v1958 = vpop.permute.xlu0 %1957
      %v1972 = vadd.f32 %v1907, %v1934
      %v1973 = vadd.f32 %v1908, %v1936
      %v1974 = vadd.f32 %v1909, %v1938
      %v1975 = vadd.f32 %v1910, %v1940
      %v1976 = vadd.f32 %v1911, %v1942
      %v1977 = vadd.f32 %v1912, %v1944
      %v1978 = vadd.f32 %v1913, %v1946
      %v1979 = vadd.f32 %v1914, %v1948
      %v1980 = vadd.f32 %v1915, %v1950
      %v1981 = vadd.f32 %v1916, %v1952
      %v1982 = vadd.f32 %v1917, %v1954
      %v1983 = vadd.f32 %v1918, %v1956
      %v1984 = vadd.f32 %v1919, %v1958
      %1985 = vrot.lane.b32.xlu0 %v1907, 64
      %v1986 = vpop.permute.xlu0 %1985
      %1987 = vrot.lane.b32.xlu0 %v1908, 64
      %v1988 = vpop.permute.xlu0 %1987
      %1989 = vrot.lane.b32.xlu0 %v1909, 64
      %v1990 = vpop.permute.xlu0 %1989
      %1991 = vrot.lane.b32.xlu0 %v1910, 64
      %v1992 = vpop.permute.xlu0 %1991
      %1993 = vrot.lane.b32.xlu0 %v1911, 64
      %v1994 = vpop.permute.xlu0 %1993
      %1995 = vrot.lane.b32.xlu0 %v1912, 64
      %v1996 = vpop.permute.xlu0 %1995
      %1997 = vrot.lane.b32.xlu0 %v1913, 64
      %v1998 = vpop.permute.xlu0 %1997
      %1999 = vrot.lane.b32.xlu0 %v1914, 64
      %v2000 = vpop.permute.xlu0 %1999
      %2001 = vrot.lane.b32.xlu0 %v1915, 64
      %v2002 = vpop.permute.xlu0 %2001
      %2003 = vrot.lane.b32.xlu0 %v1916, 64
      %v2004 = vpop.permute.xlu0 %2003
      %2005 = vrot.lane.b32.xlu0 %v1917, 64
      %v2006 = vpop.permute.xlu0 %2005
      %2007 = vrot.lane.b32.xlu0 %v1918, 64
      %v2008 = vpop.permute.xlu0 %2007
      %2009 = vrot.lane.b32.xlu0 %v1919, 64
      %v2010 = vpop.permute.xlu0 %2009
      %v2024 = vadd.f32 %v1972, %v1986
      %v2025 = vadd.f32 %v1973, %v1988
      %v2026 = vadd.f32 %v1974, %v1990
      %v2027 = vadd.f32 %v1975, %v1992
      %v2028 = vadd.f32 %v1976, %v1994
      %v2029 = vadd.f32 %v1977, %v1996
      %v2030 = vadd.f32 %v1978, %v1998
      %v2031 = vadd.f32 %v1979, %v2000
      %v2032 = vadd.f32 %v1980, %v2002
      %v2033 = vadd.f32 %v1981, %v2004
      %v2034 = vadd.f32 %v1982, %v2006
      %v2035 = vadd.f32 %v1983, %v2008
      %v2036 = vadd.f32 %v1984, %v2010
      %2037 = vrot.lane.b32.xlu0 %v1907, 32
      %v2038 = vpop.permute.xlu0 %2037
      %2039 = vrot.lane.b32.xlu0 %v1908, 32
      %v2040 = vpop.permute.xlu0 %2039
      %2041 = vrot.lane.b32.xlu0 %v1909, 32
      %v2042 = vpop.permute.xlu0 %2041
      %2043 = vrot.lane.b32.xlu0 %v1910, 32
      %v2044 = vpop.permute.xlu0 %2043
      %2045 = vrot.lane.b32.xlu0 %v1911, 32
      %v2046 = vpop.permute.xlu0 %2045
      %2047 = vrot.lane.b32.xlu0 %v1912, 32
      %v2048 = vpop.permute.xlu0 %2047
      %2049 = vrot.lane.b32.xlu0 %v1913, 32
      %v2050 = vpop.permute.xlu0 %2049
      %2051 = vrot.lane.b32.xlu0 %v1914, 32
      %v2052 = vpop.permute.xlu0 %2051
      %2053 = vrot.lane.b32.xlu0 %v1915, 32
      %v2054 = vpop.permute.xlu0 %2053
      %2055 = vrot.lane.b32.xlu0 %v1916, 32
      %v2056 = vpop.permute.xlu0 %2055
      %2057 = vrot.lane.b32.xlu0 %v1917, 32
      %v2058 = vpop.permute.xlu0 %2057
      %2059 = vrot.lane.b32.xlu0 %v1918, 32
      %v2060 = vpop.permute.xlu0 %2059
      %2061 = vrot.lane.b32.xlu0 %v1919, 32
      %v2062 = vpop.permute.xlu0 %2061
      %v2076 = vadd.f32 %v2024, %v2038
      %v2077 = vadd.f32 %v2025, %v2040
      %v2078 = vadd.f32 %v2026, %v2042
      %v2079 = vadd.f32 %v2027, %v2044
      %v2080 = vadd.f32 %v2028, %v2046
      %v2081 = vadd.f32 %v2029, %v2048
      %v2082 = vadd.f32 %v2030, %v2050
      %v2083 = vadd.f32 %v2031, %v2052
      %v2084 = vadd.f32 %v2032, %v2054
      %v2085 = vadd.f32 %v2033, %v2056
      %v2086 = vadd.f32 %v2034, %v2058
      %v2087 = vadd.f32 %v2035, %v2060
      %v2088 = vadd.f32 %v2036, %v2062
      %v2089 = vld [vmem:[%s7] sm:$0x1]
      %v2090 = vld [vmem:[%s8] sm:$0x1]
      %v2091 = vld [vmem:[%s9] sm:$0xff]
      %v2092 = vld [vmem:[%s9 + $0x8] sm:$0xff]
      %v2093 = vld [vmem:[%s9 + $0x10] sm:$0xff]
      %v2094 = vld [vmem:[%s9 + $0x18] sm:$0xff]
      %v2095 = vld [vmem:[%s10] sm:$0xff]
      %v2096 = vld [vmem:[%s10 + $0x8] sm:$0xff]
      %v2097 = vld [vmem:[%s10 + $0x10] sm:$0xff]
      %v2098 = vld [vmem:[%s10 + $0x18] sm:$0xff]
      %v2099 = vld [vmem:[%s11] sm:$0x1]
      %v2100 = vld [vmem:[%s12] sm:$0xf]
      %v2102 = vlaneseq
      %v2103 = vshrl.u32 %v2102, 7
      %v2104 = vsub.s32 0, %v2103
      %v2105 = vrot.slane %v2089, %v2104
      %v2107 = vmul.f32 %v2076, %v2105
      %v2108 = vmul.f32 %v2077, %v2105
      %v2109 = vmul.f32 %v2078, %v2105
      %v2110 = vmul.f32 %v2079, %v2105
      %v2111 = vmul.f32 %v2080, %v2105
      %v2112 = vmul.f32 %v2081, %v2105
      %v2113 = vmul.f32 %v2082, %v2105
      %v2114 = vmul.f32 %v2083, %v2105
      %v2115 = vmul.f32 %v2084, %v2105
      %v2116 = vmul.f32 %v2085, %v2105
      %v2117 = vmul.f32 %v2086, %v2105
      %v2118 = vmul.f32 %v2087, %v2105
      %v2119 = vmul.f32 %v2088, %v2105
      %v2121 = vlaneseq
      %v2122 = vshrl.u32 %v2121, 7
      %v2123 = vsub.s32 0, %v2122
      %v2124 = vrot.slane %v2090, %v2123
      %v2126 = vadd.f32 %v2107, %v2124
      %v2127 = vadd.f32 %v2108, %v2124
      %v2128 = vadd.f32 %v2109, %v2124
      %v2129 = vadd.f32 %v2110, %v2124
      %v2130 = vadd.f32 %v2111, %v2124
      %v2131 = vadd.f32 %v2112, %v2124
      %v2132 = vadd.f32 %v2113, %v2124
      %v2133 = vadd.f32 %v2114, %v2124
      %v2134 = vadd.f32 %v2115, %v2124
      %v2135 = vadd.f32 %v2116, %v2124
      %v2136 = vadd.f32 %v2117, %v2124
      %v2137 = vadd.f32 %v2118, %v2124
      %v2138 = vadd.f32 %v2119, %v2124
      %vm2139 = vcmask 261120
      %v2141 = vsel %vm2139, %v2126, 0
      %v2144 = vsel %vm2139, %v2127, 0
      %v2147 = vsel %vm2139, %v2128, 0
      %v2150 = vsel %vm2139, %v2129, 0
      %v2153 = vsel %vm2139, %v2130, 0
      %v2156 = vsel %vm2139, %v2131, 0
      %v2159 = vsel %vm2139, %v2132, 0
      %v2162 = vsel %vm2139, %v2133, 0
      %v2165 = vsel %vm2139, %v2134, 0
      %v2168 = vsel %vm2139, %v2135, 0
      %v2171 = vsel %vm2139, %v2136, 0
      %v2174 = vsel %vm2139, %v2137, 0
      %v2177 = vsel %vm2139, %v2138, 0
      %2179 = vmatprep.subr.mxu0 0.0
      %2180 = vmatpush1.msra.mxu0 %v2091
      %2181 = vmatprep.subr.mxu0 0.0
      %2182 = vmatpush1.msra.mxu0 %v2092
      %2183 = vmatprep.subr.mxu0 0.0
      %2184 = vmatpush1.msra.mxu0 %v2093
      %2185 = vmatprep.subr.mxu0 0.0
      %2186 = vmatpush1.msra.mxu0 %v2094
      %2187 = vmatprep.subr.mxu0 0.0
      %2188 = vmatpush1.msra.mxu0 0.0
      %2189 = vmatprep.subr.mxu0 0.0
      %2190 = vmatpush1.msra.mxu0 0.0
      %2191 = vmatprep.subr.mxu0 0.0
      %2192 = vmatpush1.msra.mxu0 0.0
      %2193 = vmatprep.subr.mxu0 0.0
      %2194 = vmatpush1.msra.mxu0 0.0
      %2195 = vmatprep.subr.mxu0 0.0
      %2196 = vmatpush1.msra.mxu0 0.0
      %2197 = vmatprep.subr.mxu0 0.0
      %2198 = vmatpush1.msra.mxu0 0.0
      %2199 = vmatprep.subr.mxu0 0.0
      %2200 = vmatpush1.msra.mxu0 0.0
      %2201 = vmatprep.subr.mxu0 0.0
      %2202 = vmatpush1.msra.mxu0 0.0
      %2203 = vmatprep.subr.mxu0 0.0
      %2204 = vmatpush1.msra.mxu0 0.0
      %2205 = vmatprep.subr.mxu0 0.0
      %2206 = vmatpush1.msra.mxu0 0.0
      %2207 = vmatprep.subr.mxu0 0.0
      %2208 = vmatpush1.msra.mxu0 0.0
      %2209 = vmatprep.subr.mxu0 0.0
      %2210 = vmatpush1.msra.mxu0 0.0
      %2211 = vmatprep.subr.mxu0 0.0
      %2212 = vmatpush1.msra.mxu0 0.0
      %2213 = vmatprep.subr.mxu0 0.0
      %2214 = vmatpush1.msra.mxu0 0.0
      %2215 = vmatprep.subr.mxu0 0.0
      %2216 = vmatpush1.msra.mxu0 0.0
      %2217 = vmatprep.subr.mxu0 0.0
      %2218 = vmatpush1.msra.mxu0 0.0
      %2219 = vmatprep.subr.mxu0 0.0
      %2220 = vmatpush1.msra.mxu0 0.0
      %2221 = vmatprep.subr.mxu0 0.0
      %2222 = vmatpush1.msra.mxu0 0.0
      %2223 = vmatprep.subr.mxu0 0.0
      %2224 = vmatpush1.msra.mxu0 0.0
      %2225 = vmatprep.subr.mxu0 0.0
      %2226 = vmatpush1.msra.mxu0 0.0
      %2227 = vmatprep.subr.mxu0 0.0
      %2228 = vmatpush1.msra.mxu0 0.0
      %2229 = vmatprep.subr.mxu0 0.0
      %2230 = vmatpush1.msra.mxu0 0.0
      %2231 = vmatprep.subr.mxu0 0.0
      %2232 = vmatpush1.msra.mxu0 0.0
      %2233 = vmatprep.subr.mxu0 0.0
      %2234 = vmatpush1.msra.mxu0 0.0
      %2235 = vmatprep.subr.mxu0 0.0
      %2236 = vmatpush1.msra.mxu0 0.0
      %2237 = vmatprep.subr.mxu0 0.0
      %2238 = vmatpush1.msra.mxu0 0.0
      %2239 = vmatprep.subr.mxu0 0.0
      %2240 = vmatpush1.msra.mxu0 0.0
      %2241 = vmatprep.subr.mxu0 0.0
      %2242 = vmatpush1.msra.mxu0 0.0
      %2243 = vmatprep.mubr.f32.mxu0 0.0
      %2244 = vmatmul.mubr.f32.gmra.mrb[0].mxu0 %v2141
      %v2245 = vpop.f32.mrb[0].mxu0
      %v2246 = vadd.f32 0.0, %v2245
      %v2247 = vpop.f32.mrb[0].mxu0
      %2248 = vmatprep.mubr.f32.mxu0 0.0
      %2249 = vmatmul.mubr.f32.gmra.mrb[0].mxu0 %v2144
      %v2250 = vpop.f32.mrb[0].mxu0
      %v2251 = vadd.f32 0.0, %v2250
      %v2252 = vpop.f32.mrb[0].mxu0
      %2253 = vmatprep.mubr.f32.mxu0 0.0
      %2254 = vmatmul.mubr.f32.gmra.mrb[0].mxu0 %v2147
      %v2255 = vpop.f32.mrb[0].mxu0
      %v2256 = vadd.f32 0.0, %v2255
      %v2257 = vpop.f32.mrb[0].mxu0
      %2258 = vmatprep.mubr.f32.mxu0 0.0
      %2259 = vmatmul.mubr.f32.gmra.mrb[0].mxu0 %v2150
      %v2260 = vpop.f32.mrb[0].mxu0
      %v2261 = vadd.f32 0.0, %v2260
      %v2262 = vpop.f32.mrb[0].mxu0
      %2263 = vmatprep.mubr.f32.mxu0 0.0
      %2264 = vmatmul.mubr.f32.gmra.mrb[0].mxu0 %v2153
      %v2265 = vpop.f32.mrb[0].mxu0
      %v2266 = vadd.f32 0.0, %v2265
      %v2267 = vpop.f32.mrb[0].mxu0
      %2268 = vmatprep.mubr.f32.mxu0 0.0
      %2269 = vmatmul.mubr.f32.gmra.mrb[0].mxu0 %v2156
      %v2270 = vpop.f32.mrb[0].mxu0
      %v2271 = vadd.f32 0.0, %v2270
      %v2272 = vpop.f32.mrb[0].mxu0
      %2273 = vmatprep.mubr.f32.mxu0 0.0
      %2274 = vmatmul.mubr.f32.gmra.mrb[0].mxu0 %v2159
      %v2275 = vpop.f32.mrb[0].mxu0
      %v2276 = vadd.f32 0.0, %v2275
      %v2277 = vpop.f32.mrb[0].mxu0
      %2278 = vmatprep.mubr.f32.mxu0 0.0
      %2279 = vmatmul.mubr.f32.gmra.mrb[0].mxu0 %v2162
      %v2280 = vpop.f32.mrb[0].mxu0
      %v2281 = vadd.f32 0.0, %v2280
      %v2282 = vpop.f32.mrb[0].mxu0
      %2283 = vmatprep.mubr.f32.mxu0 0.0
      %2284 = vmatmul.mubr.f32.gmra.mrb[0].mxu0 %v2165
      %v2285 = vpop.f32.mrb[0].mxu0
      %v2286 = vadd.f32 0.0, %v2285
      %v2287 = vpop.f32.mrb[0].mxu0
      %2288 = vmatprep.mubr.f32.mxu0 0.0
      %2289 = vmatmul.mubr.f32.gmra.mrb[0].mxu0 %v2168
      %v2290 = vpop.f32.mrb[0].mxu0
      %v2291 = vadd.f32 0.0, %v2290
      %v2292 = vpop.f32.mrb[0].mxu0
      %2293 = vmatprep.mubr.f32.mxu0 0.0
      %2294 = vmatmul.mubr.f32.gmra.mrb[0].mxu0 %v2171
      %v2295 = vpop.f32.mrb[0].mxu0
      %v2296 = vadd.f32 0.0, %v2295
      %v2297 = vpop.f32.mrb[0].mxu0
      %2298 = vmatprep.mubr.f32.mxu0 0.0
      %2299 = vmatmul.mubr.f32.gmra.mrb[0].mxu0 %v2174
      %v2300 = vpop.f32.mrb[0].mxu0
      %v2301 = vadd.f32 0.0, %v2300
      %v2302 = vpop.f32.mrb[0].mxu0
      %2303 = vmatprep.mubr.f32.mxu0 0.0
      %2304 = vmatmul.mubr.f32.gmra.mrb[0].mxu0 %v2177
      %v2305 = vpop.f32.mrb[0].mxu0
      %v2306 = vadd.f32 0.0, %v2305
      %v2307 = vpop.f32.mrb[0].mxu0
      %2308 = vdwg.mxu0
      %v2309 = vsel %vm791, %v2246, -inf
      %2310 = vmax.xlane.f32.xlu0 %v2309
      %v2311 = vpop.xlane.xlu0 %2310
      %v2312 = vsel %vm791, %v2251, -inf
      %2313 = vmax.xlane.f32.xlu0 %v2312
      %v2314 = vpop.xlane.xlu0 %2313
      %v2315 = vsel %vm791, %v2256, -inf
      %2316 = vmax.xlane.f32.xlu0 %v2315
      %v2317 = vpop.xlane.xlu0 %2316
      %v2318 = vsel %vm791, %v2261, -inf
      %2319 = vmax.xlane.f32.xlu0 %v2318
      %v2320 = vpop.xlane.xlu0 %2319
      %v2321 = vsel %vm791, %v2266, -inf
      %2322 = vmax.xlane.f32.xlu0 %v2321
      %v2323 = vpop.xlane.xlu0 %2322
      %v2324 = vsel %vm791, %v2271, -inf
      %2325 = vmax.xlane.f32.xlu0 %v2324
      %v2326 = vpop.xlane.xlu0 %2325
      %v2327 = vsel %vm791, %v2276, -inf
      %2328 = vmax.xlane.f32.xlu0 %v2327
      %v2329 = vpop.xlane.xlu0 %2328
      %v2330 = vsel %vm791, %v2281, -inf
      %2331 = vmax.xlane.f32.xlu0 %v2330
      %v2332 = vpop.xlane.xlu0 %2331
      %v2333 = vsel %vm791, %v2286, -inf
      %2334 = vmax.xlane.f32.xlu0 %v2333
      %v2335 = vpop.xlane.xlu0 %2334
      %v2336 = vsel %vm791, %v2291, -inf
      %2337 = vmax.xlane.f32.xlu0 %v2336
      %v2338 = vpop.xlane.xlu0 %2337
      %v2339 = vsel %vm791, %v2296, -inf
      %2340 = vmax.xlane.f32.xlu0 %v2339
      %v2341 = vpop.xlane.xlu0 %2340
      %v2342 = vsel %vm791, %v2301, -inf
      %2343 = vmax.xlane.f32.xlu0 %v2342
      %v2344 = vpop.xlane.xlu0 %2343
      %v2345 = vsel %vm791, %v2306, -inf
      %2346 = vmax.xlane.f32.xlu0 %v2345
      %v2347 = vpop.xlane.xlu0 %2346
      %vm2348 = vcmp.eq.f32.partialorder %v2246, %v2311
      %vm2349 = vcmp.eq.f32.partialorder %v2251, %v2314
      %vm2350 = vcmp.eq.f32.partialorder %v2256, %v2317
      %vm2351 = vcmp.eq.f32.partialorder %v2261, %v2320
      %vm2352 = vcmp.eq.f32.partialorder %v2266, %v2323
      %vm2353 = vcmp.eq.f32.partialorder %v2271, %v2326
      %vm2354 = vcmp.eq.f32.partialorder %v2276, %v2329
      %vm2355 = vcmp.eq.f32.partialorder %v2281, %v2332
      %vm2356 = vcmp.eq.f32.partialorder %v2286, %v2335
      %vm2357 = vcmp.eq.f32.partialorder %v2291, %v2338
      %vm2358 = vcmp.eq.f32.partialorder %v2296, %v2341
      %vm2359 = vcmp.eq.f32.partialorder %v2301, %v2344
      %vm2360 = vcmp.eq.f32.partialorder %v2306, %v2347
      %v2361 = vsel %vm2348, %v790, 4
      %v2362 = vsel %vm2349, %v790, 4
      %v2363 = vsel %vm2350, %v790, 4
      %v2364 = vsel %vm2351, %v790, 4
      %v2365 = vsel %vm2352, %v790, 4
      %v2366 = vsel %vm2353, %v790, 4
      %v2367 = vsel %vm2354, %v790, 4
      %v2368 = vsel %vm2355, %v790, 4
      %v2369 = vsel %vm2356, %v790, 4
      %v2370 = vsel %vm2357, %v790, 4
      %v2371 = vsel %vm2358, %v790, 4
      %v2372 = vsel %vm2359, %v790, 4
      %v2373 = vsel %vm2360, %v790, 4
      %v2374 = vsel %vm791, %v2361, 2147483647
      %v2375 = vand.u32 %v2374, 65535
      %v2376 = vshra.s32 %v2374, 16
      %v2377 = vcvt.s32.f32 %v2375
      %v2378 = vcvt.s32.f32 %v2376
      %2379 = vmin.xlane.f32.xlu0 %v2378
      %v2380 = vpop.xlane.xlu0 %2379
      %vm2381 = vcmp.eq.f32.partialorder %v2378, %v2380
      %v2382 = vsel %vm2381, %v2377, inf
      %2383 = vmin.xlane.f32.xlu0 %v2382
      %v2384 = vpop.xlane.xlu0 %2383
      %v2385 = vcvt.f32.s32 %v2384
      %v2386 = vcvt.f32.s32 %v2380
      %v2387 = vshll.u32 %v2386, 16
      %v2388 = vadd.s32 %v2387, %v2385
      %v2389 = vsel %vm791, %v2362, 2147483647
      %v2390 = vand.u32 %v2389, 65535
      %v2391 = vshra.s32 %v2389, 16
      %v2392 = vcvt.s32.f32 %v2390
      %v2393 = vcvt.s32.f32 %v2391
      %2394 = vmin.xlane.f32.xlu0 %v2393
      %v2395 = vpop.xlane.xlu0 %2394
      %vm2396 = vcmp.eq.f32.partialorder %v2393, %v2395
      %v2397 = vsel %vm2396, %v2392, inf
      %2398 = vmin.xlane.f32.xlu0 %v2397
      %v2399 = vpop.xlane.xlu0 %2398
      %v2400 = vcvt.f32.s32 %v2399
      %v2401 = vcvt.f32.s32 %v2395
      %v2402 = vshll.u32 %v2401, 16
      %v2403 = vadd.s32 %v2402, %v2400
      %v2404 = vsel %vm791, %v2363, 2147483647
      %v2405 = vand.u32 %v2404, 65535
      %v2406 = vshra.s32 %v2404, 16
      %v2407 = vcvt.s32.f32 %v2405
      %v2408 = vcvt.s32.f32 %v2406
      %2409 = vmin.xlane.f32.xlu0 %v2408
      %v2410 = vpop.xlane.xlu0 %2409
      %vm2411 = vcmp.eq.f32.partialorder %v2408, %v2410
      %v2412 = vsel %vm2411, %v2407, inf
      %2413 = vmin.xlane.f32.xlu0 %v2412
      %v2414 = vpop.xlane.xlu0 %2413
      %v2415 = vcvt.f32.s32 %v2414
      %v2416 = vcvt.f32.s32 %v2410
      %v2417 = vshll.u32 %v2416, 16
      %v2418 = vadd.s32 %v2417, %v2415
      %v2419 = vsel %vm791, %v2364, 2147483647
      %v2420 = vand.u32 %v2419, 65535
      %v2421 = vshra.s32 %v2419, 16
      %v2422 = vcvt.s32.f32 %v2420
      %v2423 = vcvt.s32.f32 %v2421
      %2424 = vmin.xlane.f32.xlu0 %v2423
      %v2425 = vpop.xlane.xlu0 %2424
      %vm2426 = vcmp.eq.f32.partialorder %v2423, %v2425
      %v2427 = vsel %vm2426, %v2422, inf
      %2428 = vmin.xlane.f32.xlu0 %v2427
      %v2429 = vpop.xlane.xlu0 %2428
      %v2430 = vcvt.f32.s32 %v2429
      %v2431 = vcvt.f32.s32 %v2425
      %v2432 = vshll.u32 %v2431, 16
      %v2433 = vadd.s32 %v2432, %v2430
      %v2434 = vsel %vm791, %v2365, 2147483647
      %v2435 = vand.u32 %v2434, 65535
      %v2436 = vshra.s32 %v2434, 16
      %v2437 = vcvt.s32.f32 %v2435
      %v2438 = vcvt.s32.f32 %v2436
      %2439 = vmin.xlane.f32.xlu0 %v2438
      %v2440 = vpop.xlane.xlu0 %2439
      %vm2441 = vcmp.eq.f32.partialorder %v2438, %v2440
      %v2442 = vsel %vm2441, %v2437, inf
      %2443 = vmin.xlane.f32.xlu0 %v2442
      %v2444 = vpop.xlane.xlu0 %2443
      %v2445 = vcvt.f32.s32 %v2444
      %v2446 = vcvt.f32.s32 %v2440
      %v2447 = vshll.u32 %v2446, 16
      %v2448 = vadd.s32 %v2447, %v2445
      %v2449 = vsel %vm791, %v2366, 2147483647
      %v2450 = vand.u32 %v2449, 65535
      %v2451 = vshra.s32 %v2449, 16
      %v2452 = vcvt.s32.f32 %v2450
      %v2453 = vcvt.s32.f32 %v2451
      %2454 = vmin.xlane.f32.xlu0 %v2453
      %v2455 = vpop.xlane.xlu0 %2454
      %vm2456 = vcmp.eq.f32.partialorder %v2453, %v2455
      %v2457 = vsel %vm2456, %v2452, inf
      %2458 = vmin.xlane.f32.xlu0 %v2457
      %v2459 = vpop.xlane.xlu0 %2458
      %v2460 = vcvt.f32.s32 %v2459
      %v2461 = vcvt.f32.s32 %v2455
      %v2462 = vshll.u32 %v2461, 16
      %v2463 = vadd.s32 %v2462, %v2460
      %v2464 = vsel %vm791, %v2367, 2147483647
      %v2465 = vand.u32 %v2464, 65535
      %v2466 = vshra.s32 %v2464, 16
      %v2467 = vcvt.s32.f32 %v2465
      %v2468 = vcvt.s32.f32 %v2466
      %2469 = vmin.xlane.f32.xlu0 %v2468
      %v2470 = vpop.xlane.xlu0 %2469
      %vm2471 = vcmp.eq.f32.partialorder %v2468, %v2470
      %v2472 = vsel %vm2471, %v2467, inf
      %2473 = vmin.xlane.f32.xlu0 %v2472
      %v2474 = vpop.xlane.xlu0 %2473
      %v2475 = vcvt.f32.s32 %v2474
      %v2476 = vcvt.f32.s32 %v2470
      %v2477 = vshll.u32 %v2476, 16
      %v2478 = vadd.s32 %v2477, %v2475
      %v2479 = vsel %vm791, %v2368, 2147483647
      %v2480 = vand.u32 %v2479, 65535
      %v2481 = vshra.s32 %v2479, 16
      %v2482 = vcvt.s32.f32 %v2480
      %v2483 = vcvt.s32.f32 %v2481
      %2484 = vmin.xlane.f32.xlu0 %v2483
      %v2485 = vpop.xlane.xlu0 %2484
      %vm2486 = vcmp.eq.f32.partialorder %v2483, %v2485
      %v2487 = vsel %vm2486, %v2482, inf
      %2488 = vmin.xlane.f32.xlu0 %v2487
      %v2489 = vpop.xlane.xlu0 %2488
      %v2490 = vcvt.f32.s32 %v2489
      %v2491 = vcvt.f32.s32 %v2485
      %v2492 = vshll.u32 %v2491, 16
      %v2493 = vadd.s32 %v2492, %v2490
      %v2494 = vsel %vm791, %v2369, 2147483647
      %v2495 = vand.u32 %v2494, 65535
      %v2496 = vshra.s32 %v2494, 16
      %v2497 = vcvt.s32.f32 %v2495
      %v2498 = vcvt.s32.f32 %v2496
      %2499 = vmin.xlane.f32.xlu0 %v2498
      %v2500 = vpop.xlane.xlu0 %2499
      %vm2501 = vcmp.eq.f32.partialorder %v2498, %v2500
      %v2502 = vsel %vm2501, %v2497, inf
      %2503 = vmin.xlane.f32.xlu0 %v2502
      %v2504 = vpop.xlane.xlu0 %2503
      %v2505 = vcvt.f32.s32 %v2504
      %v2506 = vcvt.f32.s32 %v2500
      %v2507 = vshll.u32 %v2506, 16
      %v2508 = vadd.s32 %v2507, %v2505
      %v2509 = vsel %vm791, %v2370, 2147483647
      %v2510 = vand.u32 %v2509, 65535
      %v2511 = vshra.s32 %v2509, 16
      %v2512 = vcvt.s32.f32 %v2510
      %v2513 = vcvt.s32.f32 %v2511
      %2514 = vmin.xlane.f32.xlu0 %v2513
      %v2515 = vpop.xlane.xlu0 %2514
      %vm2516 = vcmp.eq.f32.partialorder %v2513, %v2515
      %v2517 = vsel %vm2516, %v2512, inf
      %2518 = vmin.xlane.f32.xlu0 %v2517
      %v2519 = vpop.xlane.xlu0 %2518
      %v2520 = vcvt.f32.s32 %v2519
      %v2521 = vcvt.f32.s32 %v2515
      %v2522 = vshll.u32 %v2521, 16
      %v2523 = vadd.s32 %v2522, %v2520
      %v2524 = vsel %vm791, %v2371, 2147483647
      %v2525 = vand.u32 %v2524, 65535
      %v2526 = vshra.s32 %v2524, 16
      %v2527 = vcvt.s32.f32 %v2525
      %v2528 = vcvt.s32.f32 %v2526
      %2529 = vmin.xlane.f32.xlu0 %v2528
      %v2530 = vpop.xlane.xlu0 %2529
      %vm2531 = vcmp.eq.f32.partialorder %v2528, %v2530
      %v2532 = vsel %vm2531, %v2527, inf
      %2533 = vmin.xlane.f32.xlu0 %v2532
      %v2534 = vpop.xlane.xlu0 %2533
      %v2535 = vcvt.f32.s32 %v2534
      %v2536 = vcvt.f32.s32 %v2530
      %v2537 = vshll.u32 %v2536, 16
      %v2538 = vadd.s32 %v2537, %v2535
      %v2539 = vsel %vm791, %v2372, 2147483647
      %v2540 = vand.u32 %v2539, 65535
      %v2541 = vshra.s32 %v2539, 16
      %v2542 = vcvt.s32.f32 %v2540
      %v2543 = vcvt.s32.f32 %v2541
      %2544 = vmin.xlane.f32.xlu0 %v2543
      %v2545 = vpop.xlane.xlu0 %2544
      %vm2546 = vcmp.eq.f32.partialorder %v2543, %v2545
      %v2547 = vsel %vm2546, %v2542, inf
      %2548 = vmin.xlane.f32.xlu0 %v2547
      %v2549 = vpop.xlane.xlu0 %2548
      %v2550 = vcvt.f32.s32 %v2549
      %v2551 = vcvt.f32.s32 %v2545
      %v2552 = vshll.u32 %v2551, 16
      %v2553 = vadd.s32 %v2552, %v2550
      %v2554 = vsel %vm791, %v2373, 2147483647
      %v2555 = vand.u32 %v2554, 65535
      %v2556 = vshra.s32 %v2554, 16
      %v2557 = vcvt.s32.f32 %v2555
      %v2558 = vcvt.s32.f32 %v2556
      %2559 = vmin.xlane.f32.xlu0 %v2558
      %v2560 = vpop.xlane.xlu0 %2559
      %vm2561 = vcmp.eq.f32.partialorder %v2558, %v2560
      %v2562 = vsel %vm2561, %v2557, inf
      %2563 = vmin.xlane.f32.xlu0 %v2562
      %v2564 = vpop.xlane.xlu0 %2563
      %v2565 = vcvt.f32.s32 %v2564
      %v2566 = vcvt.f32.s32 %v2560
      %v2567 = vshll.u32 %v2566, 16
      %v2568 = vadd.s32 %v2567, %v2565
      %vm2569 = vcmp.eq.s32.totalorder %v790, %v2388
      %vm2570 = vcmp.eq.s32.totalorder %v790, %v2403
      %vm2571 = vcmp.eq.s32.totalorder %v790, %v2418
      %vm2572 = vcmp.eq.s32.totalorder %v790, %v2433
      %vm2573 = vcmp.eq.s32.totalorder %v790, %v2448
      %vm2574 = vcmp.eq.s32.totalorder %v790, %v2463
      %vm2575 = vcmp.eq.s32.totalorder %v790, %v2478
      %vm2576 = vcmp.eq.s32.totalorder %v790, %v2493
      %vm2577 = vcmp.eq.s32.totalorder %v790, %v2508
      %vm2578 = vcmp.eq.s32.totalorder %v790, %v2523
      %vm2579 = vcmp.eq.s32.totalorder %v790, %v2538
      %vm2580 = vcmp.eq.s32.totalorder %v790, %v2553
      %vm2581 = vcmp.eq.s32.totalorder %v790, %v2568
      %v2582 = vsel %vm2569, -inf, %v2246
      %v2583 = vsel %vm2570, -inf, %v2251
      %v2584 = vsel %vm2571, -inf, %v2256
      %v2585 = vsel %vm2572, -inf, %v2261
      %v2586 = vsel %vm2573, -inf, %v2266
      %v2587 = vsel %vm2574, -inf, %v2271
      %v2588 = vsel %vm2575, -inf, %v2276
      %v2589 = vsel %vm2576, -inf, %v2281
      %v2590 = vsel %vm2577, -inf, %v2286
      %v2591 = vsel %vm2578, -inf, %v2291
      %v2592 = vsel %vm2579, -inf, %v2296
      %v2593 = vsel %vm2580, -inf, %v2301
      %v2594 = vsel %vm2581, -inf, %v2306
      %v2595 = vsel %vm791, %v2582, -inf
      %2596 = vmax.xlane.f32.xlu0 %v2595
      %v2597 = vpop.xlane.xlu0 %2596
      %v2598 = vsel %vm791, %v2583, -inf
      %2599 = vmax.xlane.f32.xlu0 %v2598
      %v2600 = vpop.xlane.xlu0 %2599
      %v2601 = vsel %vm791, %v2584, -inf
      %2602 = vmax.xlane.f32.xlu0 %v2601
      %v2603 = vpop.xlane.xlu0 %2602
      %v2604 = vsel %vm791, %v2585, -inf
      %2605 = vmax.xlane.f32.xlu0 %v2604
      %v2606 = vpop.xlane.xlu0 %2605
      %v2607 = vsel %vm791, %v2586, -inf
      %2608 = vmax.xlane.f32.xlu0 %v2607
      %v2609 = vpop.xlane.xlu0 %2608
      %v2610 = vsel %vm791, %v2587, -inf
      %2611 = vmax.xlane.f32.xlu0 %v2610
      %v2612 = vpop.xlane.xlu0 %2611
      %v2613 = vsel %vm791, %v2588, -inf
      %2614 = vmax.xlane.f32.xlu0 %v2613
      %v2615 = vpop.xlane.xlu0 %2614
      %v2616 = vsel %vm791, %v2589, -inf
      %2617 = vmax.xlane.f32.xlu0 %v2616
      %v2618 = vpop.xlane.xlu0 %2617
      %v2619 = vsel %vm791, %v2590, -inf
      %2620 = vmax.xlane.f32.xlu0 %v2619
      %v2621 = vpop.xlane.xlu0 %2620
      %v2622 = vsel %vm791, %v2591, -inf
      %2623 = vmax.xlane.f32.xlu0 %v2622
      %v2624 = vpop.xlane.xlu0 %2623
      %v2625 = vsel %vm791, %v2592, -inf
      %2626 = vmax.xlane.f32.xlu0 %v2625
      %v2627 = vpop.xlane.xlu0 %2626
      %v2628 = vsel %vm791, %v2593, -inf
      %2629 = vmax.xlane.f32.xlu0 %v2628
      %v2630 = vpop.xlane.xlu0 %2629
      %v2631 = vsel %vm791, %v2594, -inf
      %2632 = vmax.xlane.f32.xlu0 %v2631
      %v2633 = vpop.xlane.xlu0 %2632
      %vm2634 = vcmp.eq.f32.partialorder %v2582, %v2597
      %vm2635 = vcmp.eq.f32.partialorder %v2583, %v2600
      %vm2636 = vcmp.eq.f32.partialorder %v2584, %v2603
      %vm2637 = vcmp.eq.f32.partialorder %v2585, %v2606
      %vm2638 = vcmp.eq.f32.partialorder %v2586, %v2609
      %vm2639 = vcmp.eq.f32.partialorder %v2587, %v2612
      %vm2640 = vcmp.eq.f32.partialorder %v2588, %v2615
      %vm2641 = vcmp.eq.f32.partialorder %v2589, %v2618
      %vm2642 = vcmp.eq.f32.partialorder %v2590, %v2621
      %vm2643 = vcmp.eq.f32.partialorder %v2591, %v2624
      %vm2644 = vcmp.eq.f32.partialorder %v2592, %v2627
      %vm2645 = vcmp.eq.f32.partialorder %v2593, %v2630
      %vm2646 = vcmp.eq.f32.partialorder %v2594, %v2633
      %v2647 = vsel %vm2634, %v790, 4
      %v2648 = vsel %vm2635, %v790, 4
      %v2649 = vsel %vm2636, %v790, 4
      %v2650 = vsel %vm2637, %v790, 4
      %v2651 = vsel %vm2638, %v790, 4
      %v2652 = vsel %vm2639, %v790, 4
      %v2653 = vsel %vm2640, %v790, 4
      %v2654 = vsel %vm2641, %v790, 4
      %v2655 = vsel %vm2642, %v790, 4
      %v2656 = vsel %vm2643, %v790, 4
      %v2657 = vsel %vm2644, %v790, 4
      %v2658 = vsel %vm2645, %v790, 4
      %v2659 = vsel %vm2646, %v790, 4
      %v2660 = vsel %vm791, %v2647, 2147483647
      %v2661 = vand.u32 %v2660, 65535
      %v2662 = vshra.s32 %v2660, 16
      %v2663 = vcvt.s32.f32 %v2661
      %v2664 = vcvt.s32.f32 %v2662
      %2665 = vmin.xlane.f32.xlu0 %v2664
      %v2666 = vpop.xlane.xlu0 %2665
      %vm2667 = vcmp.eq.f32.partialorder %v2664, %v2666
      %v2668 = vsel %vm2667, %v2663, inf
      %2669 = vmin.xlane.f32.xlu0 %v2668
      %v2670 = vpop.xlane.xlu0 %2669
      %v2671 = vcvt.f32.s32 %v2670
      %v2672 = vcvt.f32.s32 %v2666
      %v2673 = vshll.u32 %v2672, 16
      %v2674 = vadd.s32 %v2673, %v2671
      %v2675 = vsel %vm791, %v2648, 2147483647
      %v2676 = vand.u32 %v2675, 65535
      %v2677 = vshra.s32 %v2675, 16
      %v2678 = vcvt.s32.f32 %v2676
      %v2679 = vcvt.s32.f32 %v2677
      %2680 = vmin.xlane.f32.xlu0 %v2679
      %v2681 = vpop.xlane.xlu0 %2680
      %vm2682 = vcmp.eq.f32.partialorder %v2679, %v2681
      %v2683 = vsel %vm2682, %v2678, inf
      %2684 = vmin.xlane.f32.xlu0 %v2683
      %v2685 = vpop.xlane.xlu0 %2684
      %v2686 = vcvt.f32.s32 %v2685
      %v2687 = vcvt.f32.s32 %v2681
      %v2688 = vshll.u32 %v2687, 16
      %v2689 = vadd.s32 %v2688, %v2686
      %v2690 = vsel %vm791, %v2649, 2147483647
      %v2691 = vand.u32 %v2690, 65535
      %v2692 = vshra.s32 %v2690, 16
      %v2693 = vcvt.s32.f32 %v2691
      %v2694 = vcvt.s32.f32 %v2692
      %2695 = vmin.xlane.f32.xlu0 %v2694
      %v2696 = vpop.xlane.xlu0 %2695
      %vm2697 = vcmp.eq.f32.partialorder %v2694, %v2696
      %v2698 = vsel %vm2697, %v2693, inf
      %2699 = vmin.xlane.f32.xlu0 %v2698
      %v2700 = vpop.xlane.xlu0 %2699
      %v2701 = vcvt.f32.s32 %v2700
      %v2702 = vcvt.f32.s32 %v2696
      %v2703 = vshll.u32 %v2702, 16
      %v2704 = vadd.s32 %v2703, %v2701
      %v2705 = vsel %vm791, %v2650, 2147483647
      %v2706 = vand.u32 %v2705, 65535
      %v2707 = vshra.s32 %v2705, 16
      %v2708 = vcvt.s32.f32 %v2706
      %v2709 = vcvt.s32.f32 %v2707
      %2710 = vmin.xlane.f32.xlu0 %v2709
      %v2711 = vpop.xlane.xlu0 %2710
      %vm2712 = vcmp.eq.f32.partialorder %v2709, %v2711
      %v2713 = vsel %vm2712, %v2708, inf
      %2714 = vmin.xlane.f32.xlu0 %v2713
      %v2715 = vpop.xlane.xlu0 %2714
      %v2716 = vcvt.f32.s32 %v2715
      %v2717 = vcvt.f32.s32 %v2711
      %v2718 = vshll.u32 %v2717, 16
      %v2719 = vadd.s32 %v2718, %v2716
      %v2720 = vsel %vm791, %v2651, 2147483647
      %v2721 = vand.u32 %v2720, 65535
      %v2722 = vshra.s32 %v2720, 16
      %v2723 = vcvt.s32.f32 %v2721
      %v2724 = vcvt.s32.f32 %v2722
      %2725 = vmin.xlane.f32.xlu0 %v2724
      %v2726 = vpop.xlane.xlu0 %2725
      %vm2727 = vcmp.eq.f32.partialorder %v2724, %v2726
      %v2728 = vsel %vm2727, %v2723, inf
      %2729 = vmin.xlane.f32.xlu0 %v2728
      %v2730 = vpop.xlane.xlu0 %2729
      %v2731 = vcvt.f32.s32 %v2730
      %v2732 = vcvt.f32.s32 %v2726
      %v2733 = vshll.u32 %v2732, 16
      %v2734 = vadd.s32 %v2733, %v2731
      %v2735 = vsel %vm791, %v2652, 2147483647
      %v2736 = vand.u32 %v2735, 65535
      %v2737 = vshra.s32 %v2735, 16
      %v2738 = vcvt.s32.f32 %v2736
      %v2739 = vcvt.s32.f32 %v2737
      %2740 = vmin.xlane.f32.xlu0 %v2739
      %v2741 = vpop.xlane.xlu0 %2740
      %vm2742 = vcmp.eq.f32.partialorder %v2739, %v2741
      %v2743 = vsel %vm2742, %v2738, inf
      %2744 = vmin.xlane.f32.xlu0 %v2743
      %v2745 = vpop.xlane.xlu0 %2744
      %v2746 = vcvt.f32.s32 %v2745
      %v2747 = vcvt.f32.s32 %v2741
      %v2748 = vshll.u32 %v2747, 16
      %v2749 = vadd.s32 %v2748, %v2746
      %v2750 = vsel %vm791, %v2653, 2147483647
      %v2751 = vand.u32 %v2750, 65535
      %v2752 = vshra.s32 %v2750, 16
      %v2753 = vcvt.s32.f32 %v2751
      %v2754 = vcvt.s32.f32 %v2752
      %2755 = vmin.xlane.f32.xlu0 %v2754
      %v2756 = vpop.xlane.xlu0 %2755
      %vm2757 = vcmp.eq.f32.partialorder %v2754, %v2756
      %v2758 = vsel %vm2757, %v2753, inf
      %2759 = vmin.xlane.f32.xlu0 %v2758
      %v2760 = vpop.xlane.xlu0 %2759
      %v2761 = vcvt.f32.s32 %v2760
      %v2762 = vcvt.f32.s32 %v2756
      %v2763 = vshll.u32 %v2762, 16
      %v2764 = vadd.s32 %v2763, %v2761
      %v2765 = vsel %vm791, %v2654, 2147483647
      %v2766 = vand.u32 %v2765, 65535
      %v2767 = vshra.s32 %v2765, 16
      %v2768 = vcvt.s32.f32 %v2766
      %v2769 = vcvt.s32.f32 %v2767
      %2770 = vmin.xlane.f32.xlu0 %v2769
      %v2771 = vpop.xlane.xlu0 %2770
      %vm2772 = vcmp.eq.f32.partialorder %v2769, %v2771
      %v2773 = vsel %vm2772, %v2768, inf
      %2774 = vmin.xlane.f32.xlu0 %v2773
      %v2775 = vpop.xlane.xlu0 %2774
      %v2776 = vcvt.f32.s32 %v2775
      %v2777 = vcvt.f32.s32 %v2771
      %v2778 = vshll.u32 %v2777, 16
      %v2779 = vadd.s32 %v2778, %v2776
      %v2780 = vsel %vm791, %v2655, 2147483647
      %v2781 = vand.u32 %v2780, 65535
      %v2782 = vshra.s32 %v2780, 16
      %v2783 = vcvt.s32.f32 %v2781
      %v2784 = vcvt.s32.f32 %v2782
      %2785 = vmin.xlane.f32.xlu0 %v2784
      %v2786 = vpop.xlane.xlu0 %2785
      %vm2787 = vcmp.eq.f32.partialorder %v2784, %v2786
      %v2788 = vsel %vm2787, %v2783, inf
      %2789 = vmin.xlane.f32.xlu0 %v2788
      %v2790 = vpop.xlane.xlu0 %2789
      %v2791 = vcvt.f32.s32 %v2790
      %v2792 = vcvt.f32.s32 %v2786
      %v2793 = vshll.u32 %v2792, 16
      %v2794 = vadd.s32 %v2793, %v2791
      %v2795 = vsel %vm791, %v2656, 2147483647
      %v2796 = vand.u32 %v2795, 65535
      %v2797 = vshra.s32 %v2795, 16
      %v2798 = vcvt.s32.f32 %v2796
      %v2799 = vcvt.s32.f32 %v2797
      %2800 = vmin.xlane.f32.xlu0 %v2799
      %v2801 = vpop.xlane.xlu0 %2800
      %vm2802 = vcmp.eq.f32.partialorder %v2799, %v2801
      %v2803 = vsel %vm2802, %v2798, inf
      %2804 = vmin.xlane.f32.xlu0 %v2803
      %v2805 = vpop.xlane.xlu0 %2804
      %v2806 = vcvt.f32.s32 %v2805
      %v2807 = vcvt.f32.s32 %v2801
      %v2808 = vshll.u32 %v2807, 16
      %v2809 = vadd.s32 %v2808, %v2806
      %v2810 = vsel %vm791, %v2657, 2147483647
      %v2811 = vand.u32 %v2810, 65535
      %v2812 = vshra.s32 %v2810, 16
      %v2813 = vcvt.s32.f32 %v2811
      %v2814 = vcvt.s32.f32 %v2812
      %2815 = vmin.xlane.f32.xlu0 %v2814
      %v2816 = vpop.xlane.xlu0 %2815
      %vm2817 = vcmp.eq.f32.partialorder %v2814, %v2816
      %v2818 = vsel %vm2817, %v2813, inf
      %2819 = vmin.xlane.f32.xlu0 %v2818
      %v2820 = vpop.xlane.xlu0 %2819
      %v2821 = vcvt.f32.s32 %v2820
      %v2822 = vcvt.f32.s32 %v2816
      %v2823 = vshll.u32 %v2822, 16
      %v2824 = vadd.s32 %v2823, %v2821
      %v2825 = vsel %vm791, %v2658, 2147483647
      %v2826 = vand.u32 %v2825, 65535
      %v2827 = vshra.s32 %v2825, 16
      %v2828 = vcvt.s32.f32 %v2826
      %v2829 = vcvt.s32.f32 %v2827
      %2830 = vmin.xlane.f32.xlu0 %v2829
      %v2831 = vpop.xlane.xlu0 %2830
      %vm2832 = vcmp.eq.f32.partialorder %v2829, %v2831
      %v2833 = vsel %vm2832, %v2828, inf
      %2834 = vmin.xlane.f32.xlu0 %v2833
      %v2835 = vpop.xlane.xlu0 %2834
      %v2836 = vcvt.f32.s32 %v2835
      %v2837 = vcvt.f32.s32 %v2831
      %v2838 = vshll.u32 %v2837, 16
      %v2839 = vadd.s32 %v2838, %v2836
      %v2840 = vsel %vm791, %v2659, 2147483647
      %v2841 = vand.u32 %v2840, 65535
      %v2842 = vshra.s32 %v2840, 16
      %v2843 = vcvt.s32.f32 %v2841
      %v2844 = vcvt.s32.f32 %v2842
      %2845 = vmin.xlane.f32.xlu0 %v2844
      %v2846 = vpop.xlane.xlu0 %2845
      %vm2847 = vcmp.eq.f32.partialorder %v2844, %v2846
      %v2848 = vsel %vm2847, %v2843, inf
      %2849 = vmin.xlane.f32.xlu0 %v2848
      %v2850 = vpop.xlane.xlu0 %2849
      %v2851 = vcvt.f32.s32 %v2850
      %v2852 = vcvt.f32.s32 %v2846
      %v2853 = vshll.u32 %v2852, 16
      %v2854 = vadd.s32 %v2853, %v2851
      %v2855 = vsub.f32 %v2311, %v2311
      %v2856 = vsub.f32 %v2314, %v2314
      %v2857 = vsub.f32 %v2317, %v2317
      %v2858 = vsub.f32 %v2320, %v2320
      %v2859 = vsub.f32 %v2323, %v2323
      %v2860 = vsub.f32 %v2326, %v2326
      %v2861 = vsub.f32 %v2329, %v2329
      %v2862 = vsub.f32 %v2332, %v2332
      %v2863 = vsub.f32 %v2335, %v2335
      %v2864 = vsub.f32 %v2338, %v2338
      %v2865 = vsub.f32 %v2341, %v2341
      %v2866 = vsub.f32 %v2344, %v2344
      %v2867 = vsub.f32 %v2347, %v2347
      %v2868 = vmul.f32 %v2855, 1.442695
      %v2869 = vpow.pop %v2868
      %v2870 = vmul.f32 %v2856, 1.442695
      %v2871 = vpow.pop %v2870
      %v2872 = vmul.f32 %v2857, 1.442695
      %v2873 = vpow.pop %v2872
      %v2874 = vmul.f32 %v2858, 1.442695
      %v2875 = vpow.pop %v2874
      %v2876 = vmul.f32 %v2859, 1.442695
      %v2877 = vpow.pop %v2876
      %v2878 = vmul.f32 %v2860, 1.442695
      %v2879 = vpow.pop %v2878
      %v2880 = vmul.f32 %v2861, 1.442695
      %v2881 = vpow.pop %v2880
      %v2882 = vmul.f32 %v2862, 1.442695
      %v2883 = vpow.pop %v2882
      %v2884 = vmul.f32 %v2863, 1.442695
      %v2885 = vpow.pop %v2884
      %v2886 = vmul.f32 %v2864, 1.442695
      %v2887 = vpow.pop %v2886
      %v2888 = vmul.f32 %v2865, 1.442695
      %v2889 = vpow.pop %v2888
      %v2890 = vmul.f32 %v2866, 1.442695
      %v2891 = vpow.pop %v2890
      %v2892 = vmul.f32 %v2867, 1.442695
      %v2893 = vpow.pop %v2892
      %v2894 = vsub.f32 %v2597, %v2311
      %v2895 = vsub.f32 %v2600, %v2314
      %v2896 = vsub.f32 %v2603, %v2317
      %v2897 = vsub.f32 %v2606, %v2320
      %v2898 = vsub.f32 %v2609, %v2323
      %v2899 = vsub.f32 %v2612, %v2326
      %v2900 = vsub.f32 %v2615, %v2329
      %v2901 = vsub.f32 %v2618, %v2332
      %v2902 = vsub.f32 %v2621, %v2335
      %v2903 = vsub.f32 %v2624, %v2338
      %v2904 = vsub.f32 %v2627, %v2341
      %v2905 = vsub.f32 %v2630, %v2344
      %v2906 = vsub.f32 %v2633, %v2347
      %v2907 = vmul.f32 %v2894, 1.442695
      %v2908 = vpow.pop %v2907
      %v2909 = vmul.f32 %v2895, 1.442695
      %v2910 = vpow.pop %v2909
      %v2911 = vmul.f32 %v2896, 1.442695
      %v2912 = vpow.pop %v2911
      %v2913 = vmul.f32 %v2897, 1.442695
      %v2914 = vpow.pop %v2913
      %v2915 = vmul.f32 %v2898, 1.442695
      %v2916 = vpow.pop %v2915
      %v2917 = vmul.f32 %v2899, 1.442695
      %v2918 = vpow.pop %v2917
      %v2919 = vmul.f32 %v2900, 1.442695
      %v2920 = vpow.pop %v2919
      %v2921 = vmul.f32 %v2901, 1.442695
      %v2922 = vpow.pop %v2921
      %v2923 = vmul.f32 %v2902, 1.442695
      %v2924 = vpow.pop %v2923
      %v2925 = vmul.f32 %v2903, 1.442695
      %v2926 = vpow.pop %v2925
      %v2927 = vmul.f32 %v2904, 1.442695
      %v2928 = vpow.pop %v2927
      %v2929 = vmul.f32 %v2905, 1.442695
      %v2930 = vpow.pop %v2929
      %v2931 = vmul.f32 %v2906, 1.442695
      %v2932 = vpow.pop %v2931
      %v2933 = vadd.f32 %v2869, %v2908
      %v2934 = vadd.f32 %v2871, %v2910
      %v2935 = vadd.f32 %v2873, %v2912
      %v2936 = vadd.f32 %v2875, %v2914
      %v2937 = vadd.f32 %v2877, %v2916
      %v2938 = vadd.f32 %v2879, %v2918
      %v2939 = vadd.f32 %v2881, %v2920
      %v2940 = vadd.f32 %v2883, %v2922
      %v2941 = vadd.f32 %v2885, %v2924
      %v2942 = vadd.f32 %v2887, %v2926
      %v2943 = vadd.f32 %v2889, %v2928
      %v2944 = vadd.f32 %v2891, %v2930
      %v2945 = vadd.f32 %v2893, %v2932
      %v2946 = vrcp.pop %v2933
      %v2947 = vmul.f32 1.0, %v2946
      %v2948 = vrcp.pop %v2934
      %v2949 = vmul.f32 1.0, %v2948
      %v2950 = vrcp.pop %v2935
      %v2951 = vmul.f32 1.0, %v2950
      %v2952 = vrcp.pop %v2936
      %v2953 = vmul.f32 1.0, %v2952
      %v2954 = vrcp.pop %v2937
      %v2955 = vmul.f32 1.0, %v2954
      %v2956 = vrcp.pop %v2938
      %v2957 = vmul.f32 1.0, %v2956
      %v2958 = vrcp.pop %v2939
      %v2959 = vmul.f32 1.0, %v2958
      %v2960 = vrcp.pop %v2940
      %v2961 = vmul.f32 1.0, %v2960
      %v2962 = vrcp.pop %v2941
      %v2963 = vmul.f32 1.0, %v2962
      %v2964 = vrcp.pop %v2942
      %v2965 = vmul.f32 1.0, %v2964
      %v2966 = vrcp.pop %v2943
      %v2967 = vmul.f32 1.0, %v2966
      %v2968 = vrcp.pop %v2944
      %v2969 = vmul.f32 1.0, %v2968
      %v2970 = vrcp.pop %v2945
      %v2971 = vmul.f32 1.0, %v2970
      %v2972 = vmul.f32 %v2869, %v2947
      %v2973 = vmul.f32 %v2871, %v2949
      %v2974 = vmul.f32 %v2873, %v2951
      %v2975 = vmul.f32 %v2875, %v2953
      %v2976 = vmul.f32 %v2877, %v2955
      %v2977 = vmul.f32 %v2879, %v2957
      %v2978 = vmul.f32 %v2881, %v2959
      %v2979 = vmul.f32 %v2883, %v2961
      %v2980 = vmul.f32 %v2885, %v2963
      %v2981 = vmul.f32 %v2887, %v2965
      %v2982 = vmul.f32 %v2889, %v2967
      %v2983 = vmul.f32 %v2891, %v2969
      %v2984 = vmul.f32 %v2893, %v2971
      %v2985 = vsel %vm2569, 1, 0
      %v2986 = vsel %vm2570, 1, 0
      %v2987 = vsel %vm2571, 1, 0
      %v2988 = vsel %vm2572, 1, 0
      %v2989 = vsel %vm2573, 1, 0
      %v2990 = vsel %vm2574, 1, 0
      %v2991 = vsel %vm2575, 1, 0
      %v2992 = vsel %vm2576, 1, 0
      %v2993 = vsel %vm2577, 1, 0
      %v2994 = vsel %vm2578, 1, 0
      %v2995 = vsel %vm2579, 1, 0
      %v2996 = vsel %vm2580, 1, 0
      %v2997 = vsel %vm2581, 1, 0
      %v2998 = vcvt.s32.f32 %v2985
      %v2999 = vcvt.s32.f32 %v2986
      %v3000 = vcvt.s32.f32 %v2987
      %v3001 = vcvt.s32.f32 %v2988
      %v3002 = vcvt.s32.f32 %v2989
      %v3003 = vcvt.s32.f32 %v2990
      %v3004 = vcvt.s32.f32 %v2991
      %v3005 = vcvt.s32.f32 %v2992
      %v3006 = vcvt.s32.f32 %v2993
      %v3007 = vcvt.s32.f32 %v2994
      %v3008 = vcvt.s32.f32 %v2995
      %v3009 = vcvt.s32.f32 %v2996
      %v3010 = vcvt.s32.f32 %v2997
      %v3011 = vmul.f32 %v2972, %v2998
      %v3012 = vmul.f32 %v2973, %v2999
      %v3013 = vmul.f32 %v2974, %v3000
      %v3014 = vmul.f32 %v2975, %v3001
      %v3015 = vmul.f32 %v2976, %v3002
      %v3016 = vmul.f32 %v2977, %v3003
      %v3017 = vmul.f32 %v2978, %v3004
      %v3018 = vmul.f32 %v2979, %v3005
      %v3019 = vmul.f32 %v2980, %v3006
      %v3020 = vmul.f32 %v2981, %v3007
      %v3021 = vmul.f32 %v2982, %v3008
      %v3022 = vmul.f32 %v2983, %v3009
      %v3023 = vmul.f32 %v2984, %v3010
      %v3024 = vadd.f32 %v3011, 0.0
      %v3025 = vadd.f32 %v3012, 0.0
      %v3026 = vadd.f32 %v3013, 0.0
      %v3027 = vadd.f32 %v3014, 0.0
      %v3028 = vadd.f32 %v3015, 0.0
      %v3029 = vadd.f32 %v3016, 0.0
      %v3030 = vadd.f32 %v3017, 0.0
      %v3031 = vadd.f32 %v3018, 0.0
      %v3032 = vadd.f32 %v3019, 0.0
      %v3033 = vadd.f32 %v3020, 0.0
      %v3034 = vadd.f32 %v3021, 0.0
      %v3035 = vadd.f32 %v3022, 0.0
      %v3036 = vadd.f32 %v3023, 0.0
      %v3037 = vmul.f32 %v2908, %v2947
      %v3038 = vmul.f32 %v2910, %v2949
      %v3039 = vmul.f32 %v2912, %v2951
      %v3040 = vmul.f32 %v2914, %v2953
      %v3041 = vmul.f32 %v2916, %v2955
      %v3042 = vmul.f32 %v2918, %v2957
      %v3043 = vmul.f32 %v2920, %v2959
      %v3044 = vmul.f32 %v2922, %v2961
      %v3045 = vmul.f32 %v2924, %v2963
      %v3046 = vmul.f32 %v2926, %v2965
      %v3047 = vmul.f32 %v2928, %v2967
      %v3048 = vmul.f32 %v2930, %v2969
      %v3049 = vmul.f32 %v2932, %v2971
      %vm3050 = vcmp.eq.s32.totalorder %v790, %v2674
      %vm3051 = vcmp.eq.s32.totalorder %v790, %v2689
      %vm3052 = vcmp.eq.s32.totalorder %v790, %v2704
      %vm3053 = vcmp.eq.s32.totalorder %v790, %v2719
      %vm3054 = vcmp.eq.s32.totalorder %v790, %v2734
      %vm3055 = vcmp.eq.s32.totalorder %v790, %v2749
      %vm3056 = vcmp.eq.s32.totalorder %v790, %v2764
      %vm3057 = vcmp.eq.s32.totalorder %v790, %v2779
      %vm3058 = vcmp.eq.s32.totalorder %v790, %v2794
      %vm3059 = vcmp.eq.s32.totalorder %v790, %v2809
      %vm3060 = vcmp.eq.s32.totalorder %v790, %v2824
      %vm3061 = vcmp.eq.s32.totalorder %v790, %v2839
      %vm3062 = vcmp.eq.s32.totalorder %v790, %v2854
      %v3063 = vsel %vm3050, 1, 0
      %v3064 = vsel %vm3051, 1, 0
      %v3065 = vsel %vm3052, 1, 0
      %v3066 = vsel %vm3053, 1, 0
      %v3067 = vsel %vm3054, 1, 0
      %v3068 = vsel %vm3055, 1, 0
      %v3069 = vsel %vm3056, 1, 0
      %v3070 = vsel %vm3057, 1, 0
      %v3071 = vsel %vm3058, 1, 0
      %v3072 = vsel %vm3059, 1, 0
      %v3073 = vsel %vm3060, 1, 0
      %v3074 = vsel %vm3061, 1, 0
      %v3075 = vsel %vm3062, 1, 0
      %v3076 = vcvt.s32.f32 %v3063
      %v3077 = vcvt.s32.f32 %v3064
      %v3078 = vcvt.s32.f32 %v3065
      %v3079 = vcvt.s32.f32 %v3066
      %v3080 = vcvt.s32.f32 %v3067
      %v3081 = vcvt.s32.f32 %v3068
      %v3082 = vcvt.s32.f32 %v3069
      %v3083 = vcvt.s32.f32 %v3070
      %v3084 = vcvt.s32.f32 %v3071
      %v3085 = vcvt.s32.f32 %v3072
      %v3086 = vcvt.s32.f32 %v3073
      %v3087 = vcvt.s32.f32 %v3074
      %v3088 = vcvt.s32.f32 %v3075
      %v3089 = vmul.f32 %v3037, %v3076
      %v3090 = vmul.f32 %v3038, %v3077
      %v3091 = vmul.f32 %v3039, %v3078
      %v3092 = vmul.f32 %v3040, %v3079
      %v3093 = vmul.f32 %v3041, %v3080
      %v3094 = vmul.f32 %v3042, %v3081
      %v3095 = vmul.f32 %v3043, %v3082
      %v3096 = vmul.f32 %v3044, %v3083
      %v3097 = vmul.f32 %v3045, %v3084
      %v3098 = vmul.f32 %v3046, %v3085
      %v3099 = vmul.f32 %v3047, %v3086
      %v3100 = vmul.f32 %v3048, %v3087
      %v3101 = vmul.f32 %v3049, %v3088
      %v3102 = vadd.f32 %v3024, %v3089
      %v3103 = vadd.f32 %v3025, %v3090
      %v3104 = vadd.f32 %v3026, %v3091
      %v3105 = vadd.f32 %v3027, %v3092
      %v3106 = vadd.f32 %v3028, %v3093
      %v3107 = vadd.f32 %v3029, %v3094
      %v3108 = vadd.f32 %v3030, %v3095
      %v3109 = vadd.f32 %v3031, %v3096
      %v3110 = vadd.f32 %v3032, %v3097
      %v3111 = vadd.f32 %v3033, %v3098
      %v3112 = vadd.f32 %v3034, %v3099
      %v3113 = vadd.f32 %v3035, %v3100
      %v3114 = vadd.f32 %v3036, %v3101
      %v3116 = vlaneseq
      %v3117 = vshrl.u32 %v3116, 7
      %v3118 = vsub.s32 0, %v3117
      %v3119 = vrot.slane %v2099, %v3118
      %3121 = vmatprep.subr.mxu0 0.0
      %3122 = vmatpush1.msra.mxu0 %v2095
      %3123 = vmatprep.subr.mxu0 0.0
      %3124 = vmatpush1.msra.mxu0 %v2096
      %3125 = vmatprep.subr.mxu0 0.0
      %3126 = vmatpush1.msra.mxu0 %v2097
      %3127 = vmatprep.subr.mxu0 0.0
      %3128 = vmatpush1.msra.mxu0 %v2098
      %3129 = vmatprep.subr.mxu0 0.0
      %3130 = vmatpush1.msra.mxu0 0.0
      %3131 = vmatprep.subr.mxu0 0.0
      %3132 = vmatpush1.msra.mxu0 0.0
      %3133 = vmatprep.subr.mxu0 0.0
      %3134 = vmatpush1.msra.mxu0 0.0
      %3135 = vmatprep.subr.mxu0 0.0
      %3136 = vmatpush1.msra.mxu0 0.0
      %3137 = vmatprep.subr.mxu0 0.0
      %3138 = vmatpush1.msra.mxu0 0.0
      %3139 = vmatprep.subr.mxu0 0.0
      %3140 = vmatpush1.msra.mxu0 0.0
      %3141 = vmatprep.subr.mxu0 0.0
      %3142 = vmatpush1.msra.mxu0 0.0
      %3143 = vmatprep.subr.mxu0 0.0
      %3144 = vmatpush1.msra.mxu0 0.0
      %3145 = vmatprep.subr.mxu0 0.0
      %3146 = vmatpush1.msra.mxu0 0.0
      %3147 = vmatprep.subr.mxu0 0.0
      %3148 = vmatpush1.msra.mxu0 0.0
      %3149 = vmatprep.subr.mxu0 0.0
      %3150 = vmatpush1.msra.mxu0 0.0
      %3151 = vmatprep.subr.mxu0 0.0
      %3152 = vmatpush1.msra.mxu0 0.0
      %3153 = vmatprep.subr.mxu0 0.0
      %3154 = vmatpush1.msra.mxu0 0.0
      %3155 = vmatprep.subr.mxu0 0.0
      %3156 = vmatpush1.msra.mxu0 0.0
      %3157 = vmatprep.subr.mxu0 0.0
      %3158 = vmatpush1.msra.mxu0 0.0
      %3159 = vmatprep.subr.mxu0 0.0
      %3160 = vmatpush1.msra.mxu0 0.0
      %3161 = vmatprep.subr.mxu0 0.0
      %3162 = vmatpush1.msra.mxu0 0.0
      %3163 = vmatprep.subr.mxu0 0.0
      %3164 = vmatpush1.msra.mxu0 0.0
      %3165 = vmatprep.subr.mxu0 0.0
      %3166 = vmatpush1.msra.mxu0 0.0
      %3167 = vmatprep.subr.mxu0 0.0
      %3168 = vmatpush1.msra.mxu0 0.0
      %3169 = vmatprep.subr.mxu0 0.0
      %3170 = vmatpush1.msra.mxu0 0.0
      %3171 = vmatprep.subr.mxu0 0.0
      %3172 = vmatpush1.msra.mxu0 0.0
      %3173 = vmatprep.subr.mxu0 0.0
      %3174 = vmatpush1.msra.mxu0 0.0
      %3175 = vmatprep.subr.mxu0 0.0
      %3176 = vmatpush1.msra.mxu0 0.0
      %3177 = vmatprep.subr.mxu0 0.0
      %3178 = vmatpush1.msra.mxu0 0.0
      %3179 = vmatprep.subr.mxu0 0.0
      %3180 = vmatpush1.msra.mxu0 0.0
      %3181 = vmatprep.subr.mxu0 0.0
      %3182 = vmatpush1.msra.mxu0 0.0
      %3183 = vmatprep.subr.mxu0 0.0
      %3184 = vmatpush1.msra.mxu0 0.0
      %3185 = vmatprep.mubr.f32.mxu0 0.0
      %3186 = vmatmul.mubr.f32.gmra.mrb[0].mxu0 %v2141
      %v3187 = vpop.f32.mrb[0].mxu0
      %v3188 = vadd.f32 %v3119, %v3187
      %v3189 = vpop.f32.mrb[0].mxu0
      %3190 = vmatprep.mubr.f32.mxu0 0.0
      %3191 = vmatmul.mubr.f32.gmra.mrb[0].mxu0 %v2144
      %v3192 = vpop.f32.mrb[0].mxu0
      %v3193 = vadd.f32 %v3119, %v3192
      %v3194 = vpop.f32.mrb[0].mxu0
      %3195 = vmatprep.mubr.f32.mxu0 0.0
      %3196 = vmatmul.mubr.f32.gmra.mrb[0].mxu0 %v2147
      %v3197 = vpop.f32.mrb[0].mxu0
      %v3198 = vadd.f32 %v3119, %v3197
      %v3199 = vpop.f32.mrb[0].mxu0
      %3200 = vmatprep.mubr.f32.mxu0 0.0
      %3201 = vmatmul.mubr.f32.gmra.mrb[0].mxu0 %v2150
      %v3202 = vpop.f32.mrb[0].mxu0
      %v3203 = vadd.f32 %v3119, %v3202
      %v3204 = vpop.f32.mrb[0].mxu0
      %3205 = vmatprep.mubr.f32.mxu0 0.0
      %3206 = vmatmul.mubr.f32.gmra.mrb[0].mxu0 %v2153
      %v3207 = vpop.f32.mrb[0].mxu0
      %v3208 = vadd.f32 %v3119, %v3207
      %v3209 = vpop.f32.mrb[0].mxu0
      %3210 = vmatprep.mubr.f32.mxu0 0.0
      %3211 = vmatmul.mubr.f32.gmra.mrb[0].mxu0 %v2156
      %v3212 = vpop.f32.mrb[0].mxu0
      %v3213 = vadd.f32 %v3119, %v3212
      %v3214 = vpop.f32.mrb[0].mxu0
      %3215 = vmatprep.mubr.f32.mxu0 0.0
      %3216 = vmatmul.mubr.f32.gmra.mrb[0].mxu0 %v2159
      %v3217 = vpop.f32.mrb[0].mxu0
      %v3218 = vadd.f32 %v3119, %v3217
      %v3219 = vpop.f32.mrb[0].mxu0
      %3220 = vmatprep.mubr.f32.mxu0 0.0
      %3221 = vmatmul.mubr.f32.gmra.mrb[0].mxu0 %v2162
      %v3222 = vpop.f32.mrb[0].mxu0
      %v3223 = vadd.f32 %v3119, %v3222
      %v3224 = vpop.f32.mrb[0].mxu0
      %3225 = vmatprep.mubr.f32.mxu0 0.0
      %3226 = vmatmul.mubr.f32.gmra.mrb[0].mxu0 %v2165
      %v3227 = vpop.f32.mrb[0].mxu0
      %v3228 = vadd.f32 %v3119, %v3227
      %v3229 = vpop.f32.mrb[0].mxu0
      %3230 = vmatprep.mubr.f32.mxu0 0.0
      %3231 = vmatmul.mubr.f32.gmra.mrb[0].mxu0 %v2168
      %v3232 = vpop.f32.mrb[0].mxu0
      %v3233 = vadd.f32 %v3119, %v3232
      %v3234 = vpop.f32.mrb[0].mxu0
      %3235 = vmatprep.mubr.f32.mxu0 0.0
      %3236 = vmatmul.mubr.f32.gmra.mrb[0].mxu0 %v2171
      %v3237 = vpop.f32.mrb[0].mxu0
      %v3238 = vadd.f32 %v3119, %v3237
      %v3239 = vpop.f32.mrb[0].mxu0
      %3240 = vmatprep.mubr.f32.mxu0 0.0
      %3241 = vmatmul.mubr.f32.gmra.mrb[0].mxu0 %v2174
      %v3242 = vpop.f32.mrb[0].mxu0
      %v3243 = vadd.f32 %v3119, %v3242
      %v3244 = vpop.f32.mrb[0].mxu0
      %3245 = vmatprep.mubr.f32.mxu0 0.0
      %3246 = vmatmul.mubr.f32.gmra.mrb[0].mxu0 %v2177
      %v3247 = vpop.f32.mrb[0].mxu0
      %v3248 = vadd.f32 %v3119, %v3247
      %v3249 = vpop.f32.mrb[0].mxu0
      %3250 = vdwg.mxu0
      %v3252 = vsel %vm791, %v3102, 0
      %v3255 = vsel %vm791, %v3103, 0
      %v3258 = vsel %vm791, %v3104, 0
      %v3261 = vsel %vm791, %v3105, 0
      %v3264 = vsel %vm791, %v3106, 0
      %v3267 = vsel %vm791, %v3107, 0
      %v3270 = vsel %vm791, %v3108, 0
      %v3273 = vsel %vm791, %v3109, 0
      %v3276 = vsel %vm791, %v3110, 0
      %v3279 = vsel %vm791, %v3111, 0
      %v3282 = vsel %vm791, %v3112, 0
      %v3285 = vsel %vm791, %v3113, 0
      %v3288 = vsel %vm791, %v3114, 0
      %v3291 = vsel %vm1773, %v2100, 0
      %3293 = vmatprep.subr.mxu0 0.0
      %3294 = vmatpush1.msra.mxu0 %v3291
      %3295 = vmatprep.subr.mxu0 0.0
      %3296 = vmatpush1.msra.mxu0 0.0
      %3297 = vmatprep.subr.mxu0 0.0
      %3298 = vmatpush1.msra.mxu0 0.0
      %3299 = vmatprep.subr.mxu0 0.0
      %3300 = vmatpush1.msra.mxu0 0.0
      %3301 = vmatprep.subr.mxu0 0.0
      %3302 = vmatpush1.msra.mxu0 0.0
      %3303 = vmatprep.subr.mxu0 0.0
      %3304 = vmatpush1.msra.mxu0 0.0
      %3305 = vmatprep.subr.mxu0 0.0
      %3306 = vmatpush1.msra.mxu0 0.0
      %3307 = vmatprep.subr.mxu0 0.0
      %3308 = vmatpush1.msra.mxu0 0.0
      %3309 = vmatprep.subr.mxu0 0.0
      %3310 = vmatpush1.msra.mxu0 0.0
      %3311 = vmatprep.subr.mxu0 0.0
      %3312 = vmatpush1.msra.mxu0 0.0
      %3313 = vmatprep.subr.mxu0 0.0
      %3314 = vmatpush1.msra.mxu0 0.0
      %3315 = vmatprep.subr.mxu0 0.0
      %3316 = vmatpush1.msra.mxu0 0.0
      %3317 = vmatprep.subr.mxu0 0.0
      %3318 = vmatpush1.msra.mxu0 0.0
      %3319 = vmatprep.subr.mxu0 0.0
      %3320 = vmatpush1.msra.mxu0 0.0
      %3321 = vmatprep.subr.mxu0 0.0
      %3322 = vmatpush1.msra.mxu0 0.0
      %3323 = vmatprep.subr.mxu0 0.0
      %3324 = vmatpush1.msra.mxu0 0.0
      %3325 = vmatprep.subr.mxu0 0.0
      %3326 = vmatpush1.msra.mxu0 0.0
      %3327 = vmatprep.subr.mxu0 0.0
      %3328 = vmatpush1.msra.mxu0 0.0
      %3329 = vmatprep.subr.mxu0 0.0
      %3330 = vmatpush1.msra.mxu0 0.0
      %3331 = vmatprep.subr.mxu0 0.0
      %3332 = vmatpush1.msra.mxu0 0.0
      %3333 = vmatprep.subr.mxu0 0.0
      %3334 = vmatpush1.msra.mxu0 0.0
      %3335 = vmatprep.subr.mxu0 0.0
      %3336 = vmatpush1.msra.mxu0 0.0
      %3337 = vmatprep.subr.mxu0 0.0
      %3338 = vmatpush1.msra.mxu0 0.0
      %3339 = vmatprep.subr.mxu0 0.0
      %3340 = vmatpush1.msra.mxu0 0.0
      %3341 = vmatprep.subr.mxu0 0.0
      %3342 = vmatpush1.msra.mxu0 0.0
      %3343 = vmatprep.subr.mxu0 0.0
      %3344 = vmatpush1.msra.mxu0 0.0
      %3345 = vmatprep.subr.mxu0 0.0
      %3346 = vmatpush1.msra.mxu0 0.0
      %3347 = vmatprep.subr.mxu0 0.0
      %3348 = vmatpush1.msra.mxu0 0.0
      %3349 = vmatprep.subr.mxu0 0.0
      %3350 = vmatpush1.msra.mxu0 0.0
      %3351 = vmatprep.subr.mxu0 0.0
      %3352 = vmatpush1.msra.mxu0 0.0
      %3353 = vmatprep.subr.mxu0 0.0
      %3354 = vmatpush1.msra.mxu0 0.0
      %3355 = vmatprep.subr.mxu0 0.0
      %3356 = vmatpush1.msra.mxu0 0.0
      %3357 = vmatprep.mubr.f32.mxu0 0.0
      %3358 = vmatmul.mubr.f32.gmra.mrb[0].mxu0 %v3252
      %v3359 = vpop.f32.mrb[0].mxu0
      %v3360 = vadd.f32 0.0, %v3359
      %v3361 = vpop.f32.mrb[0].mxu0
      %3362 = vmatprep.mubr.f32.mxu0 0.0
      %3363 = vmatmul.mubr.f32.gmra.mrb[0].mxu0 %v3255
      %v3364 = vpop.f32.mrb[0].mxu0
      %v3365 = vadd.f32 0.0, %v3364
      %v3366 = vpop.f32.mrb[0].mxu0
      %3367 = vmatprep.mubr.f32.mxu0 0.0
      %3368 = vmatmul.mubr.f32.gmra.mrb[0].mxu0 %v3258
      %v3369 = vpop.f32.mrb[0].mxu0
      %v3370 = vadd.f32 0.0, %v3369
      %v3371 = vpop.f32.mrb[0].mxu0
      %3372 = vmatprep.mubr.f32.mxu0 0.0
      %3373 = vmatmul.mubr.f32.gmra.mrb[0].mxu0 %v3261
      %v3374 = vpop.f32.mrb[0].mxu0
      %v3375 = vadd.f32 0.0, %v3374
      %v3376 = vpop.f32.mrb[0].mxu0
      %3377 = vmatprep.mubr.f32.mxu0 0.0
      %3378 = vmatmul.mubr.f32.gmra.mrb[0].mxu0 %v3264
      %v3379 = vpop.f32.mrb[0].mxu0
      %v3380 = vadd.f32 0.0, %v3379
      %v3381 = vpop.f32.mrb[0].mxu0
      %3382 = vmatprep.mubr.f32.mxu0 0.0
      %3383 = vmatmul.mubr.f32.gmra.mrb[0].mxu0 %v3267
      %v3384 = vpop.f32.mrb[0].mxu0
      %v3385 = vadd.f32 0.0, %v3384
      %v3386 = vpop.f32.mrb[0].mxu0
      %3387 = vmatprep.mubr.f32.mxu0 0.0
      %3388 = vmatmul.mubr.f32.gmra.mrb[0].mxu0 %v3270
      %v3389 = vpop.f32.mrb[0].mxu0
      %v3390 = vadd.f32 0.0, %v3389
      %v3391 = vpop.f32.mrb[0].mxu0
      %3392 = vmatprep.mubr.f32.mxu0 0.0
      %3393 = vmatmul.mubr.f32.gmra.mrb[0].mxu0 %v3273
      %v3394 = vpop.f32.mrb[0].mxu0
      %v3395 = vadd.f32 0.0, %v3394
      %v3396 = vpop.f32.mrb[0].mxu0
      %3397 = vmatprep.mubr.f32.mxu0 0.0
      %3398 = vmatmul.mubr.f32.gmra.mrb[0].mxu0 %v3276
      %v3399 = vpop.f32.mrb[0].mxu0
      %v3400 = vadd.f32 0.0, %v3399
      %v3401 = vpop.f32.mrb[0].mxu0
      %3402 = vmatprep.mubr.f32.mxu0 0.0
      %3403 = vmatmul.mubr.f32.gmra.mrb[0].mxu0 %v3279
      %v3404 = vpop.f32.mrb[0].mxu0
      %v3405 = vadd.f32 0.0, %v3404
      %v3406 = vpop.f32.mrb[0].mxu0
      %3407 = vmatprep.mubr.f32.mxu0 0.0
      %3408 = vmatmul.mubr.f32.gmra.mrb[0].mxu0 %v3282
      %v3409 = vpop.f32.mrb[0].mxu0
      %v3410 = vadd.f32 0.0, %v3409
      %v3411 = vpop.f32.mrb[0].mxu0
      %3412 = vmatprep.mubr.f32.mxu0 0.0
      %3413 = vmatmul.mubr.f32.gmra.mrb[0].mxu0 %v3285
      %v3414 = vpop.f32.mrb[0].mxu0
      %v3415 = vadd.f32 0.0, %v3414
      %v3416 = vpop.f32.mrb[0].mxu0
      %3417 = vmatprep.mubr.f32.mxu0 0.0
      %3418 = vmatmul.mubr.f32.gmra.mrb[0].mxu0 %v3288
      %v3419 = vpop.f32.mrb[0].mxu0
      %v3420 = vadd.f32 0.0, %v3419
      %v3421 = vpop.f32.mrb[0].mxu0
      %3422 = vdwg.mxu0
      %v3423 = vmul.f32 %v3360, %v3188
      %v3424 = vmul.f32 %v3365, %v3193
      %v3425 = vmul.f32 %v3370, %v3198
      %v3426 = vmul.f32 %v3375, %v3203
      %v3427 = vmul.f32 %v3380, %v3208
      %v3428 = vmul.f32 %v3385, %v3213
      %v3429 = vmul.f32 %v3390, %v3218
      %v3430 = vmul.f32 %v3395, %v3223
      %v3431 = vmul.f32 %v3400, %v3228
      %v3432 = vmul.f32 %v3405, %v3233
      %v3433 = vmul.f32 %v3410, %v3238
      %v3434 = vmul.f32 %v3415, %v3243
      %v3435 = vmul.f32 %v3420, %v3248
      %3449 = vrot.lane.b32.xlu0 %v3423, 120
      %v3450 = vpop.permute.xlu0 %3449
      %3451 = vrot.lane.b32.xlu0 %v3424, 120
      %v3452 = vpop.permute.xlu0 %3451
      %3453 = vrot.lane.b32.xlu0 %v3425, 120
      %v3454 = vpop.permute.xlu0 %3453
      %3455 = vrot.lane.b32.xlu0 %v3426, 120
      %v3456 = vpop.permute.xlu0 %3455
      %3457 = vrot.lane.b32.xlu0 %v3427, 120
      %v3458 = vpop.permute.xlu0 %3457
      %3459 = vrot.lane.b32.xlu0 %v3428, 120
      %v3460 = vpop.permute.xlu0 %3459
      %3461 = vrot.lane.b32.xlu0 %v3429, 120
      %v3462 = vpop.permute.xlu0 %3461
      %3463 = vrot.lane.b32.xlu0 %v3430, 120
      %v3464 = vpop.permute.xlu0 %3463
      %3465 = vrot.lane.b32.xlu0 %v3431, 120
      %v3466 = vpop.permute.xlu0 %3465
      %3467 = vrot.lane.b32.xlu0 %v3432, 120
      %v3468 = vpop.permute.xlu0 %3467
      %3469 = vrot.lane.b32.xlu0 %v3433, 120
      %v3470 = vpop.permute.xlu0 %3469
      %3471 = vrot.lane.b32.xlu0 %v3434, 120
      %v3472 = vpop.permute.xlu0 %3471
      %3473 = vrot.lane.b32.xlu0 %v3435, 120
      %v3474 = vpop.permute.xlu0 %3473
      %v3488 = vadd.f32 %v3423, %v3450
      %v3489 = vadd.f32 %v3424, %v3452
      %v3490 = vadd.f32 %v3425, %v3454
      %v3491 = vadd.f32 %v3426, %v3456
      %v3492 = vadd.f32 %v3427, %v3458
      %v3493 = vadd.f32 %v3428, %v3460
      %v3494 = vadd.f32 %v3429, %v3462
      %v3495 = vadd.f32 %v3430, %v3464
      %v3496 = vadd.f32 %v3431, %v3466
      %v3497 = vadd.f32 %v3432, %v3468
      %v3498 = vadd.f32 %v3433, %v3470
      %v3499 = vadd.f32 %v3434, %v3472
      %v3500 = vadd.f32 %v3435, %v3474
      %3501 = vrot.lane.b32.xlu0 %v3423, 112
      %v3502 = vpop.permute.xlu0 %3501
      %3503 = vrot.lane.b32.xlu0 %v3424, 112
      %v3504 = vpop.permute.xlu0 %3503
      %3505 = vrot.lane.b32.xlu0 %v3425, 112
      %v3506 = vpop.permute.xlu0 %3505
      %3507 = vrot.lane.b32.xlu0 %v3426, 112
      %v3508 = vpop.permute.xlu0 %3507
      %3509 = vrot.lane.b32.xlu0 %v3427, 112
      %v3510 = vpop.permute.xlu0 %3509
      %3511 = vrot.lane.b32.xlu0 %v3428, 112
      %v3512 = vpop.permute.xlu0 %3511
      %3513 = vrot.lane.b32.xlu0 %v3429, 112
      %v3514 = vpop.permute.xlu0 %3513
      %3515 = vrot.lane.b32.xlu0 %v3430, 112
      %v3516 = vpop.permute.xlu0 %3515
      %3517 = vrot.lane.b32.xlu0 %v3431, 112
      %v3518 = vpop.permute.xlu0 %3517
      %3519 = vrot.lane.b32.xlu0 %v3432, 112
      %v3520 = vpop.permute.xlu0 %3519
      %3521 = vrot.lane.b32.xlu0 %v3433, 112
      %v3522 = vpop.permute.xlu0 %3521
      %3523 = vrot.lane.b32.xlu0 %v3434, 112
      %v3524 = vpop.permute.xlu0 %3523
      %3525 = vrot.lane.b32.xlu0 %v3435, 112
      %v3526 = vpop.permute.xlu0 %3525
      %v3540 = vadd.f32 %v3488, %v3502
      %v3541 = vadd.f32 %v3489, %v3504
      %v3542 = vadd.f32 %v3490, %v3506
      %v3543 = vadd.f32 %v3491, %v3508
      %v3544 = vadd.f32 %v3492, %v3510
      %v3545 = vadd.f32 %v3493, %v3512
      %v3546 = vadd.f32 %v3494, %v3514
      %v3547 = vadd.f32 %v3495, %v3516
      %v3548 = vadd.f32 %v3496, %v3518
      %v3549 = vadd.f32 %v3497, %v3520
      %v3550 = vadd.f32 %v3498, %v3522
      %v3551 = vadd.f32 %v3499, %v3524
      %v3552 = vadd.f32 %v3500, %v3526
      %3553 = vrot.lane.b32.xlu0 %v3423, 104
      %v3554 = vpop.permute.xlu0 %3553
      %3555 = vrot.lane.b32.xlu0 %v3424, 104
      %v3556 = vpop.permute.xlu0 %3555
      %3557 = vrot.lane.b32.xlu0 %v3425, 104
      %v3558 = vpop.permute.xlu0 %3557
      %3559 = vrot.lane.b32.xlu0 %v3426, 104
      %v3560 = vpop.permute.xlu0 %3559
      %3561 = vrot.lane.b32.xlu0 %v3427, 104
      %v3562 = vpop.permute.xlu0 %3561
      %3563 = vrot.lane.b32.xlu0 %v3428, 104
      %v3564 = vpop.permute.xlu0 %3563
      %3565 = vrot.lane.b32.xlu0 %v3429, 104
      %v3566 = vpop.permute.xlu0 %3565
      %3567 = vrot.lane.b32.xlu0 %v3430, 104
      %v3568 = vpop.permute.xlu0 %3567
      %3569 = vrot.lane.b32.xlu0 %v3431, 104
      %v3570 = vpop.permute.xlu0 %3569
      %3571 = vrot.lane.b32.xlu0 %v3432, 104
      %v3572 = vpop.permute.xlu0 %3571
      %3573 = vrot.lane.b32.xlu0 %v3433, 104
      %v3574 = vpop.permute.xlu0 %3573
      %3575 = vrot.lane.b32.xlu0 %v3434, 104
      %v3576 = vpop.permute.xlu0 %3575
      %3577 = vrot.lane.b32.xlu0 %v3435, 104
      %v3578 = vpop.permute.xlu0 %3577
      %v3592 = vadd.f32 %v3540, %v3554
      %v3593 = vadd.f32 %v3541, %v3556
      %v3594 = vadd.f32 %v3542, %v3558
      %v3595 = vadd.f32 %v3543, %v3560
      %v3596 = vadd.f32 %v3544, %v3562
      %v3597 = vadd.f32 %v3545, %v3564
      %v3598 = vadd.f32 %v3546, %v3566
      %v3599 = vadd.f32 %v3547, %v3568
      %v3600 = vadd.f32 %v3548, %v3570
      %v3601 = vadd.f32 %v3549, %v3572
      %v3602 = vadd.f32 %v3550, %v3574
      %v3603 = vadd.f32 %v3551, %v3576
      %v3604 = vadd.f32 %v3552, %v3578
      %3605 = vst.msk [vmem:[%s544] sm:$0xff] %vm619, %v3592
      %3606 = vst.msk [vmem:[%s544 + $0x8] sm:$0xff] %vm619, %v3593
      %3607 = vst.msk [vmem:[%s544 + $0x10] sm:$0xff] %vm619, %v3594
      %3608 = vst.msk [vmem:[%s544 + $0x18] sm:$0xff] %vm619, %v3595
      %3609 = vst.msk [vmem:[%s544 + $0x20] sm:$0xff] %vm619, %v3596
      %3610 = vst.msk [vmem:[%s544 + $0x28] sm:$0xff] %vm619, %v3597
      %3611 = vst.msk [vmem:[%s544 + $0x30] sm:$0xff] %vm619, %v3598
      %3612 = vst.msk [vmem:[%s544 + $0x38] sm:$0xff] %vm619, %v3599
      %3613 = vst.msk [vmem:[%s544 + $0x40] sm:$0xff] %vm619, %v3600
      %3614 = vst.msk [vmem:[%s544 + $0x48] sm:$0xff] %vm619, %v3601
      %3615 = vst.msk [vmem:[%s544 + $0x50] sm:$0xff] %vm619, %v3602
      %3616 = vst.msk [vmem:[%s544 + $0x58] sm:$0xff] %vm619, %v3603
      %3617 = vst.msk [vmem:[%s544 + $0x60] sm:$0xff] %vm619, %v3604
      %vm3618 = vcmp.eq.s32.totalorder %v790, 0
      %v3619 = vsel %vm3618, %v871, 0
      %v3620 = vsel %vm3618, %v886, 0
      %v3621 = vsel %vm3618, %v901, 0
      %v3622 = vsel %vm3618, %v916, 0
      %v3623 = vsel %vm3618, %v931, 0
      %v3624 = vsel %vm3618, %v946, 0
      %v3625 = vsel %vm3618, %v961, 0
      %v3626 = vsel %vm3618, %v976, 0
      %v3627 = vsel %vm3618, %v991, 0
      %v3628 = vsel %vm3618, %v1006, 0
      %v3629 = vsel %vm3618, %v1021, 0
      %v3630 = vsel %vm3618, %v1036, 0
      %v3631 = vsel %vm3618, %v1051, 0
      %vm3632 = vcmp.eq.s32.totalorder %v790, 1
      %v3633 = vsel %vm3632, %v1157, 0
      %v3634 = vsel %vm3632, %v1172, 0
      %v3635 = vsel %vm3632, %v1187, 0
      %v3636 = vsel %vm3632, %v1202, 0
      %v3637 = vsel %vm3632, %v1217, 0
      %v3638 = vsel %vm3632, %v1232, 0
      %v3639 = vsel %vm3632, %v1247, 0
      %v3640 = vsel %vm3632, %v1262, 0
      %v3641 = vsel %vm3632, %v1277, 0
      %v3642 = vsel %vm3632, %v1292, 0
      %v3643 = vsel %vm3632, %v1307, 0
      %v3644 = vsel %vm3632, %v1322, 0
      %v3645 = vsel %vm3632, %v1337, 0
      %v3646 = vadd.s32 %v3619, %v3633
      %v3647 = vadd.s32 %v3620, %v3634
      %v3648 = vadd.s32 %v3621, %v3635
      %v3649 = vadd.s32 %v3622, %v3636
      %v3650 = vadd.s32 %v3623, %v3637
      %v3651 = vadd.s32 %v3624, %v3638
      %v3652 = vadd.s32 %v3625, %v3639
      %v3653 = vadd.s32 %v3626, %v3640
      %v3654 = vadd.s32 %v3627, %v3641
      %v3655 = vadd.s32 %v3628, %v3642
      %v3656 = vadd.s32 %v3629, %v3643
      %v3657 = vadd.s32 %v3630, %v3644
      %v3658 = vadd.s32 %v3631, %v3645
      %vm3659 = vcmask 15360
      %3660 = vst.msk [vmem:[%s550] sm:$0xff] %vm3659, %v3646
      %3661 = vst.msk [vmem:[%s550 + $0x8] sm:$0xff] %vm3659, %v3647
      %3662 = vst.msk [vmem:[%s550 + $0x10] sm:$0xff] %vm3659, %v3648
      %3663 = vst.msk [vmem:[%s550 + $0x18] sm:$0xff] %vm3659, %v3649
      %3664 = vst.msk [vmem:[%s550 + $0x20] sm:$0xff] %vm3659, %v3650
      %3665 = vst.msk [vmem:[%s550 + $0x28] sm:$0xff] %vm3659, %v3651
      %3666 = vst.msk [vmem:[%s550 + $0x30] sm:$0xff] %vm3659, %v3652
      %3667 = vst.msk [vmem:[%s550 + $0x38] sm:$0xff] %vm3659, %v3653
      %3668 = vst.msk [vmem:[%s550 + $0x40] sm:$0xff] %vm3659, %v3654
      %3669 = vst.msk [vmem:[%s550 + $0x48] sm:$0xff] %vm3659, %v3655
      %3670 = vst.msk [vmem:[%s550 + $0x50] sm:$0xff] %vm3659, %v3656
      %3671 = vst.msk [vmem:[%s550 + $0x58] sm:$0xff] %vm3659, %v3657
      %3672 = vst.msk [vmem:[%s550 + $0x60] sm:$0xff] %vm3659, %v3658
      %v3673 = vsel %vm3618, %v2388, 0
      %v3674 = vsel %vm3618, %v2403, 0
      %v3675 = vsel %vm3618, %v2418, 0
      %v3676 = vsel %vm3618, %v2433, 0
      %v3677 = vsel %vm3618, %v2448, 0
      %v3678 = vsel %vm3618, %v2463, 0
      %v3679 = vsel %vm3618, %v2478, 0
      %v3680 = vsel %vm3618, %v2493, 0
      %v3681 = vsel %vm3618, %v2508, 0
      %v3682 = vsel %vm3618, %v2523, 0
      %v3683 = vsel %vm3618, %v2538, 0
      %v3684 = vsel %vm3618, %v2553, 0
      %v3685 = vsel %vm3618, %v2568, 0
      %v3686 = vsel %vm3632, %v2674, 0
      %v3687 = vsel %vm3632, %v2689, 0
      %v3688 = vsel %vm3632, %v2704, 0
      %v3689 = vsel %vm3632, %v2719, 0
      %v3690 = vsel %vm3632, %v2734, 0
      %v3691 = vsel %vm3632, %v2749, 0
      %v3692 = vsel %vm3632, %v2764, 0
      %v3693 = vsel %vm3632, %v2779, 0
      %v3694 = vsel %vm3632, %v2794, 0
      %v3695 = vsel %vm3632, %v2809, 0
      %v3696 = vsel %vm3632, %v2824, 0
      %v3697 = vsel %vm3632, %v2839, 0
      %v3698 = vsel %vm3632, %v2854, 0
      %v3699 = vadd.s32 %v3673, %v3686
      %v3700 = vadd.s32 %v3674, %v3687
      %v3701 = vadd.s32 %v3675, %v3688
      %v3702 = vadd.s32 %v3676, %v3689
      %v3703 = vadd.s32 %v3677, %v3690
      %v3704 = vadd.s32 %v3678, %v3691
      %v3705 = vadd.s32 %v3679, %v3692
      %v3706 = vadd.s32 %v3680, %v3693
      %v3707 = vadd.s32 %v3681, %v3694
      %v3708 = vadd.s32 %v3682, %v3695
      %v3709 = vadd.s32 %v3683, %v3696
      %v3710 = vadd.s32 %v3684, %v3697
      %v3711 = vadd.s32 %v3685, %v3698
      %3712 = vst.msk [vmem:[%s556] sm:$0xff] %vm3659, %v3699
      %3713 = vst.msk [vmem:[%s556 + $0x8] sm:$0xff] %vm3659, %v3700
      %3714 = vst.msk [vmem:[%s556 + $0x10] sm:$0xff] %vm3659, %v3701
      %3715 = vst.msk [vmem:[%s556 + $0x18] sm:$0xff] %vm3659, %v3702
      %3716 = vst.msk [vmem:[%s556 + $0x20] sm:$0xff] %vm3659, %v3703
      %3717 = vst.msk [vmem:[%s556 + $0x28] sm:$0xff] %vm3659, %v3704
      %3718 = vst.msk [vmem:[%s556 + $0x30] sm:$0xff] %vm3659, %v3705
      %3719 = vst.msk [vmem:[%s556 + $0x38] sm:$0xff] %vm3659, %v3706
      %3720 = vst.msk [vmem:[%s556 + $0x40] sm:$0xff] %vm3659, %v3707
      %3721 = vst.msk [vmem:[%s556 + $0x48] sm:$0xff] %vm3659, %v3708
      %3722 = vst.msk [vmem:[%s556 + $0x50] sm:$0xff] %vm3659, %v3709
      %3723 = vst.msk [vmem:[%s556 + $0x58] sm:$0xff] %vm3659, %v3710
      %3724 = vst.msk [vmem:[%s556 + $0x60] sm:$0xff] %vm3659, %v3711
      %s3725 = smul.u32 %s28, 104
      %v3726 = vlaneseq
      %v3727 = vshrl.u32 %v3726, 7
      %v3728 = vadd.s32 %v3727, 8
      %v3729 = vadd.s32 %v3727, 16
      %v3730 = vadd.s32 %v3727, 24
      %v3731 = vadd.s32 %v3727, 32
      %v3732 = vadd.s32 %v3727, 40
      %v3733 = vadd.s32 %v3727, 48
      %v3734 = vadd.s32 %v3727, 56
      %v3735 = vadd.s32 %v3727, 64
      %v3736 = vadd.s32 %v3727, 72
      %v3737 = vadd.s32 %v3727, 80
      %v3738 = vadd.s32 %v3727, 88
      %v3739 = vadd.s32 %v3727, 96
      %v3740 = vstv %s3725
      %v3741 = vadd.s32 %v3740, %v3727
      %v3742 = vadd.s32 %v3740, %v3728
      %v3743 = vadd.s32 %v3740, %v3729
      %v3744 = vadd.s32 %v3740, %v3730
      %v3745 = vadd.s32 %v3740, %v3731
      %v3746 = vadd.s32 %v3740, %v3732
      %v3747 = vadd.s32 %v3740, %v3733
      %v3748 = vadd.s32 %v3740, %v3734
      %v3749 = vadd.s32 %v3740, %v3735
      %v3750 = vadd.s32 %v3740, %v3736
      %v3751 = vadd.s32 %v3740, %v3737
      %v3752 = vadd.s32 %v3740, %v3738
      %v3753 = vadd.s32 %v3740, %v3739
      %vm3754 = vcmp.lt.s32.totalorder %v3741, 200
      %vm3755 = vcmp.lt.s32.totalorder %v3742, 200
      %vm3756 = vcmp.lt.s32.totalorder %v3743, 200
      %vm3757 = vcmp.lt.s32.totalorder %v3744, 200
      %vm3758 = vcmp.lt.s32.totalorder %v3745, 200
      %vm3759 = vcmp.lt.s32.totalorder %v3746, 200
      %vm3760 = vcmp.lt.s32.totalorder %v3747, 200
      %vm3761 = vcmp.lt.s32.totalorder %v3748, 200
      %vm3762 = vcmp.lt.s32.totalorder %v3749, 200
      %vm3763 = vcmp.lt.s32.totalorder %v3750, 200
      %vm3764 = vcmp.lt.s32.totalorder %v3751, 200
      %vm3765 = vcmp.lt.s32.totalorder %v3752, 200
      %vm3766 = vcmp.lt.s32.totalorder %v3753, 200
      %v3767 = vsel %vm3754, 1, 0
      %v3768 = vsel %vm3755, 1, 0
      %v3769 = vsel %vm3756, 1, 0
      %v3770 = vsel %vm3757, 1, 0
      %v3771 = vsel %vm3758, 1, 0
      %v3772 = vsel %vm3759, 1, 0
      %v3773 = vsel %vm3760, 1, 0
      %v3774 = vsel %vm3761, 1, 0
      %v3775 = vsel %vm3762, 1, 0
      %v3776 = vsel %vm3763, 1, 0
      %v3777 = vsel %vm3764, 1, 0
      %v3778 = vsel %vm3765, 1, 0
      %v3779 = vsel %vm3766, 1, 0
      %vm3780 = vcmp.eq.s32.totalorder %v3767, 1
      %vm3781 = vcmp.eq.s32.totalorder %v3768, 1
      %vm3782 = vcmp.eq.s32.totalorder %v3769, 1
      %vm3783 = vcmp.eq.s32.totalorder %v3770, 1
      %vm3784 = vcmp.eq.s32.totalorder %v3771, 1
      %vm3785 = vcmp.eq.s32.totalorder %v3772, 1
      %vm3786 = vcmp.eq.s32.totalorder %v3773, 1
      %vm3787 = vcmp.eq.s32.totalorder %v3774, 1
      %vm3788 = vcmp.eq.s32.totalorder %v3775, 1
      %vm3789 = vcmp.eq.s32.totalorder %v3776, 1
      %vm3790 = vcmp.eq.s32.totalorder %v3777, 1
      %vm3791 = vcmp.eq.s32.totalorder %v3778, 1
      %vm3792 = vcmp.eq.s32.totalorder %v3779, 1
      %v3793 = vsel %vm3780, %v1585, 0.0
      %v3794 = vsel %vm3781, %v1586, 0.0
      %v3795 = vsel %vm3782, %v1587, 0.0
      %v3796 = vsel %vm3783, %v1588, 0.0
      %v3797 = vsel %vm3784, %v1589, 0.0
      %v3798 = vsel %vm3785, %v1590, 0.0
      %v3799 = vsel %vm3786, %v1591, 0.0
      %v3800 = vsel %vm3787, %v1592, 0.0
      %v3801 = vsel %vm3788, %v1593, 0.0
      %v3802 = vsel %vm3789, %v1594, 0.0
      %v3803 = vsel %vm3790, %v1595, 0.0
      %v3804 = vsel %vm3791, %v1596, 0.0
      %v3805 = vsel %vm3792, %v1597, 0.0
      %v3806 = vsel %vm791, %v3793, 0.0
      %v3807 = vsel %vm791, %v3794, 0.0
      %v3808 = vadd.f32 %v3806, %v3807
      %v3809 = vsel %vm791, %v3795, 0.0
      %v3810 = vadd.f32 %v3808, %v3809
      %v3811 = vsel %vm791, %v3796, 0.0
      %v3812 = vadd.f32 %v3810, %v3811
      %v3813 = vsel %vm791, %v3797, 0.0
      %v3814 = vadd.f32 %v3812, %v3813
      %v3815 = vsel %vm791, %v3798, 0.0
      %v3816 = vadd.f32 %v3814, %v3815
      %v3817 = vsel %vm791, %v3799, 0.0
      %v3818 = vadd.f32 %v3816, %v3817
      %v3819 = vsel %vm791, %v3800, 0.0
      %v3820 = vadd.f32 %v3818, %v3819
      %v3821 = vsel %vm791, %v3801, 0.0
      %v3822 = vadd.f32 %v3820, %v3821
      %v3823 = vsel %vm791, %v3802, 0.0
      %v3824 = vadd.f32 %v3822, %v3823
      %v3825 = vsel %vm791, %v3803, 0.0
      %v3826 = vadd.f32 %v3824, %v3825
      %v3827 = vsel %vm791, %v3804, 0.0
      %v3828 = vadd.f32 %v3826, %v3827
      %v3829 = vsel %vm791, %v3805, 0.0
      %v3830 = vadd.f32 %v3828, %v3829
      %v3831 = vrot.slane %v3830, 4
      %v3832 = vadd.f32 %v3830, %v3831
      %v3833 = vrot.slane %v3832, 2
      %v3834 = vadd.f32 %v3832, %v3833
      %v3835 = vrot.slane %v3834, 1
      %v3836 = vadd.f32 %v3834, %v3835
      %vm3837 = vcmp.gt.f32.partialorder %v1585, 0.0
      %vm3838 = vcmp.gt.f32.partialorder %v1586, 0.0
      %vm3839 = vcmp.gt.f32.partialorder %v1587, 0.0
      %vm3840 = vcmp.gt.f32.partialorder %v1588, 0.0
      %vm3841 = vcmp.gt.f32.partialorder %v1589, 0.0
      %vm3842 = vcmp.gt.f32.partialorder %v1590, 0.0
      %vm3843 = vcmp.gt.f32.partialorder %v1591, 0.0
      %vm3844 = vcmp.gt.f32.partialorder %v1592, 0.0
      %vm3845 = vcmp.gt.f32.partialorder %v1593, 0.0
      %vm3846 = vcmp.gt.f32.partialorder %v1594, 0.0
      %vm3847 = vcmp.gt.f32.partialorder %v1595, 0.0
      %vm3848 = vcmp.gt.f32.partialorder %v1596, 0.0
      %vm3849 = vcmp.gt.f32.partialorder %v1597, 0.0
      %vm3850 = vmand %vm3780, %vm3837
      %vm3851 = vmand %vm3781, %vm3838
      %vm3852 = vmand %vm3782, %vm3839
      %vm3853 = vmand %vm3783, %vm3840
      %vm3854 = vmand %vm3784, %vm3841
      %vm3855 = vmand %vm3785, %vm3842
      %vm3856 = vmand %vm3786, %vm3843
      %vm3857 = vmand %vm3787, %vm3844
      %vm3858 = vmand %vm3788, %vm3845
      %vm3859 = vmand %vm3789, %vm3846
      %vm3860 = vmand %vm3790, %vm3847
      %vm3861 = vmand %vm3791, %vm3848
      %vm3862 = vmand %vm3792, %vm3849
      %v3863 = vsel %vm3850, 1.0, 0.0
      %v3864 = vsel %vm3851, 1.0, 0.0
      %v3865 = vsel %vm3852, 1.0, 0.0
      %v3866 = vsel %vm3853, 1.0, 0.0
      %v3867 = vsel %vm3854, 1.0, 0.0
      %v3868 = vsel %vm3855, 1.0, 0.0
      %v3869 = vsel %vm3856, 1.0, 0.0
      %v3870 = vsel %vm3857, 1.0, 0.0
      %v3871 = vsel %vm3858, 1.0, 0.0
      %v3872 = vsel %vm3859, 1.0, 0.0
      %v3873 = vsel %vm3860, 1.0, 0.0
      %v3874 = vsel %vm3861, 1.0, 0.0
      %v3875 = vsel %vm3862, 1.0, 0.0
      %v3876 = vsel %vm791, %v3863, 0.0
      %v3877 = vsel %vm791, %v3864, 0.0
      %v3878 = vadd.f32 %v3876, %v3877
      %v3879 = vsel %vm791, %v3865, 0.0
      %v3880 = vadd.f32 %v3878, %v3879
      %v3881 = vsel %vm791, %v3866, 0.0
      %v3882 = vadd.f32 %v3880, %v3881
      %v3883 = vsel %vm791, %v3867, 0.0
      %v3884 = vadd.f32 %v3882, %v3883
      %v3885 = vsel %vm791, %v3868, 0.0
      %v3886 = vadd.f32 %v3884, %v3885
      %v3887 = vsel %vm791, %v3869, 0.0
      %v3888 = vadd.f32 %v3886, %v3887
      %v3889 = vsel %vm791, %v3870, 0.0
      %v3890 = vadd.f32 %v3888, %v3889
      %v3891 = vsel %vm791, %v3871, 0.0
      %v3892 = vadd.f32 %v3890, %v3891
      %v3893 = vsel %vm791, %v3872, 0.0
      %v3894 = vadd.f32 %v3892, %v3893
      %v3895 = vsel %vm791, %v3873, 0.0
      %v3896 = vadd.f32 %v3894, %v3895
      %v3897 = vsel %vm791, %v3874, 0.0
      %v3898 = vadd.f32 %v3896, %v3897
      %v3899 = vsel %vm791, %v3875, 0.0
      %v3900 = vadd.f32 %v3898, %v3899
      %v3901 = vrot.slane %v3900, 4
      %v3902 = vadd.f32 %v3900, %v3901
      %v3903 = vrot.slane %v3902, 2
      %v3904 = vadd.f32 %v3902, %v3903
      %v3905 = vrot.slane %v3904, 1
      %v3906 = vadd.f32 %v3904, %v3905
      %v3907 = vsel %vm3780, %v3102, 0.0
      %v3908 = vsel %vm3781, %v3103, 0.0
      %v3909 = vsel %vm3782, %v3104, 0.0
      %v3910 = vsel %vm3783, %v3105, 0.0
      %v3911 = vsel %vm3784, %v3106, 0.0
      %v3912 = vsel %vm3785, %v3107, 0.0
      %v3913 = vsel %vm3786, %v3108, 0.0
      %v3914 = vsel %vm3787, %v3109, 0.0
      %v3915 = vsel %vm3788, %v3110, 0.0
      %v3916 = vsel %vm3789, %v3111, 0.0
      %v3917 = vsel %vm3790, %v3112, 0.0
      %v3918 = vsel %vm3791, %v3113, 0.0
      %v3919 = vsel %vm3792, %v3114, 0.0
      %v3920 = vsel %vm791, %v3907, 0.0
      %v3921 = vsel %vm791, %v3908, 0.0
      %v3922 = vadd.f32 %v3920, %v3921
      %v3923 = vsel %vm791, %v3909, 0.0
      %v3924 = vadd.f32 %v3922, %v3923
      %v3925 = vsel %vm791, %v3910, 0.0
      %v3926 = vadd.f32 %v3924, %v3925
      %v3927 = vsel %vm791, %v3911, 0.0
      %v3928 = vadd.f32 %v3926, %v3927
      %v3929 = vsel %vm791, %v3912, 0.0
      %v3930 = vadd.f32 %v3928, %v3929
      %v3931 = vsel %vm791, %v3913, 0.0
      %v3932 = vadd.f32 %v3930, %v3931
      %v3933 = vsel %vm791, %v3914, 0.0
      %v3934 = vadd.f32 %v3932, %v3933
      %v3935 = vsel %vm791, %v3915, 0.0
      %v3936 = vadd.f32 %v3934, %v3935
      %v3937 = vsel %vm791, %v3916, 0.0
      %v3938 = vadd.f32 %v3936, %v3937
      %v3939 = vsel %vm791, %v3917, 0.0
      %v3940 = vadd.f32 %v3938, %v3939
      %v3941 = vsel %vm791, %v3918, 0.0
      %v3942 = vadd.f32 %v3940, %v3941
      %v3943 = vsel %vm791, %v3919, 0.0
      %v3944 = vadd.f32 %v3942, %v3943
      %v3945 = vrot.slane %v3944, 4
      %v3946 = vadd.f32 %v3944, %v3945
      %v3947 = vrot.slane %v3946, 2
      %v3948 = vadd.f32 %v3946, %v3947
      %v3949 = vrot.slane %v3948, 1
      %v3950 = vadd.f32 %v3948, %v3949
      %vm3951 = vcmp.gt.f32.partialorder %v3102, 0.0
      %vm3952 = vcmp.gt.f32.partialorder %v3103, 0.0
      %vm3953 = vcmp.gt.f32.partialorder %v3104, 0.0
      %vm3954 = vcmp.gt.f32.partialorder %v3105, 0.0
      %vm3955 = vcmp.gt.f32.partialorder %v3106, 0.0
      %vm3956 = vcmp.gt.f32.partialorder %v3107, 0.0
      %vm3957 = vcmp.gt.f32.partialorder %v3108, 0.0
      %vm3958 = vcmp.gt.f32.partialorder %v3109, 0.0
      %vm3959 = vcmp.gt.f32.partialorder %v3110, 0.0
      %vm3960 = vcmp.gt.f32.partialorder %v3111, 0.0
      %vm3961 = vcmp.gt.f32.partialorder %v3112, 0.0
      %vm3962 = vcmp.gt.f32.partialorder %v3113, 0.0
      %vm3963 = vcmp.gt.f32.partialorder %v3114, 0.0
      %vm3964 = vmand %vm3780, %vm3951
      %vm3965 = vmand %vm3781, %vm3952
      %vm3966 = vmand %vm3782, %vm3953
      %vm3967 = vmand %vm3783, %vm3954
      %vm3968 = vmand %vm3784, %vm3955
      %vm3969 = vmand %vm3785, %vm3956
      %vm3970 = vmand %vm3786, %vm3957
      %vm3971 = vmand %vm3787, %vm3958
      %vm3972 = vmand %vm3788, %vm3959
      %vm3973 = vmand %vm3789, %vm3960
      %vm3974 = vmand %vm3790, %vm3961
      %vm3975 = vmand %vm3791, %vm3962
      %vm3976 = vmand %vm3792, %vm3963
      %v3977 = vsel %vm3964, 1.0, 0.0
      %v3978 = vsel %vm3965, 1.0, 0.0
      %v3979 = vsel %vm3966, 1.0, 0.0
      %v3980 = vsel %vm3967, 1.0, 0.0
      %v3981 = vsel %vm3968, 1.0, 0.0
      %v3982 = vsel %vm3969, 1.0, 0.0
      %v3983 = vsel %vm3970, 1.0, 0.0
      %v3984 = vsel %vm3971, 1.0, 0.0
      %v3985 = vsel %vm3972, 1.0, 0.0
      %v3986 = vsel %vm3973, 1.0, 0.0
      %v3987 = vsel %vm3974, 1.0, 0.0
      %v3988 = vsel %vm3975, 1.0, 0.0
      %v3989 = vsel %vm3976, 1.0, 0.0
      %v3990 = vsel %vm791, %v3977, 0.0
      %v3991 = vsel %vm791, %v3978, 0.0
      %v3992 = vadd.f32 %v3990, %v3991
      %v3993 = vsel %vm791, %v3979, 0.0
      %v3994 = vadd.f32 %v3992, %v3993
      %v3995 = vsel %vm791, %v3980, 0.0
      %v3996 = vadd.f32 %v3994, %v3995
      %v3997 = vsel %vm791, %v3981, 0.0
      %v3998 = vadd.f32 %v3996, %v3997
      %v3999 = vsel %vm791, %v3982, 0.0
      %v4000 = vadd.f32 %v3998, %v3999
      %v4001 = vsel %vm791, %v3983, 0.0
      %v4002 = vadd.f32 %v4000, %v4001
      %v4003 = vsel %vm791, %v3984, 0.0
      %v4004 = vadd.f32 %v4002, %v4003
      %v4005 = vsel %vm791, %v3985, 0.0
      %v4006 = vadd.f32 %v4004, %v4005
      %v4007 = vsel %vm791, %v3986, 0.0
      %v4008 = vadd.f32 %v4006, %v4007
      %v4009 = vsel %vm791, %v3987, 0.0
      %v4010 = vadd.f32 %v4008, %v4009
      %v4011 = vsel %vm791, %v3988, 0.0
      %v4012 = vadd.f32 %v4010, %v4011
      %v4013 = vsel %vm791, %v3989, 0.0
      %v4014 = vadd.f32 %v4012, %v4013
      %v4015 = vrot.slane %v4014, 4
      %v4016 = vadd.f32 %v4014, %v4015
      %v4017 = vrot.slane %v4016, 2
      %v4018 = vadd.f32 %v4016, %v4017
      %v4019 = vrot.slane %v4018, 1
      %v4020 = vadd.f32 %v4018, %v4019
      %vm4021 = vcmp.eq.s32.totalorder %v3727, 0
      %v4022 = vsel %vm4021, %v3836, 0.0
      %vm4023 = vcmp.eq.s32.totalorder %v3727, 1
      %v4024 = vsel %vm4023, %v3906, 0.0
      %v4025 = vadd.f32 %v4022, %v4024
      %vm4026 = vcmp.eq.s32.totalorder %v3727, 2
      %v4027 = vsel %vm4026, %v3950, 0.0
      %v4028 = vadd.f32 %v4025, %v4027
      %vm4029 = vcmp.eq.s32.totalorder %v3727, 3
      %v4030 = vsel %vm4029, %v4020, 0.0
      %v4031 = vadd.f32 %v4028, %v4030
      %vm4032 = vcmask 27648
      %4033 = vst.msk [vmem:[%s561] sm:$0xf] %vm4032, %v4031
      %s4034 = smul.u32 13, %s28
      %p4035 = scmp.lt.s32.totalorder %s4034, 25
      %s4036 = scalar_select %p4035, %s4034, 25
      %s4037 = smul.addr %s4036, 8
      %s4038 = scalar_lea.vmem %s13, %s4037
      %s4039 = smul.u32 13, %s28
      %p4040 = scmp.lt.s32.totalorder %s4039, 25
      %s4041 = scalar_select %p4040, %s4039, 25
      %s4042 = smul.addr %s4041, 8
      %s4043 = scalar_lea.vmem %s14, %s4042
      %s4044 = smul.u32 13, %s28
      %p4045 = scmp.lt.s32.totalorder %s4044, 25
      %s4046 = scalar_select %p4045, %s4044, 25
      %s4047 = smul.addr %s4046, 8
      %s4048 = scalar_lea.vmem %s15, %s4047
      %p4049 = scmp.lt.s32.totalorder %s28, 1
      %s4050 = scalar_select %p4049, %s28, 1
      %s4051 = smul.addr %s4050, 4
      %s4052 = scalar_lea.vmem %s16, %s4051
      // Predicated region
      $region73: #{hgmoe_forward.1} parent=71 // pred_check
        %p4053 = pneg %p324
      $region74: #{hgmoe_forward.1} parent=71 // pred_check_branch
        %4055 = sbr.rel (%p4053) target = $region76
      $region75: #{hgmoe_forward.1} parent=71 // pred_region
        %s4056 = smul.u32 13, %s28
      $region76: #{hgmoe_forward.1} parent=71 // pred_fallthru
        _
      // Predicated region
      $region77: #{hgmoe_forward.1} parent=71 // pred_check
        %p4057 = pneg %p350
      $region78: #{hgmoe_forward.1} parent=71 // pred_check_branch
        %4059 = sbr.rel (%p4057) target = $region80
      $region79: #{hgmoe_forward.1} parent=71 // pred_region
        %s4060 = smul.u32 13, %s28
      $region80: #{hgmoe_forward.1} parent=71 // pred_fallthru
        _
      // Predicated region
      $region81: #{hgmoe_forward.1} parent=71 // pred_check
        %p4061 = pneg %p376
      $region82: #{hgmoe_forward.1} parent=71 // pred_check_branch
        %4063 = sbr.rel (%p4061) target = $region84
      $region83: #{hgmoe_forward.1} parent=71 // pred_region
        %s4064 = smul.u32 13, %s28
      $region84: #{hgmoe_forward.1} parent=71 // pred_fallthru
        _
      // Predicated region
      $region85: #{hgmoe_forward.1} parent=71 // pred_check
        %p4065 = pneg %p402
      $region86: #{hgmoe_forward.1} parent=71 // pred_check_branch
        %4067 = sbr.rel (%p4065) target = $region88
      $region87: #{hgmoe_forward.1} parent=71 // pred_region
        _
      $region88: #{hgmoe_forward.1} parent=71 // pred_fallthru
        _
    $region72: #{hgmoe_forward.1} parent=5 // pred_fallthru
      _
    %p4068 = scmp.le.s32.totalorder 2, %s23
    // Predicated region
    $region89: #{hgmoe_forward.1} parent=5 // pred_check
      %p4069 = pneg %p4068
    $region90: #{hgmoe_forward.1} parent=5 // pred_check_branch
      %4071 = sbr.rel (%p4069) target = $region92
    $region91: #{hgmoe_forward.1} parent=5 // pred_region
      %s4072 = ssub.s32 %s23, 2
      // Predicated region
      $region93: #{hgmoe_forward.1} parent=91 // pred_check
        %p4073 = pneg %p330
      $region94: #{hgmoe_forward.1} parent=91 // pred_check_branch
        %4075 = sbr.rel (%p4073) target = $region96
      $region95: #{hgmoe_forward.1} parent=91 // pred_region
        %s4076 = smul.u32 13, %s29
        %p4077 = scmp.lt.s32.totalorder %s4076, 25
        %s4078 = scalar_select %p4077, %s4076, 25
        %s4079 = smul.addr %s4078, 8
        %s4080 = scalar_lea.vmem %s13, %s4079
      $region96: #{hgmoe_forward.1} parent=91 // pred_fallthru
        _
      // Predicated region
      $region97: #{hgmoe_forward.1} parent=91 // pred_check
        %p4081 = pneg %p356
      $region98: #{hgmoe_forward.1} parent=91 // pred_check_branch
        %4083 = sbr.rel (%p4081) target = $region100
      $region99: #{hgmoe_forward.1} parent=91 // pred_region
        %s4084 = smul.u32 13, %s29
        %p4085 = scmp.lt.s32.totalorder %s4084, 25
        %s4086 = scalar_select %p4085, %s4084, 25
        %s4087 = smul.addr %s4086, 8
        %s4088 = scalar_lea.vmem %s14, %s4087
      $region100: #{hgmoe_forward.1} parent=91 // pred_fallthru
        _
      // Predicated region
      $region101: #{hgmoe_forward.1} parent=91 // pred_check
        %p4089 = pneg %p382
      $region102: #{hgmoe_forward.1} parent=91 // pred_check_branch
        %4091 = sbr.rel (%p4089) target = $region104
      $region103: #{hgmoe_forward.1} parent=91 // pred_region
        %s4092 = smul.u32 13, %s29
        %p4093 = scmp.lt.s32.totalorder %s4092, 25
        %s4094 = scalar_select %p4093, %s4092, 25
        %s4095 = smul.addr %s4094, 8
        %s4096 = scalar_lea.vmem %s15, %s4095
      $region104: #{hgmoe_forward.1} parent=91 // pred_fallthru
        _
      // Predicated region
      $region105: #{hgmoe_forward.1} parent=91 // pred_check
        %p4097 = pneg %p408
      $region106: #{hgmoe_forward.1} parent=91 // pred_check_branch
        %4099 = sbr.rel (%p4097) target = $region108
      $region107: #{hgmoe_forward.1} parent=91 // pred_region
        %p4100 = scmp.lt.s32.totalorder %s29, 1
        %s4101 = scalar_select %p4100, %s29, 1
        %s4102 = smul.addr %s4101, 4
        %s4103 = scalar_lea.vmem %s16, %s4102
      $region108: #{hgmoe_forward.1} parent=91 // pred_fallthru
        _
    $region92: #{hgmoe_forward.1} parent=5 // pred_fallthru
      _
  $region6: #{hgmoe_forward.1} parent=0 // loop_footer
    %s27 = sadd.s32 1, %s23
  $region7: #{hgmoe_forward.1} parent=0 // loop_footer_branch
    %22 = sbr.rel target = $region3
  $region8: #{hgmoe_forward.1} parent=0 // loop_exit
    _

</llo_original>
